<compile_context>
chip_gen: v6e
topology: v6e:2x2x1
jax: 0.10.0
libtpu: 0.0.40
codegen_flags: <defaults>
</compile_context>

<pallas_src>
import functools

import jax
import jax.numpy as jnp
import numpy as np
from jax.experimental import pallas as pl
from jax.experimental.pallas import tpu as pltpu

PAD = 2       # the module hardcodes padding=2
EPS = 1e-5    # BatchNorm2d default


# ----------------------------------------------------------------------------
# Fused kernel: 3 x (conv -> BN(train) -> ReLU) -> global avg pool -> linear
# ----------------------------------------------------------------------------
def fused_child_net_kernel(
        x_ref,
        band1_ref, sel1_ref, selT1_ref, g1_ref, be1_ref,
        band2_ref, sel2_ref, selT2_ref, g2_ref, be2_ref,
        band3_ref, sel3_ref, selT3_ref, g3_ref, be3_ref,
        poolT_ref, fcw_ref, fcb_ref,
        o_ref,
        xp1_ref, xp2_ref, xp3_ref,
        *, N, dims, eps):
    """Whole ChildNetwork forward on a single VMEM-resident block.

    Activations stay in the lane-dense layout (N*H, W*C) between layers.
    """

    def conv_bn_relu(act2d, xp_ref, band_ref, sel_ref, selT_ref,
                     gamma_ref, beta_ref, d):
        Hin, Win, Cin, Hout, Wout, Cout, K = d
        Hp, Wp = Hin + 2 * PAD, Win + 2 * PAD
        M = N * Hout
        inv_cnt = 1.0 / float(N * Hout * Wout)

        # -- zero padding done in-kernel into a VMEM scratch (no jnp.pad) -----
        xp_ref[...] = jnp.zeros((N, Hp, Wp * Cin), jnp.float32)
        xp_ref[:, PAD:PAD + Hin, PAD * Cin:(PAD + Win) * Cin] = (
            act2d.reshape(N, Hin, Win * Cin))

        # -- convolution: K banded GEMMs --------------------------------------
        # contraction = (wp, cin) -> 60/160 deep; output lanes = (wo, cout)
        # -> 128/256 wide (lane-dense).  Conv bias is dropped: it cancels
        # exactly under training-mode BN mean subtraction.
        acc = jnp.zeros((M, Wout * Cout), jnp.float32)
        for kh in range(K):
            lhs = xp_ref[:, kh:kh + Hout, :].reshape(M, Wp * Cin)
            acc = acc + jnp.dot(lhs, band_ref[kh],
                                preferred_element_type=jnp.float32)

        # -- BatchNorm2d, training mode (biased variance), single pass --------
        # Per-channel stats via tiny selector matmuls:
        #   sel  : (Wo*Cout, Cout)   lane -> channel reduce
        #   selT : (Cout, Wo*Cout)   channel -> lane broadcast
        # var = E[x^2] - mean^2 avoids a second full (M, lanes) centering pass.
        col_sum = jnp.sum(acc, axis=0, keepdims=True)             # (1, Wo*Cout)
        col_sq = jnp.sum(acc * acc, axis=0, keepdims=True)        # (1, Wo*Cout)
        mean_c = jnp.dot(col_sum, sel_ref[...],
                         preferred_element_type=jnp.float32) * inv_cnt
        ex2_c = jnp.dot(col_sq, sel_ref[...],
                        preferred_element_type=jnp.float32) * inv_cnt
        var_c = ex2_c - mean_c * mean_c                           # (1, Cout)
        scale_c = gamma_ref[...] * jax.lax.rsqrt(var_c + eps)     # (1, Cout)
        shift_c = beta_ref[...] - mean_c * scale_c
        scale_l = jnp.dot(scale_c, selT_ref[...],
                          preferred_element_type=jnp.float32)     # (1, Wo*Cout)
        shift_l = jnp.dot(shift_c, selT_ref[...],
                          preferred_element_type=jnp.float32)

        # -- affine BN + ReLU, fused elementwise -------------------------------
        return jnp.maximum(acc * scale_l + shift_l, 0.0)          # (M, Wo*Cout)

    a = x_ref[...]                                                # (N*H, W*Cin0)
    a = conv_bn_relu(a, xp1_ref, band1_ref, sel1_ref, selT1_ref,
                     g1_ref, be1_ref, dims[0])
    a = conv_bn_relu(a, xp2_ref, band2_ref, sel2_ref, selT2_ref,
                     g2_ref, be2_ref, dims[1])
    a = conv_bn_relu(a, xp3_ref, band3_ref, sel3_ref, selT3_ref,
                     g3_ref, be3_ref, dims[2])

    # -- AdaptiveAvgPool2d(1) + flatten + Linear(f3, 10) -----------------------
    # ch_rows[m, c] = sum_wo a[m, wo*C3 + c]; poolT carries the 1/(Ho*Wo) factor.
    ch_rows = jnp.dot(a, sel3_ref[...],
                      preferred_element_type=jnp.float32)         # (N*Ho3, C3)
    pooled = jnp.dot(poolT_ref[...], ch_rows,
                     preferred_element_type=jnp.float32)          # (N, C3)
    o_ref[...] = jnp.dot(pooled, fcw_ref[...],
                         preferred_element_type=jnp.float32) + fcb_ref[...]


# ----------------------------------------------------------------------------
# Wrapper: weight pre-expansion + single pallas_call
# ----------------------------------------------------------------------------
def _banded_weight(w, Win):
    """Expand (K, K, Cin, Cout) conv weights into K banded (Wp*Cin, Wo*Cout)
    matrices so the (kw, cin) taps fold into the matmul contraction dim."""
    K, _, Cin, Cout = w.shape
    Wp = Win + 2 * PAD
    Wout = Wp - K + 1
    place = np.zeros((K, Wout, Wp), np.float32)
    for kw in range(K):
        for wo in range(Wout):
            place[kw, wo, wo + kw] = 1.0
    band = jnp.einsum('xwp,hxio->hpiwo', jnp.asarray(place), w)
    return band.reshape(K, Wp * Cin, Wout * Cout)


def _channel_selectors(Wout, Cout):
    sel = np.tile(np.eye(Cout, dtype=np.float32), (Wout, 1))      # (Wo*Co, Co)
    return jnp.asarray(sel), jnp.asarray(np.ascontiguousarray(sel.T))


def child_network_forward(x_nchw, params):
    N, Cin0, H, W = x_nchw.shape
    x2d = jnp.transpose(x_nchw, (0, 2, 3, 1)).reshape(N * H, W * Cin0)

    layer_args, dims, scratch = [], [], []
    Hin, Win, Ci = H, W, Cin0
    for (w, _b, g, be) in params["convs"]:     # conv bias unused: cancels in BN
        K, Co = w.shape[0], w.shape[-1]
        Hp, Wp = Hin + 2 * PAD, Win + 2 * PAD
        Hout, Wout = Hp - K + 1, Wp - K + 1
        band = _banded_weight(w, Win)
        sel, selT = _channel_selectors(Wout, Co)
        layer_args += [band, sel, selT, g.reshape(1, -1), be.reshape(1, -1)]
        dims.append((Hin, Win, Ci, Hout, Wout, Co, K))
        scratch.append(pltpu.VMEM((N, Hp, Wp * Ci), jnp.float32))
        Hin, Win, Ci = Hout, Wout, Co

    Ho3, Wo3 = dims[-1][3], dims[-1][4]
    poolT = np.zeros((N, N * Ho3), np.float32)
    for n in range(N):
        poolT[n, n * Ho3:(n + 1) * Ho3] = 1.0 / (Ho3 * Wo3)

    n_inputs = 1 + len(layer_args) + 3
    kernel = functools.partial(fused_child_net_kernel,
                               N=N, dims=tuple(dims), eps=EPS)
    return pl.pallas_call(
        kernel,
        out_shape=jax.ShapeDtypeStruct((N, 10), jnp.float32),
        in_specs=[pl.BlockSpec(memory_space=pltpu.MemorySpace.VMEM)] * n_inputs,
        out_specs=pl.BlockSpec(memory_space=pltpu.MemorySpace.VMEM),
        scratch_shapes=scratch,
    )(x2d, *layer_args, jnp.asarray(poolT),
      params["fc_w"], params["fc_b"].reshape(1, -1))


# ----------------------------------------------------------------------------
# Parameters + pure-JAX reference for correctness checking
# ----------------------------------------------------------------------------
def make_params(key, actions):
    k1, f1, k2, f2, k3, f3, _k4, _f4 = actions    # 4th conv unused, as in module
    cins, couts, ks = (3, f1, f2), (f1, f2, f3), (k1, k2, k3)
    convs = []
    for i in range(3):
        key, wk, bk, gk, ek = jax.random.split(key, 5)
        fan_in = cins[i] * ks[i] * ks[i]
        w = jax.random.normal(wk, (ks[i], ks[i], cins[i], couts[i]),
                              jnp.float32) / np.sqrt(fan_in)
        b = jax.random.normal(bk, (couts[i],), jnp.float32) * 0.1
        gamma = 1.0 + 0.1 * jax.random.normal(gk, (couts[i],), jnp.float32)
        beta = 0.1 * jax.random.normal(ek, (couts[i],), jnp.float32)
        convs.append((w, b, gamma, beta))
    key, wk, bk = jax.random.split(key, 3)
    fc_w = jax.random.normal(wk, (f3, 10), jnp.float32) / np.sqrt(f3)
    fc_b = jax.random.normal(bk, (10,), jnp.float32) * 0.1
    return {"convs": convs, "fc_w": fc_w, "fc_b": fc_b}


def reference_forward(x_nchw, params, eps=EPS):
    x = jnp.transpose(x_nchw, (0, 2, 3, 1))
    for (w, b, g, be) in params["convs"]:
        y = jax.lax.conv_general_dilated(
            x, w, window_strides=(1, 1), padding=[(PAD, PAD), (PAD, PAD)],
            dimension_numbers=("NHWC", "HWIO", "NHWC")) + b
        mean = jnp.mean(y, axis=(0, 1, 2), keepdims=True)
        var = jnp.mean(jnp.square(y - mean), axis=(0, 1, 2), keepdims=True)
        x = jnp.maximum((y - mean) * jax.lax.rsqrt(var + eps) * g + be, 0.0)
    pooled = jnp.mean(x, axis=(1, 2))
    return pooled @ params["fc_w"] + params["fc_b"]


if __name__ == "__main__":
    # actions = (kernel_1, filters_1, kernel_2, filters_2,
    #            kernel_3, filters_3, kernel_4, filters_4)
    actions = (5, 8, 5, 8, 5, 16, 5, 16)

    key = jax.random.PRNGKey(0)
    key, xk = jax.random.split(key)
    x = jax.random.normal(xk, (2, 3, 16, 16), jnp.float32)   # NCHW like PyTorch
    params = make_params(key, actions)

    fwd = jax.jit(child_network_forward)
    out = jax.block_until_ready(fwd(x, params))
    ref = jax.block_until_ready(reference_forward(x, params))

    assert out.shape == (2, 10), out.shape
    np.testing.assert_allclose(np.asarray(out), np.asarray(ref),
                               rtol=1e-3, atol=1e-3)
    print("KERNEL_OK")
</pallas_src>

<mosaic_0001>
module attributes {stable_mosaic.version = 11 : i64} {
  func.func @fused_child_net_kernel(%arg0: memref<32x48xf32, #tpu.memory_space<vmem>>, %arg1: memref<5x60x128xf32, #tpu.memory_space<vmem>>, %arg2: memref<128x8xf32, #tpu.memory_space<vmem>>, %arg3: memref<8x128xf32, #tpu.memory_space<vmem>>, %arg4: memref<1x8xf32, #tpu.memory_space<vmem>>, %arg5: memref<1x8xf32, #tpu.memory_space<vmem>>, %arg6: memref<5x160x128xf32, #tpu.memory_space<vmem>>, %arg7: memref<128x8xf32, #tpu.memory_space<vmem>>, %arg8: memref<8x128xf32, #tpu.memory_space<vmem>>, %arg9: memref<1x8xf32, #tpu.memory_space<vmem>>, %arg10: memref<1x8xf32, #tpu.memory_space<vmem>>, %arg11: memref<5x160x256xf32, #tpu.memory_space<vmem>>, %arg12: memref<256x16xf32, #tpu.memory_space<vmem>>, %arg13: memref<16x256xf32, #tpu.memory_space<vmem>>, %arg14: memref<1x16xf32, #tpu.memory_space<vmem>>, %arg15: memref<1x16xf32, #tpu.memory_space<vmem>>, %arg16: memref<2x32xf32, #tpu.memory_space<vmem>>, %arg17: memref<16x10xf32, #tpu.memory_space<vmem>>, %arg18: memref<1x10xf32, #tpu.memory_space<vmem>>, %arg19: memref<2x10xf32, #tpu.memory_space<vmem>>, %arg20: memref<2x20x60xf32, #tpu.memory_space<vmem>>, %arg21: memref<2x20x160xf32, #tpu.memory_space<vmem>>, %arg22: memref<2x20x160xf32, #tpu.memory_space<vmem>>) attributes {dimension_semantics = [], scalar_prefetch = 0 : i64, scratch_operands = 3 : i64, tpu.core_type = #tpu.core_type<tc>} {
    %c0 = arith.constant 0 : index
    %c0_0 = arith.constant 0 : index
    %0 = vector.load %arg0[%c0, %c0_0] : memref<32x48xf32, #tpu.memory_space<vmem>>, vector<32x48xf32>
    %cst = arith.constant 0.000000e+00 : f32
    %1 = vector.broadcast %cst : f32 to vector<2x20x60xf32>
    %c0_1 = arith.constant 0 : index
    %c0_2 = arith.constant 0 : index
    %c0_3 = arith.constant 0 : index
    %2 = vector.load %arg20[%c0_1, %c0_2, %c0_3] : memref<2x20x60xf32, #tpu.memory_space<vmem>>, vector<2x20x60xf32>
    tpu.vector_store %arg20[%c0_1, %c0_2, %c0_3], %1 {strides = array<i32>} : memref<2x20x60xf32, #tpu.memory_space<vmem>>, vector<2x20x60xf32>,
    %3 = vector.shape_cast %0 : vector<32x48xf32> to vector<2x16x48xf32>
    %c0_4 = arith.constant 0 : index
    %c2 = arith.constant 2 : index
    %c6 = arith.constant 6 : index
    %4 = vector.load %arg20[%c0_4, %c2, %c6] : memref<2x20x60xf32, #tpu.memory_space<vmem>>, vector<2x16x48xf32>
    tpu.vector_store %arg20[%c0_4, %c2, %c6], %3 {strides = array<i32>} : memref<2x20x60xf32, #tpu.memory_space<vmem>>, vector<2x16x48xf32>,
    %cst_5 = arith.constant 0.000000e+00 : f32
    %5 = vector.broadcast %cst_5 : f32 to vector<32x128xf32>
    %c0_6 = arith.constant 0 : index
    %c0_7 = arith.constant 0 : index
    %c0_8 = arith.constant 0 : index
    %6 = vector.load %arg20[%c0_6, %c0_7, %c0_8] : memref<2x20x60xf32, #tpu.memory_space<vmem>>, vector<2x16x60xf32>
    %7 = vector.shape_cast %6 : vector<2x16x60xf32> to vector<32x60xf32>
    %c0_9 = arith.constant 0 : index
    %c0_10 = arith.constant 0 : index
    %c0_11 = arith.constant 0 : index
    %8 = vector.load %arg1[%c0_9, %c0_10, %c0_11] : memref<5x60x128xf32, #tpu.memory_space<vmem>>, vector<1x60x128xf32>
    %9 = vector.shape_cast %8 : vector<1x60x128xf32> to vector<60x128xf32>
    %cst_12 = arith.constant dense<0.000000e+00> : vector<32x128xf32>
    %10 = tpu.matmul %7, %9, %cst_12 {dimension_numbers = #tpu.dot_dimension_numbers<[1], [0], [0], [1], [0, 0, 1, 1], [], []>} : vector<32x60xf32>, vector<60x128xf32>, vector<32x128xf32> -> vector<32x128xf32>
    %11 = arith.addf %5, %10 : vector<32x128xf32>
    %c0_13 = arith.constant 0 : index
    %c1 = arith.constant 1 : index
    %c0_14 = arith.constant 0 : index
    %12 = vector.load %arg20[%c0_13, %c1, %c0_14] : memref<2x20x60xf32, #tpu.memory_space<vmem>>, vector<2x16x60xf32>
    %13 = vector.shape_cast %12 : vector<2x16x60xf32> to vector<32x60xf32>
    %c1_15 = arith.constant 1 : index
    %c0_16 = arith.constant 0 : index
    %c0_17 = arith.constant 0 : index
    %14 = vector.load %arg1[%c1_15, %c0_16, %c0_17] : memref<5x60x128xf32, #tpu.memory_space<vmem>>, vector<1x60x128xf32>
    %15 = vector.shape_cast %14 : vector<1x60x128xf32> to vector<60x128xf32>
    %cst_18 = arith.constant dense<0.000000e+00> : vector<32x128xf32>
    %16 = tpu.matmul %13, %15, %cst_18 {dimension_numbers = #tpu.dot_dimension_numbers<[1], [0], [0], [1], [0, 0, 1, 1], [], []>} : vector<32x60xf32>, vector<60x128xf32>, vector<32x128xf32> -> vector<32x128xf32>
    %17 = arith.addf %11, %16 : vector<32x128xf32>
    %c0_19 = arith.constant 0 : index
    %c2_20 = arith.constant 2 : index
    %c0_21 = arith.constant 0 : index
    %18 = vector.load %arg20[%c0_19, %c2_20, %c0_21] : memref<2x20x60xf32, #tpu.memory_space<vmem>>, vector<2x16x60xf32>
    %19 = vector.shape_cast %18 : vector<2x16x60xf32> to vector<32x60xf32>
    %c2_22 = arith.constant 2 : index
    %c0_23 = arith.constant 0 : index
    %c0_24 = arith.constant 0 : index
    %20 = vector.load %arg1[%c2_22, %c0_23, %c0_24] : memref<5x60x128xf32, #tpu.memory_space<vmem>>, vector<1x60x128xf32>
    %21 = vector.shape_cast %20 : vector<1x60x128xf32> to vector<60x128xf32>
    %cst_25 = arith.constant dense<0.000000e+00> : vector<32x128xf32>
    %22 = tpu.matmul %19, %21, %cst_25 {dimension_numbers = #tpu.dot_dimension_numbers<[1], [0], [0], [1], [0, 0, 1, 1], [], []>} : vector<32x60xf32>, vector<60x128xf32>, vector<32x128xf32> -> vector<32x128xf32>
    %23 = arith.addf %17, %22 : vector<32x128xf32>
    %c0_26 = arith.constant 0 : index
    %c3 = arith.constant 3 : index
    %c0_27 = arith.constant 0 : index
    %24 = vector.load %arg20[%c0_26, %c3, %c0_27] : memref<2x20x60xf32, #tpu.memory_space<vmem>>, vector<2x16x60xf32>
    %25 = vector.shape_cast %24 : vector<2x16x60xf32> to vector<32x60xf32>
    %c3_28 = arith.constant 3 : index
    %c0_29 = arith.constant 0 : index
    %c0_30 = arith.constant 0 : index
    %26 = vector.load %arg1[%c3_28, %c0_29, %c0_30] : memref<5x60x128xf32, #tpu.memory_space<vmem>>, vector<1x60x128xf32>
    %27 = vector.shape_cast %26 : vector<1x60x128xf32> to vector<60x128xf32>
    %cst_31 = arith.constant dense<0.000000e+00> : vector<32x128xf32>
    %28 = tpu.matmul %25, %27, %cst_31 {dimension_numbers = #tpu.dot_dimension_numbers<[1], [0], [0], [1], [0, 0, 1, 1], [], []>} : vector<32x60xf32>, vector<60x128xf32>, vector<32x128xf32> -> vector<32x128xf32>
    %29 = arith.addf %23, %28 : vector<32x128xf32>
    %c0_32 = arith.constant 0 : index
    %c4 = arith.constant 4 : index
    %c0_33 = arith.constant 0 : index
    %30 = vector.load %arg20[%c0_32, %c4, %c0_33] : memref<2x20x60xf32, #tpu.memory_space<vmem>>, vector<2x16x60xf32>
    %31 = vector.shape_cast %30 : vector<2x16x60xf32> to vector<32x60xf32>
    %c4_34 = arith.constant 4 : index
    %c0_35 = arith.constant 0 : index
    %c0_36 = arith.constant 0 : index
    %32 = vector.load %arg1[%c4_34, %c0_35, %c0_36] : memref<5x60x128xf32, #tpu.memory_space<vmem>>, vector<1x60x128xf32>
    %33 = vector.shape_cast %32 : vector<1x60x128xf32> to vector<60x128xf32>
    %cst_37 = arith.constant dense<0.000000e+00> : vector<32x128xf32>
    %34 = tpu.matmul %31, %33, %cst_37 {dimension_numbers = #tpu.dot_dimension_numbers<[1], [0], [0], [1], [0, 0, 1, 1], [], []>} : vector<32x60xf32>, vector<60x128xf32>, vector<32x128xf32> -> vector<32x128xf32>
    %35 = arith.addf %29, %34 : vector<32x128xf32>
    %cst_38 = arith.constant dense<0.000000e+00> : vector<128xf32>
    %36 = vector.multi_reduction <add>, %35, %cst_38 [0] : vector<32x128xf32> to vector<128xf32>
    %37 = vector.shape_cast %36 : vector<128xf32> to vector<1x128xf32>
    %38 = arith.mulf %35, %35 : vector<32x128xf32>
    %cst_39 = arith.constant dense<0.000000e+00> : vector<128xf32>
    %39 = vector.multi_reduction <add>, %38, %cst_39 [0] : vector<32x128xf32> to vector<128xf32>
    %40 = vector.shape_cast %39 : vector<128xf32> to vector<1x128xf32>
    %c0_40 = arith.constant 0 : index
    %c0_41 = arith.constant 0 : index
    %41 = vector.load %arg2[%c0_40, %c0_41] : memref<128x8xf32, #tpu.memory_space<vmem>>, vector<128x8xf32>
    %cst_42 = arith.constant dense<0.000000e+00> : vector<1x8xf32>
    %42 = tpu.matmul %37, %41, %cst_42 {dimension_numbers = #tpu.dot_dimension_numbers<[1], [0], [0], [1], [0, 0, 1, 1], [], []>} : vector<1x128xf32>, vector<128x8xf32>, vector<1x8xf32> -> vector<1x8xf32>
    %cst_43 = arith.constant 0.001953125 : f32
    %43 = vector.broadcast %cst_43 : f32 to vector<1x8xf32>
    %44 = arith.mulf %42, %43 : vector<1x8xf32>
    %c0_44 = arith.constant 0 : index
    %c0_45 = arith.constant 0 : index
    %45 = vector.load %arg2[%c0_44, %c0_45] : memref<128x8xf32, #tpu.memory_space<vmem>>, vector<128x8xf32>
    %cst_46 = arith.constant dense<0.000000e+00> : vector<1x8xf32>
    %46 = tpu.matmul %40, %45, %cst_46 {dimension_numbers = #tpu.dot_dimension_numbers<[1], [0], [0], [1], [0, 0, 1, 1], [], []>} : vector<1x128xf32>, vector<128x8xf32>, vector<1x8xf32> -> vector<1x8xf32>
    %cst_47 = arith.constant 0.001953125 : f32
    %47 = vector.broadcast %cst_47 : f32 to vector<1x8xf32>
    %48 = arith.mulf %46, %47 : vector<1x8xf32>
    %49 = arith.mulf %44, %44 : vector<1x8xf32>
    %50 = arith.subf %48, %49 : vector<1x8xf32>
    %c0_48 = arith.constant 0 : index
    %c0_49 = arith.constant 0 : index
    %51 = vector.load %arg4[%c0_48, %c0_49] : memref<1x8xf32, #tpu.memory_space<vmem>>, vector<1x8xf32>
    %cst_50 = arith.constant 9.99999974E-6 : f32
    %52 = vector.broadcast %cst_50 : f32 to vector<1x8xf32>
    %53 = arith.addf %50, %52 : vector<1x8xf32>
    %54 = math.rsqrt %53 : vector<1x8xf32>
    %55 = arith.mulf %51, %54 : vector<1x8xf32>
    %c0_51 = arith.constant 0 : index
    %c0_52 = arith.constant 0 : index
    %56 = vector.load %arg5[%c0_51, %c0_52] : memref<1x8xf32, #tpu.memory_space<vmem>>, vector<1x8xf32>
    %57 = arith.mulf %44, %55 : vector<1x8xf32>
    %58 = arith.subf %56, %57 : vector<1x8xf32>
    %c0_53 = arith.constant 0 : index
    %c0_54 = arith.constant 0 : index
    %59 = vector.load %arg3[%c0_53, %c0_54] : memref<8x128xf32, #tpu.memory_space<vmem>>, vector<8x128xf32>
    %cst_55 = arith.constant dense<0.000000e+00> : vector<1x128xf32>
    %60 = tpu.matmul %55, %59, %cst_55 {dimension_numbers = #tpu.dot_dimension_numbers<[1], [0], [0], [1], [0, 0, 1, 1], [], []>} : vector<1x8xf32>, vector<8x128xf32>, vector<1x128xf32> -> vector<1x128xf32>
    %c0_56 = arith.constant 0 : index
    %c0_57 = arith.constant 0 : index
    %61 = vector.load %arg3[%c0_56, %c0_57] : memref<8x128xf32, #tpu.memory_space<vmem>>, vector<8x128xf32>
    %cst_58 = arith.constant dense<0.000000e+00> : vector<1x128xf32>
    %62 = tpu.matmul %58, %61, %cst_58 {dimension_numbers = #tpu.dot_dimension_numbers<[1], [0], [0], [1], [0, 0, 1, 1], [], []>} : vector<1x8xf32>, vector<8x128xf32>, vector<1x128xf32> -> vector<1x128xf32>
    %63 = vector.broadcast %60 : vector<1x128xf32> to vector<32x128xf32>
    %64 = arith.mulf %35, %63 : vector<32x128xf32>
    %65 = vector.broadcast %62 : vector<1x128xf32> to vector<32x128xf32>
    %66 = arith.addf %64, %65 : vector<32x128xf32>
    %cst_59 = arith.constant 0.000000e+00 : f32
    %67 = vector.broadcast %cst_59 : f32 to vector<32x128xf32>
    %68 = arith.maximumf %66, %67 : vector<32x128xf32>
    %cst_60 = arith.constant 0.000000e+00 : f32
    %69 = vector.broadcast %cst_60 : f32 to vector<2x20x160xf32>
    %c0_61 = arith.constant 0 : index
    %c0_62 = arith.constant 0 : index
    %c0_63 = arith.constant 0 : index
    %70 = vector.load %arg21[%c0_61, %c0_62, %c0_63] : memref<2x20x160xf32, #tpu.memory_space<vmem>>, vector<2x20x160xf32>
    tpu.vector_store %arg21[%c0_61, %c0_62, %c0_63], %69 {strides = array<i32>} : memref<2x20x160xf32, #tpu.memory_space<vmem>>, vector<2x20x160xf32>,
    %71 = vector.shape_cast %68 : vector<32x128xf32> to vector<2x16x128xf32>
    %c0_64 = arith.constant 0 : index
    %c2_65 = arith.constant 2 : index
    %c16 = arith.constant 16 : index
    %72 = vector.load %arg21[%c0_64, %c2_65, %c16] : memref<2x20x160xf32, #tpu.memory_space<vmem>>, vector<2x16x128xf32>
    tpu.vector_store %arg21[%c0_64, %c2_65, %c16], %71 {strides = array<i32>} : memref<2x20x160xf32, #tpu.memory_space<vmem>>, vector<2x16x128xf32>,
    %cst_66 = arith.constant 0.000000e+00 : f32
    %73 = vector.broadcast %cst_66 : f32 to vector<32x128xf32>
    %c0_67 = arith.constant 0 : index
    %c0_68 = arith.constant 0 : index
    %c0_69 = arith.constant 0 : index
    %74 = vector.load %arg21[%c0_67, %c0_68, %c0_69] : memref<2x20x160xf32, #tpu.memory_space<vmem>>, vector<2x16x160xf32>
    %75 = vector.shape_cast %74 : vector<2x16x160xf32> to vector<32x160xf32>
    %c0_70 = arith.constant 0 : index
    %c0_71 = arith.constant 0 : index
    %c0_72 = arith.constant 0 : index
    %76 = vector.load %arg6[%c0_70, %c0_71, %c0_72] : memref<5x160x128xf32, #tpu.memory_space<vmem>>, vector<1x160x128xf32>
    %77 = vector.shape_cast %76 : vector<1x160x128xf32> to vector<160x128xf32>
    %cst_73 = arith.constant dense<0.000000e+00> : vector<32x128xf32>
    %78 = tpu.matmul %75, %77, %cst_73 {dimension_numbers = #tpu.dot_dimension_numbers<[1], [0], [0], [1], [0, 0, 1, 1], [], []>} : vector<32x160xf32>, vector<160x128xf32>, vector<32x128xf32> -> vector<32x128xf32>
    %79 = arith.addf %73, %78 : vector<32x128xf32>
    %c0_74 = arith.constant 0 : index
    %c1_75 = arith.constant 1 : index
    %c0_76 = arith.constant 0 : index
    %80 = vector.load %arg21[%c0_74, %c1_75, %c0_76] : memref<2x20x160xf32, #tpu.memory_space<vmem>>, vector<2x16x160xf32>
    %81 = vector.shape_cast %80 : vector<2x16x160xf32> to vector<32x160xf32>
    %c1_77 = arith.constant 1 : index
    %c0_78 = arith.constant 0 : index
    %c0_79 = arith.constant 0 : index
    %82 = vector.load %arg6[%c1_77, %c0_78, %c0_79] : memref<5x160x128xf32, #tpu.memory_space<vmem>>, vector<1x160x128xf32>
    %83 = vector.shape_cast %82 : vector<1x160x128xf32> to vector<160x128xf32>
    %cst_80 = arith.constant dense<0.000000e+00> : vector<32x128xf32>
    %84 = tpu.matmul %81, %83, %cst_80 {dimension_numbers = #tpu.dot_dimension_numbers<[1], [0], [0], [1], [0, 0, 1, 1], [], []>} : vector<32x160xf32>, vector<160x128xf32>, vector<32x128xf32> -> vector<32x128xf32>
    %85 = arith.addf %79, %84 : vector<32x128xf32>
    %c0_81 = arith.constant 0 : index
    %c2_82 = arith.constant 2 : index
    %c0_83 = arith.constant 0 : index
    %86 = vector.load %arg21[%c0_81, %c2_82, %c0_83] : memref<2x20x160xf32, #tpu.memory_space<vmem>>, vector<2x16x160xf32>
    %87 = vector.shape_cast %86 : vector<2x16x160xf32> to vector<32x160xf32>
    %c2_84 = arith.constant 2 : index
    %c0_85 = arith.constant 0 : index
    %c0_86 = arith.constant 0 : index
    %88 = vector.load %arg6[%c2_84, %c0_85, %c0_86] : memref<5x160x128xf32, #tpu.memory_space<vmem>>, vector<1x160x128xf32>
    %89 = vector.shape_cast %88 : vector<1x160x128xf32> to vector<160x128xf32>
    %cst_87 = arith.constant dense<0.000000e+00> : vector<32x128xf32>
    %90 = tpu.matmul %87, %89, %cst_87 {dimension_numbers = #tpu.dot_dimension_numbers<[1], [0], [0], [1], [0, 0, 1, 1], [], []>} : vector<32x160xf32>, vector<160x128xf32>, vector<32x128xf32> -> vector<32x128xf32>
    %91 = arith.addf %85, %90 : vector<32x128xf32>
    %c0_88 = arith.constant 0 : index
    %c3_89 = arith.constant 3 : index
    %c0_90 = arith.constant 0 : index
    %92 = vector.load %arg21[%c0_88, %c3_89, %c0_90] : memref<2x20x160xf32, #tpu.memory_space<vmem>>, vector<2x16x160xf32>
    %93 = vector.shape_cast %92 : vector<2x16x160xf32> to vector<32x160xf32>
    %c3_91 = arith.constant 3 : index
    %c0_92 = arith.constant 0 : index
    %c0_93 = arith.constant 0 : index
    %94 = vector.load %arg6[%c3_91, %c0_92, %c0_93] : memref<5x160x128xf32, #tpu.memory_space<vmem>>, vector<1x160x128xf32>
    %95 = vector.shape_cast %94 : vector<1x160x128xf32> to vector<160x128xf32>
    %cst_94 = arith.constant dense<0.000000e+00> : vector<32x128xf32>
    %96 = tpu.matmul %93, %95, %cst_94 {dimension_numbers = #tpu.dot_dimension_numbers<[1], [0], [0], [1], [0, 0, 1, 1], [], []>} : vector<32x160xf32>, vector<160x128xf32>, vector<32x128xf32> -> vector<32x128xf32>
    %97 = arith.addf %91, %96 : vector<32x128xf32>
    %c0_95 = arith.constant 0 : index
    %c4_96 = arith.constant 4 : index
    %c0_97 = arith.constant 0 : index
    %98 = vector.load %arg21[%c0_95, %c4_96, %c0_97] : memref<2x20x160xf32, #tpu.memory_space<vmem>>, vector<2x16x160xf32>
    %99 = vector.shape_cast %98 : vector<2x16x160xf32> to vector<32x160xf32>
    %c4_98 = arith.constant 4 : index
    %c0_99 = arith.constant 0 : index
    %c0_100 = arith.constant 0 : index
    %100 = vector.load %arg6[%c4_98, %c0_99, %c0_100] : memref<5x160x128xf32, #tpu.memory_space<vmem>>, vector<1x160x128xf32>
    %101 = vector.shape_cast %100 : vector<1x160x128xf32> to vector<160x128xf32>
    %cst_101 = arith.constant dense<0.000000e+00> : vector<32x128xf32>
    %102 = tpu.matmul %99, %101, %cst_101 {dimension_numbers = #tpu.dot_dimension_numbers<[1], [0], [0], [1], [0, 0, 1, 1], [], []>} : vector<32x160xf32>, vector<160x128xf32>, vector<32x128xf32> -> vector<32x128xf32>
    %103 = arith.addf %97, %102 : vector<32x128xf32>
    %cst_102 = arith.constant dense<0.000000e+00> : vector<128xf32>
    %104 = vector.multi_reduction <add>, %103, %cst_102 [0] : vector<32x128xf32> to vector<128xf32>
    %105 = vector.shape_cast %104 : vector<128xf32> to vector<1x128xf32>
    %106 = arith.mulf %103, %103 : vector<32x128xf32>
    %cst_103 = arith.constant dense<0.000000e+00> : vector<128xf32>
    %107 = vector.multi_reduction <add>, %106, %cst_103 [0] : vector<32x128xf32> to vector<128xf32>
    %108 = vector.shape_cast %107 : vector<128xf32> to vector<1x128xf32>
    %c0_104 = arith.constant 0 : index
    %c0_105 = arith.constant 0 : index
    %109 = vector.load %arg7[%c0_104, %c0_105] : memref<128x8xf32, #tpu.memory_space<vmem>>, vector<128x8xf32>
    %cst_106 = arith.constant dense<0.000000e+00> : vector<1x8xf32>
    %110 = tpu.matmul %105, %109, %cst_106 {dimension_numbers = #tpu.dot_dimension_numbers<[1], [0], [0], [1], [0, 0, 1, 1], [], []>} : vector<1x128xf32>, vector<128x8xf32>, vector<1x8xf32> -> vector<1x8xf32>
    %cst_107 = arith.constant 0.001953125 : f32
    %111 = vector.broadcast %cst_107 : f32 to vector<1x8xf32>
    %112 = arith.mulf %110, %111 : vector<1x8xf32>
    %c0_108 = arith.constant 0 : index
    %c0_109 = arith.constant 0 : index
    %113 = vector.load %arg7[%c0_108, %c0_109] : memref<128x8xf32, #tpu.memory_space<vmem>>, vector<128x8xf32>
    %cst_110 = arith.constant dense<0.000000e+00> : vector<1x8xf32>
    %114 = tpu.matmul %108, %113, %cst_110 {dimension_numbers = #tpu.dot_dimension_numbers<[1], [0], [0], [1], [0, 0, 1, 1], [], []>} : vector<1x128xf32>, vector<128x8xf32>, vector<1x8xf32> -> vector<1x8xf32>
    %cst_111 = arith.constant 0.001953125 : f32
    %115 = vector.broadcast %cst_111 : f32 to vector<1x8xf32>
    %116 = arith.mulf %114, %115 : vector<1x8xf32>
    %117 = arith.mulf %112, %112 : vector<1x8xf32>
    %118 = arith.subf %116, %117 : vector<1x8xf32>
    %c0_112 = arith.constant 0 : index
    %c0_113 = arith.constant 0 : index
    %119 = vector.load %arg9[%c0_112, %c0_113] : memref<1x8xf32, #tpu.memory_space<vmem>>, vector<1x8xf32>
    %cst_114 = arith.constant 9.99999974E-6 : f32
    %120 = vector.broadcast %cst_114 : f32 to vector<1x8xf32>
    %121 = arith.addf %118, %120 : vector<1x8xf32>
    %122 = math.rsqrt %121 : vector<1x8xf32>
    %123 = arith.mulf %119, %122 : vector<1x8xf32>
    %c0_115 = arith.constant 0 : index
    %c0_116 = arith.constant 0 : index
    %124 = vector.load %arg10[%c0_115, %c0_116] : memref<1x8xf32, #tpu.memory_space<vmem>>, vector<1x8xf32>
    %125 = arith.mulf %112, %123 : vector<1x8xf32>
    %126 = arith.subf %124, %125 : vector<1x8xf32>
    %c0_117 = arith.constant 0 : index
    %c0_118 = arith.constant 0 : index
    %127 = vector.load %arg8[%c0_117, %c0_118] : memref<8x128xf32, #tpu.memory_space<vmem>>, vector<8x128xf32>
    %cst_119 = arith.constant dense<0.000000e+00> : vector<1x128xf32>
    %128 = tpu.matmul %123, %127, %cst_119 {dimension_numbers = #tpu.dot_dimension_numbers<[1], [0], [0], [1], [0, 0, 1, 1], [], []>} : vector<1x8xf32>, vector<8x128xf32>, vector<1x128xf32> -> vector<1x128xf32>
    %c0_120 = arith.constant 0 : index
    %c0_121 = arith.constant 0 : index
    %129 = vector.load %arg8[%c0_120, %c0_121] : memref<8x128xf32, #tpu.memory_space<vmem>>, vector<8x128xf32>
    %cst_122 = arith.constant dense<0.000000e+00> : vector<1x128xf32>
    %130 = tpu.matmul %126, %129, %cst_122 {dimension_numbers = #tpu.dot_dimension_numbers<[1], [0], [0], [1], [0, 0, 1, 1], [], []>} : vector<1x8xf32>, vector<8x128xf32>, vector<1x128xf32> -> vector<1x128xf32>
    %131 = vector.broadcast %128 : vector<1x128xf32> to vector<32x128xf32>
    %132 = arith.mulf %103, %131 : vector<32x128xf32>
    %133 = vector.broadcast %130 : vector<1x128xf32> to vector<32x128xf32>
    %134 = arith.addf %132, %133 : vector<32x128xf32>
    %cst_123 = arith.constant 0.000000e+00 : f32
    %135 = vector.broadcast %cst_123 : f32 to vector<32x128xf32>
    %136 = arith.maximumf %134, %135 : vector<32x128xf32>
    %cst_124 = arith.constant 0.000000e+00 : f32
    %137 = vector.broadcast %cst_124 : f32 to vector<2x20x160xf32>
    %c0_125 = arith.constant 0 : index
    %c0_126 = arith.constant 0 : index
    %c0_127 = arith.constant 0 : index
    %138 = vector.load %arg22[%c0_125, %c0_126, %c0_127] : memref<2x20x160xf32, #tpu.memory_space<vmem>>, vector<2x20x160xf32>
    tpu.vector_store %arg22[%c0_125, %c0_126, %c0_127], %137 {strides = array<i32>} : memref<2x20x160xf32, #tpu.memory_space<vmem>>, vector<2x20x160xf32>,
    %139 = vector.shape_cast %136 : vector<32x128xf32> to vector<2x16x128xf32>
    %c0_128 = arith.constant 0 : index
    %c2_129 = arith.constant 2 : index
    %c16_130 = arith.constant 16 : index
    %140 = vector.load %arg22[%c0_128, %c2_129, %c16_130] : memref<2x20x160xf32, #tpu.memory_space<vmem>>, vector<2x16x128xf32>
    tpu.vector_store %arg22[%c0_128, %c2_129, %c16_130], %139 {strides = array<i32>} : memref<2x20x160xf32, #tpu.memory_space<vmem>>, vector<2x16x128xf32>,
    %cst_131 = arith.constant 0.000000e+00 : f32
    %141 = vector.broadcast %cst_131 : f32 to vector<32x256xf32>
    %c0_132 = arith.constant 0 : index
    %c0_133 = arith.constant 0 : index
    %c0_134 = arith.constant 0 : index
    %142 = vector.load %arg22[%c0_132, %c0_133, %c0_134] : memref<2x20x160xf32, #tpu.memory_space<vmem>>, vector<2x16x160xf32>
    %143 = vector.shape_cast %142 : vector<2x16x160xf32> to vector<32x160xf32>
    %c0_135 = arith.constant 0 : index
    %c0_136 = arith.constant 0 : index
    %c0_137 = arith.constant 0 : index
    %144 = vector.load %arg11[%c0_135, %c0_136, %c0_137] : memref<5x160x256xf32, #tpu.memory_space<vmem>>, vector<1x160x256xf32>
    %145 = vector.shape_cast %144 : vector<1x160x256xf32> to vector<160x256xf32>
    %cst_138 = arith.constant dense<0.000000e+00> : vector<32x256xf32>
    %146 = tpu.matmul %143, %145, %cst_138 {dimension_numbers = #tpu.dot_dimension_numbers<[1], [0], [0], [1], [0, 0, 1, 1], [], []>} : vector<32x160xf32>, vector<160x256xf32>, vector<32x256xf32> -> vector<32x256xf32>
    %147 = arith.addf %141, %146 : vector<32x256xf32>
    %c0_139 = arith.constant 0 : index
    %c1_140 = arith.constant 1 : index
    %c0_141 = arith.constant 0 : index
    %148 = vector.load %arg22[%c0_139, %c1_140, %c0_141] : memref<2x20x160xf32, #tpu.memory_space<vmem>>, vector<2x16x160xf32>
    %149 = vector.shape_cast %148 : vector<2x16x160xf32> to vector<32x160xf32>
    %c1_142 = arith.constant 1 : index
    %c0_143 = arith.constant 0 : index
    %c0_144 = arith.constant 0 : index
    %150 = vector.load %arg11[%c1_142, %c0_143, %c0_144] : memref<5x160x256xf32, #tpu.memory_space<vmem>>, vector<1x160x256xf32>
    %151 = vector.shape_cast %150 : vector<1x160x256xf32> to vector<160x256xf32>
    %cst_145 = arith.constant dense<0.000000e+00> : vector<32x256xf32>
    %152 = tpu.matmul %149, %151, %cst_145 {dimension_numbers = #tpu.dot_dimension_numbers<[1], [0], [0], [1], [0, 0, 1, 1], [], []>} : vector<32x160xf32>, vector<160x256xf32>, vector<32x256xf32> -> vector<32x256xf32>
    %153 = arith.addf %147, %152 : vector<32x256xf32>
    %c0_146 = arith.constant 0 : index
    %c2_147 = arith.constant 2 : index
    %c0_148 = arith.constant 0 : index
    %154 = vector.load %arg22[%c0_146, %c2_147, %c0_148] : memref<2x20x160xf32, #tpu.memory_space<vmem>>, vector<2x16x160xf32>
    %155 = vector.shape_cast %154 : vector<2x16x160xf32> to vector<32x160xf32>
    %c2_149 = arith.constant 2 : index
    %c0_150 = arith.constant 0 : index
    %c0_151 = arith.constant 0 : index
    %156 = vector.load %arg11[%c2_149, %c0_150, %c0_151] : memref<5x160x256xf32, #tpu.memory_space<vmem>>, vector<1x160x256xf32>
    %157 = vector.shape_cast %156 : vector<1x160x256xf32> to vector<160x256xf32>
    %cst_152 = arith.constant dense<0.000000e+00> : vector<32x256xf32>
    %158 = tpu.matmul %155, %157, %cst_152 {dimension_numbers = #tpu.dot_dimension_numbers<[1], [0], [0], [1], [0, 0, 1, 1], [], []>} : vector<32x160xf32>, vector<160x256xf32>, vector<32x256xf32> -> vector<32x256xf32>
    %159 = arith.addf %153, %158 : vector<32x256xf32>
    %c0_153 = arith.constant 0 : index
    %c3_154 = arith.constant 3 : index
    %c0_155 = arith.constant 0 : index
    %160 = vector.load %arg22[%c0_153, %c3_154, %c0_155] : memref<2x20x160xf32, #tpu.memory_space<vmem>>, vector<2x16x160xf32>
    %161 = vector.shape_cast %160 : vector<2x16x160xf32> to vector<32x160xf32>
    %c3_156 = arith.constant 3 : index
    %c0_157 = arith.constant 0 : index
    %c0_158 = arith.constant 0 : index
    %162 = vector.load %arg11[%c3_156, %c0_157, %c0_158] : memref<5x160x256xf32, #tpu.memory_space<vmem>>, vector<1x160x256xf32>
    %163 = vector.shape_cast %162 : vector<1x160x256xf32> to vector<160x256xf32>
    %cst_159 = arith.constant dense<0.000000e+00> : vector<32x256xf32>
    %164 = tpu.matmul %161, %163, %cst_159 {dimension_numbers = #tpu.dot_dimension_numbers<[1], [0], [0], [1], [0, 0, 1, 1], [], []>} : vector<32x160xf32>, vector<160x256xf32>, vector<32x256xf32> -> vector<32x256xf32>
    %165 = arith.addf %159, %164 : vector<32x256xf32>
    %c0_160 = arith.constant 0 : index
    %c4_161 = arith.constant 4 : index
    %c0_162 = arith.constant 0 : index
    %166 = vector.load %arg22[%c0_160, %c4_161, %c0_162] : memref<2x20x160xf32, #tpu.memory_space<vmem>>, vector<2x16x160xf32>
    %167 = vector.shape_cast %166 : vector<2x16x160xf32> to vector<32x160xf32>
    %c4_163 = arith.constant 4 : index
    %c0_164 = arith.constant 0 : index
    %c0_165 = arith.constant 0 : index
    %168 = vector.load %arg11[%c4_163, %c0_164, %c0_165] : memref<5x160x256xf32, #tpu.memory_space<vmem>>, vector<1x160x256xf32>
    %169 = vector.shape_cast %168 : vector<1x160x256xf32> to vector<160x256xf32>
    %cst_166 = arith.constant dense<0.000000e+00> : vector<32x256xf32>
    %170 = tpu.matmul %167, %169, %cst_166 {dimension_numbers = #tpu.dot_dimension_numbers<[1], [0], [0], [1], [0, 0, 1, 1], [], []>} : vector<32x160xf32>, vector<160x256xf32>, vector<32x256xf32> -> vector<32x256xf32>
    %171 = arith.addf %165, %170 : vector<32x256xf32>
    %cst_167 = arith.constant dense<0.000000e+00> : vector<256xf32>
    %172 = vector.multi_reduction <add>, %171, %cst_167 [0] : vector<32x256xf32> to vector<256xf32>
    %173 = vector.shape_cast %172 : vector<256xf32> to vector<1x256xf32>
    %174 = arith.mulf %171, %171 : vector<32x256xf32>
    %cst_168 = arith.constant dense<0.000000e+00> : vector<256xf32>
    %175 = vector.multi_reduction <add>, %174, %cst_168 [0] : vector<32x256xf32> to vector<256xf32>
    %176 = vector.shape_cast %175 : vector<256xf32> to vector<1x256xf32>
    %c0_169 = arith.constant 0 : index
    %c0_170 = arith.constant 0 : index
    %177 = vector.load %arg12[%c0_169, %c0_170] : memref<256x16xf32, #tpu.memory_space<vmem>>, vector<256x16xf32>
    %cst_171 = arith.constant dense<0.000000e+00> : vector<1x16xf32>
    %178 = tpu.matmul %173, %177, %cst_171 {dimension_numbers = #tpu.dot_dimension_numbers<[1], [0], [0], [1], [0, 0, 1, 1], [], []>} : vector<1x256xf32>, vector<256x16xf32>, vector<1x16xf32> -> vector<1x16xf32>
    %cst_172 = arith.constant 0.001953125 : f32
    %179 = vector.broadcast %cst_172 : f32 to vector<1x16xf32>
    %180 = arith.mulf %178, %179 : vector<1x16xf32>
    %c0_173 = arith.constant 0 : index
    %c0_174 = arith.constant 0 : index
    %181 = vector.load %arg12[%c0_173, %c0_174] : memref<256x16xf32, #tpu.memory_space<vmem>>, vector<256x16xf32>
    %cst_175 = arith.constant dense<0.000000e+00> : vector<1x16xf32>
    %182 = tpu.matmul %176, %181, %cst_175 {dimension_numbers = #tpu.dot_dimension_numbers<[1], [0], [0], [1], [0, 0, 1, 1], [], []>} : vector<1x256xf32>, vector<256x16xf32>, vector<1x16xf32> -> vector<1x16xf32>
    %cst_176 = arith.constant 0.001953125 : f32
    %183 = vector.broadcast %cst_176 : f32 to vector<1x16xf32>
    %184 = arith.mulf %182, %183 : vector<1x16xf32>
    %185 = arith.mulf %180, %180 : vector<1x16xf32>
    %186 = arith.subf %184, %185 : vector<1x16xf32>
    %c0_177 = arith.constant 0 : index
    %c0_178 = arith.constant 0 : index
    %187 = vector.load %arg14[%c0_177, %c0_178] : memref<1x16xf32, #tpu.memory_space<vmem>>, vector<1x16xf32>
    %cst_179 = arith.constant 9.99999974E-6 : f32
    %188 = vector.broadcast %cst_179 : f32 to vector<1x16xf32>
    %189 = arith.addf %186, %188 : vector<1x16xf32>
    %190 = math.rsqrt %189 : vector<1x16xf32>
    %191 = arith.mulf %187, %190 : vector<1x16xf32>
    %c0_180 = arith.constant 0 : index
    %c0_181 = arith.constant 0 : index
    %192 = vector.load %arg15[%c0_180, %c0_181] : memref<1x16xf32, #tpu.memory_space<vmem>>, vector<1x16xf32>
    %193 = arith.mulf %180, %191 : vector<1x16xf32>
    %194 = arith.subf %192, %193 : vector<1x16xf32>
    %c0_182 = arith.constant 0 : index
    %c0_183 = arith.constant 0 : index
    %195 = vector.load %arg13[%c0_182, %c0_183] : memref<16x256xf32, #tpu.memory_space<vmem>>, vector<16x256xf32>
    %cst_184 = arith.constant dense<0.000000e+00> : vector<1x256xf32>
    %196 = tpu.matmul %191, %195, %cst_184 {dimension_numbers = #tpu.dot_dimension_numbers<[1], [0], [0], [1], [0, 0, 1, 1], [], []>} : vector<1x16xf32>, vector<16x256xf32>, vector<1x256xf32> -> vector<1x256xf32>
    %c0_185 = arith.constant 0 : index
    %c0_186 = arith.constant 0 : index
    %197 = vector.load %arg13[%c0_185, %c0_186] : memref<16x256xf32, #tpu.memory_space<vmem>>, vector<16x256xf32>
    %cst_187 = arith.constant dense<0.000000e+00> : vector<1x256xf32>
    %198 = tpu.matmul %194, %197, %cst_187 {dimension_numbers = #tpu.dot_dimension_numbers<[1], [0], [0], [1], [0, 0, 1, 1], [], []>} : vector<1x16xf32>, vector<16x256xf32>, vector<1x256xf32> -> vector<1x256xf32>
    %199 = vector.broadcast %196 : vector<1x256xf32> to vector<32x256xf32>
    %200 = arith.mulf %171, %199 : vector<32x256xf32>
    %201 = vector.broadcast %198 : vector<1x256xf32> to vector<32x256xf32>
    %202 = arith.addf %200, %201 : vector<32x256xf32>
    %cst_188 = arith.constant 0.000000e+00 : f32
    %203 = vector.broadcast %cst_188 : f32 to vector<32x256xf32>
    %204 = arith.maximumf %202, %203 : vector<32x256xf32>
    %c0_189 = arith.constant 0 : index
    %c0_190 = arith.constant 0 : index
    %205 = vector.load %arg12[%c0_189, %c0_190] : memref<256x16xf32, #tpu.memory_space<vmem>>, vector<256x16xf32>
    %cst_191 = arith.constant dense<0.000000e+00> : vector<32x16xf32>
    %206 = tpu.matmul %204, %205, %cst_191 {dimension_numbers = #tpu.dot_dimension_numbers<[1], [0], [0], [1], [0, 0, 1, 1], [], []>} : vector<32x256xf32>, vector<256x16xf32>, vector<32x16xf32> -> vector<32x16xf32>
    %c0_192 = arith.constant 0 : index
    %c0_193 = arith.constant 0 : index
    %207 = vector.load %arg16[%c0_192, %c0_193] : memref<2x32xf32, #tpu.memory_space<vmem>>, vector<2x32xf32>
    %cst_194 = arith.constant dense<0.000000e+00> : vector<2x16xf32>
    %208 = tpu.matmul %207, %206, %cst_194 {dimension_numbers = #tpu.dot_dimension_numbers<[1], [0], [0], [1], [0, 0, 1, 1], [], []>} : vector<2x32xf32>, vector<32x16xf32>, vector<2x16xf32> -> vector<2x16xf32>
    %c0_195 = arith.constant 0 : index
    %c0_196 = arith.constant 0 : index
    %209 = vector.load %arg17[%c0_195, %c0_196] : memref<16x10xf32, #tpu.memory_space<vmem>>, vector<16x10xf32>
    %cst_197 = arith.constant dense<0.000000e+00> : vector<2x10xf32>
    %210 = tpu.matmul %208, %209, %cst_197 {dimension_numbers = #tpu.dot_dimension_numbers<[1], [0], [0], [1], [0, 0, 1, 1], [], []>} : vector<2x16xf32>, vector<16x10xf32>, vector<2x10xf32> -> vector<2x10xf32>
    %c0_198 = arith.constant 0 : index
    %c0_199 = arith.constant 0 : index
    %211 = vector.load %arg18[%c0_198, %c0_199] : memref<1x10xf32, #tpu.memory_space<vmem>>, vector<1x10xf32>
    %212 = vector.broadcast %211 : vector<1x10xf32> to vector<2x10xf32>
    %213 = arith.addf %210, %212 : vector<2x10xf32>
    %c0_200 = arith.constant 0 : index
    %c0_201 = arith.constant 0 : index
    %214 = vector.load %arg19[%c0_200, %c0_201] : memref<2x10xf32, #tpu.memory_space<vmem>>, vector<2x10xf32>
    tpu.vector_store %arg19[%c0_200, %c0_201], %213 {strides = array<i32>} : memref<2x10xf32, #tpu.memory_space<vmem>>, vector<2x10xf32>,
    return
  }
}

</mosaic_0001>

<llo_original>
// kernel: child_network_forward.1
$region0: #{child_network_forward.1}
  #allocation0 [shape = 'u32[]', space=smem, size = 0x4, offset = 0x4, fixed_abs, tag = 'smem constant byte address 0x4 - core index']
  #allocation1 [shape = 'u32[144,128]{1,0:T(1,128)}', space=vmem, size = 0x12000, scoped, tag = 'internal scratch']
  #allocation2 [shape = 'f32[2,20,60]{2,1,0:T(8,128)}', space=vmem, size = 0x6000, scoped, tag = 'scratch operand']
  #allocation3 [shape = 'f32[2,20,160]{2,1,0:T(8,128)}', space=vmem, size = 0xc000, scoped, tag = 'scratch operand']
  #allocation4 [shape = 'f32[2,20,160]{2,1,0:T(8,128)}', space=vmem, size = 0xc000, scoped, tag = 'scratch operand']
  %s0 = inlined_call_operand.vmem [shape: f32[32,48], index: 0, kind: input, shape index: {}]
  %s1 = inlined_call_operand.vmem [shape: f32[5,60,128], index: 1, kind: input, shape index: {}]
  %s2 = inlined_call_operand.vmem [shape: f32[128,8], index: 2, kind: input, shape index: {}, may-alias: {2,7}]
  %s3 = inlined_call_operand.vmem [shape: f32[8,128], index: 3, kind: input, shape index: {}, may-alias: {3,8}]
  %s4 = inlined_call_operand.vmem [shape: f32[1,8], index: 4, kind: input, shape index: {}]
  %s5 = inlined_call_operand.vmem [shape: f32[1,8], index: 5, kind: input, shape index: {}]
  %s6 = inlined_call_operand.vmem [shape: f32[5,160,128], index: 6, kind: input, shape index: {}]
  %s7 = inlined_call_operand.vmem [shape: f32[128,8], index: 7, kind: input, shape index: {}, may-alias: {2,7}]
  %s8 = inlined_call_operand.vmem [shape: f32[8,128], index: 8, kind: input, shape index: {}, may-alias: {3,8}]
  %s9 = inlined_call_operand.vmem [shape: f32[1,8], index: 9, kind: input, shape index: {}]
  %s10 = inlined_call_operand.vmem [shape: f32[1,8], index: 10, kind: input, shape index: {}]
  %s11 = inlined_call_operand.vmem [shape: f32[5,160,256], index: 11, kind: input, shape index: {}]
  %s12 = inlined_call_operand.vmem [shape: f32[256,16], index: 12, kind: input, shape index: {}]
  %s13 = inlined_call_operand.vmem [shape: f32[16,256], index: 13, kind: input, shape index: {}]
  %s14 = inlined_call_operand.vmem [shape: f32[1,16], index: 14, kind: input, shape index: {}]
  %s15 = inlined_call_operand.vmem [shape: f32[1,16], index: 15, kind: input, shape index: {}]
  %s16 = inlined_call_operand.vmem [shape: f32[2,32], index: 16, kind: input, shape index: {}]
  %s17 = inlined_call_operand.vmem [shape: f32[16,10], index: 17, kind: input, shape index: {}]
  %s18 = inlined_call_operand.vmem [shape: f32[1,10], index: 18, kind: input, shape index: {}]
  %s19 = inlined_call_operand.hbm [shape: f32[2,10], index: 19, kind: output, shape index: {}]
  %s20 = sld [smem:[#allocation0]]
  $region86: #{child_network_forward.1} parent=0
    _
  %s22 = ssub.s32 1, %s20
  %s23 = scalar_select 0, %s22, %s20
  $region1: #{child_network_forward.1} parent=0
    #allocation5 [shape = 'u8[1024]{0}', space=vmem, size = 0x400, scoped, tag = 'output window, operand 0, single buffered']
    #allocation6 [shape = 's32[1]{0}', space=sflag, size = 0x4, scoped, tag = 'scoped memory for child_network_forward.1']
    %24 = vsyncpa [#allocation6], 0
    // Predicated region
    $region2: #{child_network_forward.1} parent=1 // pred_check
      _
    $region3: #{child_network_forward.1} parent=1 // pred_check_branch
      %26 = sbr.rel (0) target = $region5
    $region4: #{child_network_forward.1} parent=1 // pred_region
      _
    $region5: #{child_network_forward.1} parent=1 // pred_fallthru
      _
    // Predicated region
    $region6: #{child_network_forward.1} parent=1 // pred_check
      _
    $region7: #{child_network_forward.1} parent=1 // pred_check_branch
      %28 = sbr.rel (0) target = $region9
    $region8: #{child_network_forward.1} parent=1 // pred_region
      _
    $region9: #{child_network_forward.1} parent=1 // pred_fallthru
      _
    // Predicated region
    $region10: #{child_network_forward.1} parent=1 // pred_check
      _
    $region11: #{child_network_forward.1} parent=1 // pred_check_branch
      %30 = sbr.rel (0) target = $region13
    $region12: #{child_network_forward.1} parent=1 // pred_region
      _
    $region13: #{child_network_forward.1} parent=1 // pred_fallthru
      _
    // Predicated region
    $region14: #{child_network_forward.1} parent=1 // pred_check
      _
    $region15: #{child_network_forward.1} parent=1 // pred_check_branch
      %32 = sbr.rel (0) target = $region17
    $region16: #{child_network_forward.1} parent=1 // pred_region
      _
    $region17: #{child_network_forward.1} parent=1 // pred_fallthru
      _
    // Predicated region
    $region18: #{child_network_forward.1} parent=1 // pred_check
      _
    $region19: #{child_network_forward.1} parent=1 // pred_check_branch
      %34 = sbr.rel (0) target = $region21
    $region20: #{child_network_forward.1} parent=1 // pred_region
      _
    $region21: #{child_network_forward.1} parent=1 // pred_fallthru
      _
    // Predicated region
    $region22: #{child_network_forward.1} parent=1 // pred_check
      _
    $region23: #{child_network_forward.1} parent=1 // pred_check_branch
      %36 = sbr.rel (0) target = $region25
    $region24: #{child_network_forward.1} parent=1 // pred_region
      _
    $region25: #{child_network_forward.1} parent=1 // pred_fallthru
      _
    // Predicated region
    $region26: #{child_network_forward.1} parent=1 // pred_check
      _
    $region27: #{child_network_forward.1} parent=1 // pred_check_branch
      %38 = sbr.rel (0) target = $region29
    $region28: #{child_network_forward.1} parent=1 // pred_region
      _
    $region29: #{child_network_forward.1} parent=1 // pred_fallthru
      _
    // Predicated region
    $region30: #{child_network_forward.1} parent=1 // pred_check
      _
    $region31: #{child_network_forward.1} parent=1 // pred_check_branch
      %40 = sbr.rel (0) target = $region33
    $region32: #{child_network_forward.1} parent=1 // pred_region
      _
    $region33: #{child_network_forward.1} parent=1 // pred_fallthru
      _
    // Predicated region
    $region34: #{child_network_forward.1} parent=1 // pred_check
      _
    $region35: #{child_network_forward.1} parent=1 // pred_check_branch
      %42 = sbr.rel (0) target = $region37
    $region36: #{child_network_forward.1} parent=1 // pred_region
      _
    $region37: #{child_network_forward.1} parent=1 // pred_fallthru
      _
    // Predicated region
    $region38: #{child_network_forward.1} parent=1 // pred_check
      _
    $region39: #{child_network_forward.1} parent=1 // pred_check_branch
      %44 = sbr.rel (0) target = $region41
    $region40: #{child_network_forward.1} parent=1 // pred_region
      _
    $region41: #{child_network_forward.1} parent=1 // pred_fallthru
      _
    // Predicated region
    $region42: #{child_network_forward.1} parent=1 // pred_check
      _
    $region43: #{child_network_forward.1} parent=1 // pred_check_branch
      %46 = sbr.rel (0) target = $region45
    $region44: #{child_network_forward.1} parent=1 // pred_region
      _
    $region45: #{child_network_forward.1} parent=1 // pred_fallthru
      _
    // Predicated region
    $region46: #{child_network_forward.1} parent=1 // pred_check
      _
    $region47: #{child_network_forward.1} parent=1 // pred_check_branch
      %48 = sbr.rel (0) target = $region49
    $region48: #{child_network_forward.1} parent=1 // pred_region
      _
    $region49: #{child_network_forward.1} parent=1 // pred_fallthru
      _
    // Predicated region
    $region50: #{child_network_forward.1} parent=1 // pred_check
      _
    $region51: #{child_network_forward.1} parent=1 // pred_check_branch
      %50 = sbr.rel (0) target = $region53
    $region52: #{child_network_forward.1} parent=1 // pred_region
      _
    $region53: #{child_network_forward.1} parent=1 // pred_fallthru
      _
    // Predicated region
    $region54: #{child_network_forward.1} parent=1 // pred_check
      _
    $region55: #{child_network_forward.1} parent=1 // pred_check_branch
      %52 = sbr.rel (0) target = $region57
    $region56: #{child_network_forward.1} parent=1 // pred_region
      _
    $region57: #{child_network_forward.1} parent=1 // pred_fallthru
      _
    // Predicated region
    $region58: #{child_network_forward.1} parent=1 // pred_check
      _
    $region59: #{child_network_forward.1} parent=1 // pred_check_branch
      %54 = sbr.rel (0) target = $region61
    $region60: #{child_network_forward.1} parent=1 // pred_region
      _
    $region61: #{child_network_forward.1} parent=1 // pred_fallthru
      _
    // Predicated region
    $region62: #{child_network_forward.1} parent=1 // pred_check
      _
    $region63: #{child_network_forward.1} parent=1 // pred_check_branch
      %56 = sbr.rel (0) target = $region65
    $region64: #{child_network_forward.1} parent=1 // pred_region
      _
    $region65: #{child_network_forward.1} parent=1 // pred_fallthru
      _
    // Predicated region
    $region66: #{child_network_forward.1} parent=1 // pred_check
      _
    $region67: #{child_network_forward.1} parent=1 // pred_check_branch
      %58 = sbr.rel (0) target = $region69
    $region68: #{child_network_forward.1} parent=1 // pred_region
      _
    $region69: #{child_network_forward.1} parent=1 // pred_fallthru
      _
    // Predicated region
    $region70: #{child_network_forward.1} parent=1 // pred_check
      _
    $region71: #{child_network_forward.1} parent=1 // pred_check_branch
      %60 = sbr.rel (0) target = $region73
    $region72: #{child_network_forward.1} parent=1 // pred_region
      _
    $region73: #{child_network_forward.1} parent=1 // pred_fallthru
      _
    // Predicated region
    $region74: #{child_network_forward.1} parent=1 // pred_check
      _
    $region75: #{child_network_forward.1} parent=1 // pred_check_branch
      %62 = sbr.rel (0) target = $region77
    $region76: #{child_network_forward.1} parent=1 // pred_region
      _
    $region77: #{child_network_forward.1} parent=1 // pred_fallthru
      _
    %v63 = vld [vmem:[%s0] sm:$0xff]
    %v64 = vld [vmem:[%s0 + $0x8] sm:$0xff]
    %v65 = vld [vmem:[%s0 + $0x10] sm:$0xff]
    %v66 = vld [vmem:[%s0 + $0x18] sm:$0xff]
    %vm67 = vcmask 490496
    %68 = vst.msk [vmem:[#allocation2] sm:$0xff] %vm67, 0.0
    %69 = vst.msk [vmem:[#allocation2 + $0x8] sm:$0xff] %vm67, 0.0
    %vm70 = vcmask 486400
    %71 = vst.msk [vmem:[#allocation2 + $0x10] sm:$0xf] %vm70, 0.0
    %72 = vst.msk [vmem:[#allocation2 + $0x18] sm:$0xff] %vm67, 0.0
    %73 = vst.msk [vmem:[#allocation2 + $0x20] sm:$0xff] %vm67, 0.0
    %74 = vst.msk [vmem:[#allocation2 + $0x28] sm:$0xf] %vm70, 0.0
    %79 = vrot.lane.b32.xlu0 %v63, 6
    %v80 = vpop.permute.xlu0 %79
    %81 = vrot.lane.b32.xlu0 %v64, 6
    %v82 = vpop.permute.xlu0 %81
    %83 = vrot.lane.b32.xlu0 %v65, 6
    %v84 = vpop.permute.xlu0 %83
    %85 = vrot.lane.b32.xlu0 %v66, 6
    %v86 = vpop.permute.xlu0 %85
    %vm91 = vcmask 441392
    %92 = vst.msk [vmem:[#allocation2 + $0x2] sm:$0xff] %vm91, %v80
    %93 = vst.msk [vmem:[#allocation2 + $0xa] sm:$0xff] %vm91, %v82
    %94 = vst.msk [vmem:[#allocation2 + $0x1a] sm:$0xff] %vm91, %v84
    %95 = vst.msk [vmem:[#allocation2 + $0x22] sm:$0xff] %vm91, %v86
    %v96 = vld [vmem:[#allocation2] sm:$0xff]
    %v97 = vld [vmem:[#allocation2 + $0x8] sm:$0xff]
    %v98 = vld [vmem:[#allocation2 + $0x18] sm:$0xff]
    %v99 = vld [vmem:[#allocation2 + $0x20] sm:$0xff]
    %v100 = vld [vmem:[%s1] sm:$0xff]
    %v101 = vld [vmem:[%s1 + $0x8] sm:$0xff]
    %v102 = vld [vmem:[%s1 + $0x10] sm:$0xff]
    %v103 = vld [vmem:[%s1 + $0x18] sm:$0xff]
    %v104 = vld [vmem:[%s1 + $0x20] sm:$0xff]
    %v105 = vld [vmem:[%s1 + $0x28] sm:$0xff]
    %v106 = vld [vmem:[%s1 + $0x30] sm:$0xff]
    %v107 = vld [vmem:[%s1 + $0x38] sm:$0xf]
    %v108 = vld [vmem:[#allocation2 + $0x1] sm:$0xff]
    %v109 = vld [vmem:[#allocation2 + $0x9] sm:$0xff]
    %v110 = vld [vmem:[#allocation2 + $0x19] sm:$0xff]
    %v111 = vld [vmem:[#allocation2 + $0x21] sm:$0xff]
    %s112 = scalar_lea.vmem %s1, 64
    %v113 = vld [vmem:[%s112] sm:$0xff]
    %v114 = vld [vmem:[%s112 + $0x8] sm:$0xff]
    %v115 = vld [vmem:[%s112 + $0x10] sm:$0xff]
    %v116 = vld [vmem:[%s112 + $0x18] sm:$0xff]
    %v117 = vld [vmem:[%s112 + $0x20] sm:$0xff]
    %v118 = vld [vmem:[%s112 + $0x28] sm:$0xff]
    %v119 = vld [vmem:[%s112 + $0x30] sm:$0xff]
    %v120 = vld [vmem:[%s112 + $0x38] sm:$0xf]
    %v122 = vsel %vm67, %v108, 0
    %v125 = vsel %vm67, %v109, 0
    %v128 = vsel %vm67, %v110, 0
    %v131 = vsel %vm67, %v111, 0
    %vm133 = vcmask 1043456
    %v135 = vsel %vm133, %v120, 0
    %137 = vmatprep.subr.mxu0 0.0
    %138 = vmatpush1.msra.mxu0 0.0
    %139 = vmatprep.subr.mxu0 0.0
    %140 = vmatpush1.msra.mxu0 0.0
    %141 = vmatprep.subr.mxu0 0.0
    %142 = vmatpush1.msra.mxu0 0.0
    %143 = vmatprep.subr.mxu0 0.0
    %144 = vmatpush1.msra.mxu0 0.0
    %145 = vmatprep.subr.mxu0 0.0
    %146 = vmatpush1.msra.mxu0 0.0
    %147 = vmatprep.subr.mxu0 0.0
    %148 = vmatpush1.msra.mxu0 0.0
    %149 = vmatprep.subr.mxu0 0.0
    %150 = vmatpush1.msra.mxu0 0.0
    %151 = vmatprep.subr.mxu0 0.0
    %152 = vmatpush1.msra.mxu0 0.0
    %153 = vmatprep.subr.mxu0 0.0
    %154 = vmatpush1.msra.mxu0 %v135
    %155 = vmatprep.subr.mxu0 0.0
    %156 = vmatpush1.msra.mxu0 %v119
    %157 = vmatprep.subr.mxu0 0.0
    %158 = vmatpush1.msra.mxu0 %v118
    %159 = vmatprep.subr.mxu0 0.0
    %160 = vmatpush1.msra.mxu0 %v117
    %161 = vmatprep.subr.mxu0 0.0
    %162 = vmatpush1.msra.mxu0 %v116
    %163 = vmatprep.subr.mxu0 0.0
    %164 = vmatpush1.msra.mxu0 %v115
    %165 = vmatprep.subr.mxu0 0.0
    %166 = vmatpush1.msra.mxu0 %v114
    %167 = vmatprep.subr.mxu0 0.0
    %168 = vmatpush1.msra.mxu0 %v113
    %169 = vmatprep.subr.mxu0 0.0
    %170 = vmatpush2.msra.mxu0 0.0
    %171 = vmatprep.subr.mxu0 0.0
    %172 = vmatpush2.msra.mxu0 0.0
    %173 = vmatprep.subr.mxu0 0.0
    %174 = vmatpush2.msra.mxu0 0.0
    %175 = vmatprep.subr.mxu0 0.0
    %176 = vmatpush2.msra.mxu0 0.0
    %177 = vmatprep.subr.mxu0 0.0
    %178 = vmatpush2.msra.mxu0 0.0
    %179 = vmatprep.subr.mxu0 0.0
    %180 = vmatpush2.msra.mxu0 0.0
    %181 = vmatprep.subr.mxu0 0.0
    %182 = vmatpush2.msra.mxu0 0.0
    %183 = vmatprep.subr.mxu0 0.0
    %184 = vmatpush2.msra.mxu0 0.0
    %185 = vmatprep.subr.mxu0 0.0
    %186 = vmatpush2.msra.mxu0 0.0
    %187 = vmatprep.subr.mxu0 0.0
    %188 = vmatpush2.msra.mxu0 0.0
    %189 = vmatprep.subr.mxu0 0.0
    %190 = vmatpush2.msra.mxu0 0.0
    %191 = vmatprep.subr.mxu0 0.0
    %192 = vmatpush2.msra.mxu0 0.0
    %193 = vmatprep.subr.mxu0 0.0
    %194 = vmatpush2.msra.mxu0 0.0
    %195 = vmatprep.subr.mxu0 0.0
    %196 = vmatpush2.msra.mxu0 0.0
    %197 = vmatprep.subr.mxu0 0.0
    %198 = vmatpush2.msra.mxu0 0.0
    %199 = vmatprep.subr.mxu0 0.0
    %200 = vmatpush2.msra.mxu0 0.0
    %201 = vmatprep.mubr.f32.mxu0 0.0
    %202 = vmatmul.mubr.f32.gmra.mxu0 %v122
    %v203 = vpop.f32.mrf.mxu0
    %v204 = vadd.f32 0.0, %v203
    %v205 = vpop.f32.mrf.mxu0
    %206 = vmatprep.mubr.f32.mxu0 0.0
    %207 = vmatmul.mubr.f32.gmra.mxu0 %v125
    %v208 = vpop.f32.mrf.mxu0
    %v209 = vadd.f32 0.0, %v208
    %v210 = vpop.f32.mrf.mxu0
    %211 = vmatprep.mubr.f32.mxu0 0.0
    %212 = vmatmul.mubr.f32.gmra.mxu0 %v128
    %v213 = vpop.f32.mrf.mxu0
    %v214 = vadd.f32 0.0, %v213
    %v215 = vpop.f32.mrf.mxu0
    %216 = vmatprep.mubr.f32.mxu0 0.0
    %217 = vmatmul.mubr.f32.gmra.mxu0 %v131
    %v218 = vpop.f32.mrf.mxu0
    %v219 = vadd.f32 0.0, %v218
    %v220 = vpop.f32.mrf.mxu0
    %221 = vdwg.mxu0
    %v223 = vsel %vm67, %v96, 0
    %v226 = vsel %vm67, %v97, 0
    %v229 = vsel %vm67, %v98, 0
    %v232 = vsel %vm67, %v99, 0
    %v235 = vsel %vm133, %v107, 0
    %237 = vmatprep.subr.mxu0 0.0
    %238 = vmatpush1.msra.mxu0 0.0
    %239 = vmatprep.subr.mxu0 0.0
    %240 = vmatpush1.msra.mxu0 0.0
    %241 = vmatprep.subr.mxu0 0.0
    %242 = vmatpush1.msra.mxu0 0.0
    %243 = vmatprep.subr.mxu0 0.0
    %244 = vmatpush1.msra.mxu0 0.0
    %245 = vmatprep.subr.mxu0 0.0
    %246 = vmatpush1.msra.mxu0 0.0
    %247 = vmatprep.subr.mxu0 0.0
    %248 = vmatpush1.msra.mxu0 0.0
    %249 = vmatprep.subr.mxu0 0.0
    %250 = vmatpush1.msra.mxu0 0.0
    %251 = vmatprep.subr.mxu0 0.0
    %252 = vmatpush1.msra.mxu0 0.0
    %253 = vmatprep.subr.mxu0 0.0
    %254 = vmatpush1.msra.mxu0 %v235
    %255 = vmatprep.subr.mxu0 0.0
    %256 = vmatpush1.msra.mxu0 %v106
    %257 = vmatprep.subr.mxu0 0.0
    %258 = vmatpush1.msra.mxu0 %v105
    %259 = vmatprep.subr.mxu0 0.0
    %260 = vmatpush1.msra.mxu0 %v104
    %261 = vmatprep.subr.mxu0 0.0
    %262 = vmatpush1.msra.mxu0 %v103
    %263 = vmatprep.subr.mxu0 0.0
    %264 = vmatpush1.msra.mxu0 %v102
    %265 = vmatprep.subr.mxu0 0.0
    %266 = vmatpush1.msra.mxu0 %v101
    %267 = vmatprep.subr.mxu0 0.0
    %268 = vmatpush1.msra.mxu0 %v100
    %269 = vmatprep.subr.mxu0 0.0
    %270 = vmatpush2.msra.mxu0 0.0
    %271 = vmatprep.subr.mxu0 0.0
    %272 = vmatpush2.msra.mxu0 0.0
    %273 = vmatprep.subr.mxu0 0.0
    %274 = vmatpush2.msra.mxu0 0.0
    %275 = vmatprep.subr.mxu0 0.0
    %276 = vmatpush2.msra.mxu0 0.0
    %277 = vmatprep.subr.mxu0 0.0
    %278 = vmatpush2.msra.mxu0 0.0
    %279 = vmatprep.subr.mxu0 0.0
    %280 = vmatpush2.msra.mxu0 0.0
    %281 = vmatprep.subr.mxu0 0.0
    %282 = vmatpush2.msra.mxu0 0.0
    %283 = vmatprep.subr.mxu0 0.0
    %284 = vmatpush2.msra.mxu0 0.0
    %285 = vmatprep.subr.mxu0 0.0
    %286 = vmatpush2.msra.mxu0 0.0
    %287 = vmatprep.subr.mxu0 0.0
    %288 = vmatpush2.msra.mxu0 0.0
    %289 = vmatprep.subr.mxu0 0.0
    %290 = vmatpush2.msra.mxu0 0.0
    %291 = vmatprep.subr.mxu0 0.0
    %292 = vmatpush2.msra.mxu0 0.0
    %293 = vmatprep.subr.mxu0 0.0
    %294 = vmatpush2.msra.mxu0 0.0
    %295 = vmatprep.subr.mxu0 0.0
    %296 = vmatpush2.msra.mxu0 0.0
    %297 = vmatprep.subr.mxu0 0.0
    %298 = vmatpush2.msra.mxu0 0.0
    %299 = vmatprep.subr.mxu0 0.0
    %300 = vmatpush2.msra.mxu0 0.0
    %301 = vmatprep.mubr.f32.mxu0 0.0
    %302 = vmatmul.mubr.f32.gmra.mxu0 %v223
    %v303 = vpop.f32.mrf.mxu0
    %v304 = vadd.f32 %v204, %v303
    %v305 = vpop.f32.mrf.mxu0
    %306 = vmatprep.mubr.f32.mxu0 0.0
    %307 = vmatmul.mubr.f32.gmra.mxu0 %v226
    %v308 = vpop.f32.mrf.mxu0
    %v309 = vadd.f32 %v209, %v308
    %v310 = vpop.f32.mrf.mxu0
    %311 = vmatprep.mubr.f32.mxu0 0.0
    %312 = vmatmul.mubr.f32.gmra.mxu0 %v229
    %v313 = vpop.f32.mrf.mxu0
    %v314 = vadd.f32 %v214, %v313
    %v315 = vpop.f32.mrf.mxu0
    %316 = vmatprep.mubr.f32.mxu0 0.0
    %317 = vmatmul.mubr.f32.gmra.mxu0 %v232
    %v318 = vpop.f32.mrf.mxu0
    %v319 = vadd.f32 %v219, %v318
    %v320 = vpop.f32.mrf.mxu0
    %321 = vdwg.mxu0
    %v322 = vld [vmem:[#allocation2 + $0x2] sm:$0xff]
    %v323 = vld [vmem:[#allocation2 + $0xa] sm:$0xff]
    %v324 = vld [vmem:[#allocation2 + $0x1a] sm:$0xff]
    %v325 = vld [vmem:[#allocation2 + $0x22] sm:$0xff]
    %s326 = scalar_lea.vmem %s1, 128
    %v327 = vld [vmem:[%s326] sm:$0xff]
    %v328 = vld [vmem:[%s326 + $0x8] sm:$0xff]
    %v329 = vld [vmem:[%s326 + $0x10] sm:$0xff]
    %v330 = vld [vmem:[%s326 + $0x18] sm:$0xff]
    %v331 = vld [vmem:[%s326 + $0x20] sm:$0xff]
    %v332 = vld [vmem:[%s326 + $0x28] sm:$0xff]
    %v333 = vld [vmem:[%s326 + $0x30] sm:$0xff]
    %v334 = vld [vmem:[%s326 + $0x38] sm:$0xf]
    %v336 = vsel %vm67, %v322, 0
    %v339 = vsel %vm67, %v323, 0
    %v342 = vsel %vm67, %v324, 0
    %v345 = vsel %vm67, %v325, 0
    %v348 = vsel %vm133, %v334, 0
    %350 = vmatprep.subr.mxu0 0.0
    %351 = vmatpush1.msra.mxu0 0.0
    %352 = vmatprep.subr.mxu0 0.0
    %353 = vmatpush1.msra.mxu0 0.0
    %354 = vmatprep.subr.mxu0 0.0
    %355 = vmatpush1.msra.mxu0 0.0
    %356 = vmatprep.subr.mxu0 0.0
    %357 = vmatpush1.msra.mxu0 0.0
    %358 = vmatprep.subr.mxu0 0.0
    %359 = vmatpush1.msra.mxu0 0.0
    %360 = vmatprep.subr.mxu0 0.0
    %361 = vmatpush1.msra.mxu0 0.0
    %362 = vmatprep.subr.mxu0 0.0
    %363 = vmatpush1.msra.mxu0 0.0
    %364 = vmatprep.subr.mxu0 0.0
    %365 = vmatpush1.msra.mxu0 0.0
    %366 = vmatprep.subr.mxu0 0.0
    %367 = vmatpush1.msra.mxu0 %v348
    %368 = vmatprep.subr.mxu0 0.0
    %369 = vmatpush1.msra.mxu0 %v333
    %370 = vmatprep.subr.mxu0 0.0
    %371 = vmatpush1.msra.mxu0 %v332
    %372 = vmatprep.subr.mxu0 0.0
    %373 = vmatpush1.msra.mxu0 %v331
    %374 = vmatprep.subr.mxu0 0.0
    %375 = vmatpush1.msra.mxu0 %v330
    %376 = vmatprep.subr.mxu0 0.0
    %377 = vmatpush1.msra.mxu0 %v329
    %378 = vmatprep.subr.mxu0 0.0
    %379 = vmatpush1.msra.mxu0 %v328
    %380 = vmatprep.subr.mxu0 0.0
    %381 = vmatpush1.msra.mxu0 %v327
    %382 = vmatprep.subr.mxu0 0.0
    %383 = vmatpush2.msra.mxu0 0.0
    %384 = vmatprep.subr.mxu0 0.0
    %385 = vmatpush2.msra.mxu0 0.0
    %386 = vmatprep.subr.mxu0 0.0
    %387 = vmatpush2.msra.mxu0 0.0
    %388 = vmatprep.subr.mxu0 0.0
    %389 = vmatpush2.msra.mxu0 0.0
    %390 = vmatprep.subr.mxu0 0.0
    %391 = vmatpush2.msra.mxu0 0.0
    %392 = vmatprep.subr.mxu0 0.0
    %393 = vmatpush2.msra.mxu0 0.0
    %394 = vmatprep.subr.mxu0 0.0
    %395 = vmatpush2.msra.mxu0 0.0
    %396 = vmatprep.subr.mxu0 0.0
    %397 = vmatpush2.msra.mxu0 0.0
    %398 = vmatprep.subr.mxu0 0.0
    %399 = vmatpush2.msra.mxu0 0.0
    %400 = vmatprep.subr.mxu0 0.0
    %401 = vmatpush2.msra.mxu0 0.0
    %402 = vmatprep.subr.mxu0 0.0
    %403 = vmatpush2.msra.mxu0 0.0
    %404 = vmatprep.subr.mxu0 0.0
    %405 = vmatpush2.msra.mxu0 0.0
    %406 = vmatprep.subr.mxu0 0.0
    %407 = vmatpush2.msra.mxu0 0.0
    %408 = vmatprep.subr.mxu0 0.0
    %409 = vmatpush2.msra.mxu0 0.0
    %410 = vmatprep.subr.mxu0 0.0
    %411 = vmatpush2.msra.mxu0 0.0
    %412 = vmatprep.subr.mxu0 0.0
    %413 = vmatpush2.msra.mxu0 0.0
    %414 = vmatprep.mubr.f32.mxu0 0.0
    %415 = vmatmul.mubr.f32.gmra.mxu0 %v336
    %v416 = vpop.f32.mrf.mxu0
    %v417 = vadd.f32 0.0, %v416
    %v418 = vpop.f32.mrf.mxu0
    %419 = vmatprep.mubr.f32.mxu0 0.0
    %420 = vmatmul.mubr.f32.gmra.mxu0 %v339
    %v421 = vpop.f32.mrf.mxu0
    %v422 = vadd.f32 0.0, %v421
    %v423 = vpop.f32.mrf.mxu0
    %424 = vmatprep.mubr.f32.mxu0 0.0
    %425 = vmatmul.mubr.f32.gmra.mxu0 %v342
    %v426 = vpop.f32.mrf.mxu0
    %v427 = vadd.f32 0.0, %v426
    %v428 = vpop.f32.mrf.mxu0
    %429 = vmatprep.mubr.f32.mxu0 0.0
    %430 = vmatmul.mubr.f32.gmra.mxu0 %v345
    %v431 = vpop.f32.mrf.mxu0
    %v432 = vadd.f32 0.0, %v431
    %v433 = vpop.f32.mrf.mxu0
    %434 = vdwg.mxu0
    %v435 = vadd.f32 %v304, %v417
    %v436 = vadd.f32 %v309, %v422
    %v437 = vadd.f32 %v314, %v427
    %v438 = vadd.f32 %v319, %v432
    %v439 = vld [vmem:[#allocation2 + $0x3] sm:$0xff]
    %v440 = vld [vmem:[#allocation2 + $0xb] sm:$0xff]
    %v441 = vld [vmem:[#allocation2 + $0x1b] sm:$0xff]
    %v442 = vld [vmem:[#allocation2 + $0x23] sm:$0xff]
    %s443 = scalar_lea.vmem %s1, 192
    %v444 = vld [vmem:[%s443] sm:$0xff]
    %v445 = vld [vmem:[%s443 + $0x8] sm:$0xff]
    %v446 = vld [vmem:[%s443 + $0x10] sm:$0xff]
    %v447 = vld [vmem:[%s443 + $0x18] sm:$0xff]
    %v448 = vld [vmem:[%s443 + $0x20] sm:$0xff]
    %v449 = vld [vmem:[%s443 + $0x28] sm:$0xff]
    %v450 = vld [vmem:[%s443 + $0x30] sm:$0xff]
    %v451 = vld [vmem:[%s443 + $0x38] sm:$0xf]
    %v453 = vsel %vm67, %v439, 0
    %v456 = vsel %vm67, %v440, 0
    %v459 = vsel %vm67, %v441, 0
    %v462 = vsel %vm67, %v442, 0
    %v465 = vsel %vm133, %v451, 0
    %467 = vmatprep.subr.mxu0 0.0
    %468 = vmatpush1.msra.mxu0 0.0
    %469 = vmatprep.subr.mxu0 0.0
    %470 = vmatpush1.msra.mxu0 0.0
    %471 = vmatprep.subr.mxu0 0.0
    %472 = vmatpush1.msra.mxu0 0.0
    %473 = vmatprep.subr.mxu0 0.0
    %474 = vmatpush1.msra.mxu0 0.0
    %475 = vmatprep.subr.mxu0 0.0
    %476 = vmatpush1.msra.mxu0 0.0
    %477 = vmatprep.subr.mxu0 0.0
    %478 = vmatpush1.msra.mxu0 0.0
    %479 = vmatprep.subr.mxu0 0.0
    %480 = vmatpush1.msra.mxu0 0.0
    %481 = vmatprep.subr.mxu0 0.0
    %482 = vmatpush1.msra.mxu0 0.0
    %483 = vmatprep.subr.mxu0 0.0
    %484 = vmatpush1.msra.mxu0 %v465
    %485 = vmatprep.subr.mxu0 0.0
    %486 = vmatpush1.msra.mxu0 %v450
    %487 = vmatprep.subr.mxu0 0.0
    %488 = vmatpush1.msra.mxu0 %v449
    %489 = vmatprep.subr.mxu0 0.0
    %490 = vmatpush1.msra.mxu0 %v448
    %491 = vmatprep.subr.mxu0 0.0
    %492 = vmatpush1.msra.mxu0 %v447
    %493 = vmatprep.subr.mxu0 0.0
    %494 = vmatpush1.msra.mxu0 %v446
    %495 = vmatprep.subr.mxu0 0.0
    %496 = vmatpush1.msra.mxu0 %v445
    %497 = vmatprep.subr.mxu0 0.0
    %498 = vmatpush1.msra.mxu0 %v444
    %499 = vmatprep.subr.mxu0 0.0
    %500 = vmatpush2.msra.mxu0 0.0
    %501 = vmatprep.subr.mxu0 0.0
    %502 = vmatpush2.msra.mxu0 0.0
    %503 = vmatprep.subr.mxu0 0.0
    %504 = vmatpush2.msra.mxu0 0.0
    %505 = vmatprep.subr.mxu0 0.0
    %506 = vmatpush2.msra.mxu0 0.0
    %507 = vmatprep.subr.mxu0 0.0
    %508 = vmatpush2.msra.mxu0 0.0
    %509 = vmatprep.subr.mxu0 0.0
    %510 = vmatpush2.msra.mxu0 0.0
    %511 = vmatprep.subr.mxu0 0.0
    %512 = vmatpush2.msra.mxu0 0.0
    %513 = vmatprep.subr.mxu0 0.0
    %514 = vmatpush2.msra.mxu0 0.0
    %515 = vmatprep.subr.mxu0 0.0
    %516 = vmatpush2.msra.mxu0 0.0
    %517 = vmatprep.subr.mxu0 0.0
    %518 = vmatpush2.msra.mxu0 0.0
    %519 = vmatprep.subr.mxu0 0.0
    %520 = vmatpush2.msra.mxu0 0.0
    %521 = vmatprep.subr.mxu0 0.0
    %522 = vmatpush2.msra.mxu0 0.0
    %523 = vmatprep.subr.mxu0 0.0
    %524 = vmatpush2.msra.mxu0 0.0
    %525 = vmatprep.subr.mxu0 0.0
    %526 = vmatpush2.msra.mxu0 0.0
    %527 = vmatprep.subr.mxu0 0.0
    %528 = vmatpush2.msra.mxu0 0.0
    %529 = vmatprep.subr.mxu0 0.0
    %530 = vmatpush2.msra.mxu0 0.0
    %531 = vmatprep.mubr.f32.mxu0 0.0
    %532 = vmatmul.mubr.f32.gmra.mxu0 %v453
    %v533 = vpop.f32.mrf.mxu0
    %v534 = vadd.f32 0.0, %v533
    %v535 = vpop.f32.mrf.mxu0
    %536 = vmatprep.mubr.f32.mxu0 0.0
    %537 = vmatmul.mubr.f32.gmra.mxu0 %v456
    %v538 = vpop.f32.mrf.mxu0
    %v539 = vadd.f32 0.0, %v538
    %v540 = vpop.f32.mrf.mxu0
    %541 = vmatprep.mubr.f32.mxu0 0.0
    %542 = vmatmul.mubr.f32.gmra.mxu0 %v459
    %v543 = vpop.f32.mrf.mxu0
    %v544 = vadd.f32 0.0, %v543
    %v545 = vpop.f32.mrf.mxu0
    %546 = vmatprep.mubr.f32.mxu0 0.0
    %547 = vmatmul.mubr.f32.gmra.mxu0 %v462
    %v548 = vpop.f32.mrf.mxu0
    %v549 = vadd.f32 0.0, %v548
    %v550 = vpop.f32.mrf.mxu0
    %551 = vdwg.mxu0
    %v552 = vadd.f32 %v435, %v534
    %v553 = vadd.f32 %v436, %v539
    %v554 = vadd.f32 %v437, %v544
    %v555 = vadd.f32 %v438, %v549
    %v556 = vld [vmem:[#allocation2 + $0x4] sm:$0xff]
    %v557 = vld [vmem:[#allocation2 + $0xc] sm:$0xff]
    %v558 = vld [vmem:[#allocation2 + $0x1c] sm:$0xff]
    %v559 = vld [vmem:[#allocation2 + $0x24] sm:$0xff]
    %s560 = scalar_lea.vmem %s1, 256
    %v561 = vld [vmem:[%s560] sm:$0xff]
    %v562 = vld [vmem:[%s560 + $0x8] sm:$0xff]
    %v563 = vld [vmem:[%s560 + $0x10] sm:$0xff]
    %v564 = vld [vmem:[%s560 + $0x18] sm:$0xff]
    %v565 = vld [vmem:[%s560 + $0x20] sm:$0xff]
    %v566 = vld [vmem:[%s560 + $0x28] sm:$0xff]
    %v567 = vld [vmem:[%s560 + $0x30] sm:$0xff]
    %v568 = vld [vmem:[%s560 + $0x38] sm:$0xf]
    %v570 = vsel %vm67, %v556, 0
    %v573 = vsel %vm67, %v557, 0
    %v576 = vsel %vm67, %v558, 0
    %v579 = vsel %vm67, %v559, 0
    %v582 = vsel %vm133, %v568, 0
    %584 = vmatprep.subr.mxu0 0.0
    %585 = vmatpush1.msra.mxu0 0.0
    %586 = vmatprep.subr.mxu0 0.0
    %587 = vmatpush1.msra.mxu0 0.0
    %588 = vmatprep.subr.mxu0 0.0
    %589 = vmatpush1.msra.mxu0 0.0
    %590 = vmatprep.subr.mxu0 0.0
    %591 = vmatpush1.msra.mxu0 0.0
    %592 = vmatprep.subr.mxu0 0.0
    %593 = vmatpush1.msra.mxu0 0.0
    %594 = vmatprep.subr.mxu0 0.0
    %595 = vmatpush1.msra.mxu0 0.0
    %596 = vmatprep.subr.mxu0 0.0
    %597 = vmatpush1.msra.mxu0 0.0
    %598 = vmatprep.subr.mxu0 0.0
    %599 = vmatpush1.msra.mxu0 0.0
    %600 = vmatprep.subr.mxu0 0.0
    %601 = vmatpush1.msra.mxu0 %v582
    %602 = vmatprep.subr.mxu0 0.0
    %603 = vmatpush1.msra.mxu0 %v567
    %604 = vmatprep.subr.mxu0 0.0
    %605 = vmatpush1.msra.mxu0 %v566
    %606 = vmatprep.subr.mxu0 0.0
    %607 = vmatpush1.msra.mxu0 %v565
    %608 = vmatprep.subr.mxu0 0.0
    %609 = vmatpush1.msra.mxu0 %v564
    %610 = vmatprep.subr.mxu0 0.0
    %611 = vmatpush1.msra.mxu0 %v563
    %612 = vmatprep.subr.mxu0 0.0
    %613 = vmatpush1.msra.mxu0 %v562
    %614 = vmatprep.subr.mxu0 0.0
    %615 = vmatpush1.msra.mxu0 %v561
    %616 = vmatprep.subr.mxu0 0.0
    %617 = vmatpush2.msra.mxu0 0.0
    %618 = vmatprep.subr.mxu0 0.0
    %619 = vmatpush2.msra.mxu0 0.0
    %620 = vmatprep.subr.mxu0 0.0
    %621 = vmatpush2.msra.mxu0 0.0
    %622 = vmatprep.subr.mxu0 0.0
    %623 = vmatpush2.msra.mxu0 0.0
    %624 = vmatprep.subr.mxu0 0.0
    %625 = vmatpush2.msra.mxu0 0.0
    %626 = vmatprep.subr.mxu0 0.0
    %627 = vmatpush2.msra.mxu0 0.0
    %628 = vmatprep.subr.mxu0 0.0
    %629 = vmatpush2.msra.mxu0 0.0
    %630 = vmatprep.subr.mxu0 0.0
    %631 = vmatpush2.msra.mxu0 0.0
    %632 = vmatprep.subr.mxu0 0.0
    %633 = vmatpush2.msra.mxu0 0.0
    %634 = vmatprep.subr.mxu0 0.0
    %635 = vmatpush2.msra.mxu0 0.0
    %636 = vmatprep.subr.mxu0 0.0
    %637 = vmatpush2.msra.mxu0 0.0
    %638 = vmatprep.subr.mxu0 0.0
    %639 = vmatpush2.msra.mxu0 0.0
    %640 = vmatprep.subr.mxu0 0.0
    %641 = vmatpush2.msra.mxu0 0.0
    %642 = vmatprep.subr.mxu0 0.0
    %643 = vmatpush2.msra.mxu0 0.0
    %644 = vmatprep.subr.mxu0 0.0
    %645 = vmatpush2.msra.mxu0 0.0
    %646 = vmatprep.subr.mxu0 0.0
    %647 = vmatpush2.msra.mxu0 0.0
    %648 = vmatprep.mubr.f32.mxu0 0.0
    %649 = vmatmul.mubr.f32.gmra.mxu0 %v570
    %v650 = vpop.f32.mrf.mxu0
    %v651 = vadd.f32 0.0, %v650
    %v652 = vpop.f32.mrf.mxu0
    %653 = vmatprep.mubr.f32.mxu0 0.0
    %654 = vmatmul.mubr.f32.gmra.mxu0 %v573
    %v655 = vpop.f32.mrf.mxu0
    %v656 = vadd.f32 0.0, %v655
    %v657 = vpop.f32.mrf.mxu0
    %658 = vmatprep.mubr.f32.mxu0 0.0
    %659 = vmatmul.mubr.f32.gmra.mxu0 %v576
    %v660 = vpop.f32.mrf.mxu0
    %v661 = vadd.f32 0.0, %v660
    %v662 = vpop.f32.mrf.mxu0
    %663 = vmatprep.mubr.f32.mxu0 0.0
    %664 = vmatmul.mubr.f32.gmra.mxu0 %v579
    %v665 = vpop.f32.mrf.mxu0
    %v666 = vadd.f32 0.0, %v665
    %v667 = vpop.f32.mrf.mxu0
    %668 = vdwg.mxu0
    %v669 = vadd.f32 %v552, %v651
    %v670 = vadd.f32 %v553, %v656
    %v671 = vadd.f32 %v554, %v661
    %v672 = vadd.f32 %v555, %v666
    %v673 = vadd.f32 %v669, %v670
    %v674 = vadd.f32 %v673, %v671
    %v675 = vadd.f32 %v674, %v672
    %v676 = vrot.slane %v675, 4
    %v677 = vadd.f32 %v675, %v676
    %v678 = vrot.slane %v677, 2
    %v679 = vadd.f32 %v677, %v678
    %v680 = vrot.slane %v679, 1
    %v681 = vadd.f32 %v679, %v680
    %v682 = vmul.f32 %v669, %v669
    %v683 = vmul.f32 %v670, %v670
    %v684 = vmul.f32 %v671, %v671
    %v685 = vmul.f32 %v672, %v672
    %v686 = vadd.f32 %v682, %v683
    %v687 = vadd.f32 %v686, %v684
    %v688 = vadd.f32 %v687, %v685
    %v689 = vrot.slane %v688, 4
    %v690 = vadd.f32 %v688, %v689
    %v691 = vrot.slane %v690, 2
    %v692 = vadd.f32 %v690, %v691
    %v693 = vrot.slane %v692, 1
    %v694 = vadd.f32 %v692, %v693
    %v695 = vld [vmem:[%s2] sm:$0xff]
    %v696 = vld [vmem:[%s2 + $0x8] sm:$0xff]
    %v697 = vld [vmem:[%s2 + $0x10] sm:$0xff]
    %v698 = vld [vmem:[%s2 + $0x18] sm:$0xff]
    %v699 = vld [vmem:[%s2 + $0x20] sm:$0xff]
    %v700 = vld [vmem:[%s2 + $0x28] sm:$0xff]
    %v701 = vld [vmem:[%s2 + $0x30] sm:$0xff]
    %v702 = vld [vmem:[%s2 + $0x38] sm:$0xff]
    %v703 = vld [vmem:[%s2 + $0x40] sm:$0xff]
    %v704 = vld [vmem:[%s2 + $0x48] sm:$0xff]
    %v705 = vld [vmem:[%s2 + $0x50] sm:$0xff]
    %v706 = vld [vmem:[%s2 + $0x58] sm:$0xff]
    %v707 = vld [vmem:[%s2 + $0x60] sm:$0xff]
    %v708 = vld [vmem:[%s2 + $0x68] sm:$0xff]
    %v709 = vld [vmem:[%s2 + $0x70] sm:$0xff]
    %v710 = vld [vmem:[%s2 + $0x78] sm:$0xff]
    %711 = vmatprep.subr.mxu0 0.0
    %712 = vmatpush1.msra.mxu0 %v710
    %713 = vmatprep.subr.mxu0 0.0
    %714 = vmatpush1.msra.mxu0 %v709
    %715 = vmatprep.subr.mxu0 0.0
    %716 = vmatpush1.msra.mxu0 %v708
    %717 = vmatprep.subr.mxu0 0.0
    %718 = vmatpush1.msra.mxu0 %v707
    %719 = vmatprep.subr.mxu0 0.0
    %720 = vmatpush1.msra.mxu0 %v706
    %721 = vmatprep.subr.mxu0 0.0
    %722 = vmatpush1.msra.mxu0 %v705
    %723 = vmatprep.subr.mxu0 0.0
    %724 = vmatpush1.msra.mxu0 %v704
    %725 = vmatprep.subr.mxu0 0.0
    %726 = vmatpush1.msra.mxu0 %v703
    %727 = vmatprep.subr.mxu0 0.0
    %728 = vmatpush1.msra.mxu0 %v702
    %729 = vmatprep.subr.mxu0 0.0
    %730 = vmatpush1.msra.mxu0 %v701
    %731 = vmatprep.subr.mxu0 0.0
    %732 = vmatpush1.msra.mxu0 %v700
    %733 = vmatprep.subr.mxu0 0.0
    %734 = vmatpush1.msra.mxu0 %v699
    %735 = vmatprep.subr.mxu0 0.0
    %736 = vmatpush1.msra.mxu0 %v698
    %737 = vmatprep.subr.mxu0 0.0
    %738 = vmatpush1.msra.mxu0 %v697
    %739 = vmatprep.subr.mxu0 0.0
    %740 = vmatpush1.msra.mxu0 %v696
    %741 = vmatprep.subr.mxu0 0.0
    %742 = vmatpush1.msra.mxu0 %v695
    %743 = vmatprep.subr.mxu0 0.0
    %744 = vmatpush2.msra.mxu0 0.0
    %745 = vmatprep.subr.mxu0 0.0
    %746 = vmatpush2.msra.mxu0 0.0
    %747 = vmatprep.subr.mxu0 0.0
    %748 = vmatpush2.msra.mxu0 0.0
    %749 = vmatprep.subr.mxu0 0.0
    %750 = vmatpush2.msra.mxu0 0.0
    %751 = vmatprep.subr.mxu0 0.0
    %752 = vmatpush2.msra.mxu0 0.0
    %753 = vmatprep.subr.mxu0 0.0
    %754 = vmatpush2.msra.mxu0 0.0
    %755 = vmatprep.subr.mxu0 0.0
    %756 = vmatpush2.msra.mxu0 0.0
    %757 = vmatprep.subr.mxu0 0.0
    %758 = vmatpush2.msra.mxu0 0.0
    %759 = vmatprep.subr.mxu0 0.0
    %760 = vmatpush2.msra.mxu0 0.0
    %761 = vmatprep.subr.mxu0 0.0
    %762 = vmatpush2.msra.mxu0 0.0
    %763 = vmatprep.subr.mxu0 0.0
    %764 = vmatpush2.msra.mxu0 0.0
    %765 = vmatprep.subr.mxu0 0.0
    %766 = vmatpush2.msra.mxu0 0.0
    %767 = vmatprep.subr.mxu0 0.0
    %768 = vmatpush2.msra.mxu0 0.0
    %769 = vmatprep.subr.mxu0 0.0
    %770 = vmatpush2.msra.mxu0 0.0
    %771 = vmatprep.subr.mxu0 0.0
    %772 = vmatpush2.msra.mxu0 0.0
    %773 = vmatprep.subr.mxu0 0.0
    %774 = vmatpush2.msra.mxu0 0.0
    %775 = vmatprep.mubr.f32.mxu0 0.0
    %776 = vmatmul.mubr.f32.gmra.mxu0 %v681
    %v777 = vpop.f32.mrf.mxu0
    %v778 = vadd.f32 0.0, %v777
    %v779 = vpop.f32.mrf.mxu0
    %780 = vdwg.mxu0
    %v781 = vmul.f32 %v778, 0.001953125
    %782 = vmatprep.subr.mxu0 0.0
    %783 = vmatpush1.msra.mxu0 %v710
    %784 = vmatprep.subr.mxu0 0.0
    %785 = vmatpush1.msra.mxu0 %v709
    %786 = vmatprep.subr.mxu0 0.0
    %787 = vmatpush1.msra.mxu0 %v708
    %788 = vmatprep.subr.mxu0 0.0
    %789 = vmatpush1.msra.mxu0 %v707
    %790 = vmatprep.subr.mxu0 0.0
    %791 = vmatpush1.msra.mxu0 %v706
    %792 = vmatprep.subr.mxu0 0.0
    %793 = vmatpush1.msra.mxu0 %v705
    %794 = vmatprep.subr.mxu0 0.0
    %795 = vmatpush1.msra.mxu0 %v704
    %796 = vmatprep.subr.mxu0 0.0
    %797 = vmatpush1.msra.mxu0 %v703
    %798 = vmatprep.subr.mxu0 0.0
    %799 = vmatpush1.msra.mxu0 %v702
    %800 = vmatprep.subr.mxu0 0.0
    %801 = vmatpush1.msra.mxu0 %v701
    %802 = vmatprep.subr.mxu0 0.0
    %803 = vmatpush1.msra.mxu0 %v700
    %804 = vmatprep.subr.mxu0 0.0
    %805 = vmatpush1.msra.mxu0 %v699
    %806 = vmatprep.subr.mxu0 0.0
    %807 = vmatpush1.msra.mxu0 %v698
    %808 = vmatprep.subr.mxu0 0.0
    %809 = vmatpush1.msra.mxu0 %v697
    %810 = vmatprep.subr.mxu0 0.0
    %811 = vmatpush1.msra.mxu0 %v696
    %812 = vmatprep.subr.mxu0 0.0
    %813 = vmatpush1.msra.mxu0 %v695
    %814 = vmatprep.subr.mxu0 0.0
    %815 = vmatpush2.msra.mxu0 0.0
    %816 = vmatprep.subr.mxu0 0.0
    %817 = vmatpush2.msra.mxu0 0.0
    %818 = vmatprep.subr.mxu0 0.0
    %819 = vmatpush2.msra.mxu0 0.0
    %820 = vmatprep.subr.mxu0 0.0
    %821 = vmatpush2.msra.mxu0 0.0
    %822 = vmatprep.subr.mxu0 0.0
    %823 = vmatpush2.msra.mxu0 0.0
    %824 = vmatprep.subr.mxu0 0.0
    %825 = vmatpush2.msra.mxu0 0.0
    %826 = vmatprep.subr.mxu0 0.0
    %827 = vmatpush2.msra.mxu0 0.0
    %828 = vmatprep.subr.mxu0 0.0
    %829 = vmatpush2.msra.mxu0 0.0
    %830 = vmatprep.subr.mxu0 0.0
    %831 = vmatpush2.msra.mxu0 0.0
    %832 = vmatprep.subr.mxu0 0.0
    %833 = vmatpush2.msra.mxu0 0.0
    %834 = vmatprep.subr.mxu0 0.0
    %835 = vmatpush2.msra.mxu0 0.0
    %836 = vmatprep.subr.mxu0 0.0
    %837 = vmatpush2.msra.mxu0 0.0
    %838 = vmatprep.subr.mxu0 0.0
    %839 = vmatpush2.msra.mxu0 0.0
    %840 = vmatprep.subr.mxu0 0.0
    %841 = vmatpush2.msra.mxu0 0.0
    %842 = vmatprep.subr.mxu0 0.0
    %843 = vmatpush2.msra.mxu0 0.0
    %844 = vmatprep.subr.mxu0 0.0
    %845 = vmatpush2.msra.mxu0 0.0
    %846 = vmatprep.mubr.f32.mxu0 0.0
    %847 = vmatmul.mubr.f32.gmra.mxu0 %v694
    %v848 = vpop.f32.mrf.mxu0
    %v849 = vadd.f32 0.0, %v848
    %v850 = vpop.f32.mrf.mxu0
    %851 = vdwg.mxu0
    %v852 = vmul.f32 %v849, 0.001953125
    %v853 = vmul.f32 %v781, %v781
    %v854 = vsub.f32 %v852, %v853
    %v855 = vld [vmem:[%s4] sm:$0x1]
    %v856 = vadd.f32 %v854, 1e-05
    %v857 = vrsqrt.pop %v856
    %v858 = vmul.f32 %v855, %v857
    %v859 = vld [vmem:[%s5] sm:$0x1]
    %v860 = vmul.f32 %v781, %v858
    %v861 = vsub.f32 %v859, %v860
    %v862 = vld [vmem:[%s3] sm:$0xff]
    %vm863 = vcmask 64512
    %v865 = vsel %vm863, %v858, 0
    %867 = vmatprep.subr.mxu0 0.0
    %868 = vmatpush1.msra.mxu0 0.0
    %869 = vmatprep.subr.mxu0 0.0
    %870 = vmatpush1.msra.mxu0 0.0
    %871 = vmatprep.subr.mxu0 0.0
    %872 = vmatpush1.msra.mxu0 0.0
    %873 = vmatprep.subr.mxu0 0.0
    %874 = vmatpush1.msra.mxu0 0.0
    %875 = vmatprep.subr.mxu0 0.0
    %876 = vmatpush1.msra.mxu0 0.0
    %877 = vmatprep.subr.mxu0 0.0
    %878 = vmatpush1.msra.mxu0 0.0
    %879 = vmatprep.subr.mxu0 0.0
    %880 = vmatpush1.msra.mxu0 0.0
    %881 = vmatprep.subr.mxu0 0.0
    %882 = vmatpush1.msra.mxu0 0.0
    %883 = vmatprep.subr.mxu0 0.0
    %884 = vmatpush1.msra.mxu0 0.0
    %885 = vmatprep.subr.mxu0 0.0
    %886 = vmatpush1.msra.mxu0 0.0
    %887 = vmatprep.subr.mxu0 0.0
    %888 = vmatpush1.msra.mxu0 0.0
    %889 = vmatprep.subr.mxu0 0.0
    %890 = vmatpush1.msra.mxu0 0.0
    %891 = vmatprep.subr.mxu0 0.0
    %892 = vmatpush1.msra.mxu0 0.0
    %893 = vmatprep.subr.mxu0 0.0
    %894 = vmatpush1.msra.mxu0 0.0
    %895 = vmatprep.subr.mxu0 0.0
    %896 = vmatpush1.msra.mxu0 0.0
    %897 = vmatprep.subr.mxu0 0.0
    %898 = vmatpush1.msra.mxu0 %v862
    %899 = vmatprep.subr.mxu0 0.0
    %900 = vmatpush2.msra.mxu0 0.0
    %901 = vmatprep.subr.mxu0 0.0
    %902 = vmatpush2.msra.mxu0 0.0
    %903 = vmatprep.subr.mxu0 0.0
    %904 = vmatpush2.msra.mxu0 0.0
    %905 = vmatprep.subr.mxu0 0.0
    %906 = vmatpush2.msra.mxu0 0.0
    %907 = vmatprep.subr.mxu0 0.0
    %908 = vmatpush2.msra.mxu0 0.0
    %909 = vmatprep.subr.mxu0 0.0
    %910 = vmatpush2.msra.mxu0 0.0
    %911 = vmatprep.subr.mxu0 0.0
    %912 = vmatpush2.msra.mxu0 0.0
    %913 = vmatprep.subr.mxu0 0.0
    %914 = vmatpush2.msra.mxu0 0.0
    %915 = vmatprep.subr.mxu0 0.0
    %916 = vmatpush2.msra.mxu0 0.0
    %917 = vmatprep.subr.mxu0 0.0
    %918 = vmatpush2.msra.mxu0 0.0
    %919 = vmatprep.subr.mxu0 0.0
    %920 = vmatpush2.msra.mxu0 0.0
    %921 = vmatprep.subr.mxu0 0.0
    %922 = vmatpush2.msra.mxu0 0.0
    %923 = vmatprep.subr.mxu0 0.0
    %924 = vmatpush2.msra.mxu0 0.0
    %925 = vmatprep.subr.mxu0 0.0
    %926 = vmatpush2.msra.mxu0 0.0
    %927 = vmatprep.subr.mxu0 0.0
    %928 = vmatpush2.msra.mxu0 0.0
    %929 = vmatprep.subr.mxu0 0.0
    %930 = vmatpush2.msra.mxu0 0.0
    %931 = vmatprep.mubr.f32.mxu0 0.0
    %932 = vmatmul.mubr.f32.gmra.mxu0 %v865
    %v933 = vpop.f32.mrf.mxu0
    %v934 = vadd.f32 0.0, %v933
    %v935 = vpop.f32.mrf.mxu0
    %936 = vdwg.mxu0
    %v938 = vsel %vm863, %v861, 0
    %940 = vmatprep.subr.mxu0 0.0
    %941 = vmatpush1.msra.mxu0 0.0
    %942 = vmatprep.subr.mxu0 0.0
    %943 = vmatpush1.msra.mxu0 0.0
    %944 = vmatprep.subr.mxu0 0.0
    %945 = vmatpush1.msra.mxu0 0.0
    %946 = vmatprep.subr.mxu0 0.0
    %947 = vmatpush1.msra.mxu0 0.0
    %948 = vmatprep.subr.mxu0 0.0
    %949 = vmatpush1.msra.mxu0 0.0
    %950 = vmatprep.subr.mxu0 0.0
    %951 = vmatpush1.msra.mxu0 0.0
    %952 = vmatprep.subr.mxu0 0.0
    %953 = vmatpush1.msra.mxu0 0.0
    %954 = vmatprep.subr.mxu0 0.0
    %955 = vmatpush1.msra.mxu0 0.0
    %956 = vmatprep.subr.mxu0 0.0
    %957 = vmatpush1.msra.mxu0 0.0
    %958 = vmatprep.subr.mxu0 0.0
    %959 = vmatpush1.msra.mxu0 0.0
    %960 = vmatprep.subr.mxu0 0.0
    %961 = vmatpush1.msra.mxu0 0.0
    %962 = vmatprep.subr.mxu0 0.0
    %963 = vmatpush1.msra.mxu0 0.0
    %964 = vmatprep.subr.mxu0 0.0
    %965 = vmatpush1.msra.mxu0 0.0
    %966 = vmatprep.subr.mxu0 0.0
    %967 = vmatpush1.msra.mxu0 0.0
    %968 = vmatprep.subr.mxu0 0.0
    %969 = vmatpush1.msra.mxu0 0.0
    %970 = vmatprep.subr.mxu0 0.0
    %971 = vmatpush1.msra.mxu0 %v862
    %972 = vmatprep.subr.mxu0 0.0
    %973 = vmatpush2.msra.mxu0 0.0
    %974 = vmatprep.subr.mxu0 0.0
    %975 = vmatpush2.msra.mxu0 0.0
    %976 = vmatprep.subr.mxu0 0.0
    %977 = vmatpush2.msra.mxu0 0.0
    %978 = vmatprep.subr.mxu0 0.0
    %979 = vmatpush2.msra.mxu0 0.0
    %980 = vmatprep.subr.mxu0 0.0
    %981 = vmatpush2.msra.mxu0 0.0
    %982 = vmatprep.subr.mxu0 0.0
    %983 = vmatpush2.msra.mxu0 0.0
    %984 = vmatprep.subr.mxu0 0.0
    %985 = vmatpush2.msra.mxu0 0.0
    %986 = vmatprep.subr.mxu0 0.0
    %987 = vmatpush2.msra.mxu0 0.0
    %988 = vmatprep.subr.mxu0 0.0
    %989 = vmatpush2.msra.mxu0 0.0
    %990 = vmatprep.subr.mxu0 0.0
    %991 = vmatpush2.msra.mxu0 0.0
    %992 = vmatprep.subr.mxu0 0.0
    %993 = vmatpush2.msra.mxu0 0.0
    %994 = vmatprep.subr.mxu0 0.0
    %995 = vmatpush2.msra.mxu0 0.0
    %996 = vmatprep.subr.mxu0 0.0
    %997 = vmatpush2.msra.mxu0 0.0
    %998 = vmatprep.subr.mxu0 0.0
    %999 = vmatpush2.msra.mxu0 0.0
    %1000 = vmatprep.subr.mxu0 0.0
    %1001 = vmatpush2.msra.mxu0 0.0
    %1002 = vmatprep.subr.mxu0 0.0
    %1003 = vmatpush2.msra.mxu0 0.0
    %1004 = vmatprep.mubr.f32.mxu0 0.0
    %1005 = vmatmul.mubr.f32.gmra.mxu0 %v938
    %v1006 = vpop.f32.mrf.mxu0
    %v1007 = vadd.f32 0.0, %v1006
    %v1008 = vpop.f32.mrf.mxu0
    %1009 = vdwg.mxu0
    %v1010 = vlaneseq
    %v1011 = vshrl.u32 %v1010, 7
    %v1012 = vsub.s32 0, %v1011
    %v1013 = vrot.slane %v934, %v1012
    %v1014 = vmul.f32 %v669, %v1013
    %v1015 = vmul.f32 %v670, %v1013
    %v1016 = vmul.f32 %v671, %v1013
    %v1017 = vmul.f32 %v672, %v1013
    %v1018 = vlaneseq
    %v1019 = vshrl.u32 %v1018, 7
    %v1020 = vsub.s32 0, %v1019
    %v1021 = vrot.slane %v1007, %v1020
    %v1022 = vadd.f32 %v1014, %v1021
    %v1023 = vadd.f32 %v1015, %v1021
    %v1024 = vadd.f32 %v1016, %v1021
    %v1025 = vadd.f32 %v1017, %v1021
    %v1026 = vmax.f32 %v1022, 0.0
    %v1027 = vmax.f32 %v1023, 0.0
    %v1028 = vmax.f32 %v1024, 0.0
    %v1029 = vmax.f32 %v1025, 0.0
    %1030 = vst [vmem:[#allocation3] sm:$0xff] 0.0
    %vm1031 = vcmask 261120
    %1032 = vst.msk [vmem:[#allocation3 + $0x8] sm:$0xff] %vm1031, 0.0
    %1033 = vst [vmem:[#allocation3 + $0x10] sm:$0xff] 0.0
    %1034 = vst.msk [vmem:[#allocation3 + $0x18] sm:$0xff] %vm1031, 0.0
    %1035 = vst [vmem:[#allocation3 + $0x20] sm:$0xf] 0.0
    %vm1036 = vcmask 257024
    %1037 = vst.msk [vmem:[#allocation3 + $0x28] sm:$0xf] %vm1036, 0.0
    %1038 = vst [vmem:[#allocation3 + $0x30] sm:$0xff] 0.0
    %1039 = vst.msk [vmem:[#allocation3 + $0x38] sm:$0xff] %vm1031, 0.0
    %1040 = vst [vmem:[#allocation3 + $0x40] sm:$0xff] 0.0
    %1041 = vst.msk [vmem:[#allocation3 + $0x48] sm:$0xff] %vm1031, 0.0
    %1042 = vst [vmem:[#allocation3 + $0x50] sm:$0xf] 0.0
    %1043 = vst.msk [vmem:[#allocation3 + $0x58] sm:$0xf] %vm1036, 0.0
    %vm1048 = vcmask 1041408
    %v1049 = vrot.slane %v1026, 6
    %v1050 = vrot.slane %v1027, 6
    %v1051 = vsel %vm1048, %v1049, %v1050
    %v1052 = vrot.slane %v1028, 6
    %v1053 = vrot.slane %v1029, 6
    %v1054 = vsel %vm1048, %v1052, %v1053
    %1055 = vrot.lane.b32.xlu0 %v1049, 16
    %v1056 = vpop.permute.xlu0 %1055
    %1057 = vrot.lane.b32.xlu0 %v1051, 16
    %v1058 = vpop.permute.xlu0 %1057
    %1059 = vrot.lane.b32.xlu0 %v1050, 16
    %v1060 = vpop.permute.xlu0 %1059
    %1061 = vrot.lane.b32.xlu0 %v1052, 16
    %v1062 = vpop.permute.xlu0 %1061
    %1063 = vrot.lane.b32.xlu0 %v1054, 16
    %v1064 = vpop.permute.xlu0 %1063
    %1065 = vrot.lane.b32.xlu0 %v1053, 16
    %v1066 = vpop.permute.xlu0 %1065
    %vm1073 = vcmask 1047682
    %1074 = vst.msk [vmem:[#allocation3] sm:$0xfc] %vm1073, %v1056
    %vm1075 = vcmask 130050
    %1076 = vst.msk [vmem:[#allocation3 + $0x8] sm:$0xfc] %vm1075, %v1056
    %vm1077 = vcmask 1047680
    %1078 = vst.msk [vmem:[#allocation3 + $0x10] sm:$0xff] %vm1077, %v1058
    %vm1079 = vcmask 130048
    %1080 = vst.msk [vmem:[#allocation3 + $0x18] sm:$0xff] %vm1079, %v1058
    %vm1081 = vcmask 1041536
    %1082 = vst.msk [vmem:[#allocation3 + $0x20] sm:$0x3] %vm1081, %v1060
    %vm1083 = vcmask 123904
    %1084 = vst.msk [vmem:[#allocation3 + $0x28] sm:$0x3] %vm1083, %v1060
    %1085 = vst.msk [vmem:[#allocation3 + $0x30] sm:$0xfc] %vm1073, %v1062
    %1086 = vst.msk [vmem:[#allocation3 + $0x38] sm:$0xfc] %vm1075, %v1062
    %1087 = vst.msk [vmem:[#allocation3 + $0x40] sm:$0xff] %vm1077, %v1064
    %1088 = vst.msk [vmem:[#allocation3 + $0x48] sm:$0xff] %vm1079, %v1064
    %1089 = vst.msk [vmem:[#allocation3 + $0x50] sm:$0x3] %vm1081, %v1066
    %1090 = vst.msk [vmem:[#allocation3 + $0x58] sm:$0x3] %vm1083, %v1066
    %v1091 = vld [vmem:[#allocation3] sm:$0xff]
    %v1092 = vld [vmem:[#allocation3 + $0x8] sm:$0xff]
    %v1093 = vld [vmem:[#allocation3 + $0x10] sm:$0xff]
    %v1094 = vld [vmem:[#allocation3 + $0x18] sm:$0xff]
    %v1095 = vld [vmem:[#allocation3 + $0x30] sm:$0xff]
    %v1096 = vld [vmem:[#allocation3 + $0x38] sm:$0xff]
    %v1097 = vld [vmem:[#allocation3 + $0x40] sm:$0xff]
    %v1098 = vld [vmem:[#allocation3 + $0x48] sm:$0xff]
    %v1099 = vld [vmem:[%s6] sm:$0xff]
    %v1100 = vld [vmem:[%s6 + $0x8] sm:$0xff]
    %v1101 = vld [vmem:[%s6 + $0x10] sm:$0xff]
    %v1102 = vld [vmem:[%s6 + $0x18] sm:$0xff]
    %v1103 = vld [vmem:[%s6 + $0x20] sm:$0xff]
    %v1104 = vld [vmem:[%s6 + $0x28] sm:$0xff]
    %v1105 = vld [vmem:[%s6 + $0x30] sm:$0xff]
    %v1106 = vld [vmem:[%s6 + $0x38] sm:$0xff]
    %v1107 = vld [vmem:[%s6 + $0x40] sm:$0xff]
    %v1108 = vld [vmem:[%s6 + $0x48] sm:$0xff]
    %v1109 = vld [vmem:[%s6 + $0x50] sm:$0xff]
    %v1110 = vld [vmem:[%s6 + $0x58] sm:$0xff]
    %v1111 = vld [vmem:[%s6 + $0x60] sm:$0xff]
    %v1112 = vld [vmem:[%s6 + $0x68] sm:$0xff]
    %v1113 = vld [vmem:[%s6 + $0x70] sm:$0xff]
    %v1114 = vld [vmem:[%s6 + $0x78] sm:$0xff]
    %v1115 = vld [vmem:[%s6 + $0x80] sm:$0xff]
    %v1116 = vld [vmem:[%s6 + $0x88] sm:$0xff]
    %v1117 = vld [vmem:[%s6 + $0x90] sm:$0xff]
    %v1118 = vld [vmem:[%s6 + $0x98] sm:$0xff]
    %v1119 = vld [vmem:[#allocation3] sm:$0xfe]
    %v1120 = vld [vmem:[#allocation3 + $0x8] sm:$0xfe]
    %v1121 = vld [vmem:[#allocation3 + $0x20] sm:$0x1]
    %v1122 = vld [vmem:[#allocation3 + $0x28] sm:$0x1]
    %v1123 = vld [vmem:[#allocation3 + $0x30] sm:$0xfe]
    %v1124 = vld [vmem:[#allocation3 + $0x38] sm:$0xfe]
    %v1125 = vld [vmem:[#allocation3 + $0x50] sm:$0x1]
    %v1126 = vld [vmem:[#allocation3 + $0x58] sm:$0x1]
    %vm1139 = vcmask 1046528
    %v1140 = vrot.slane %v1119, 1
    %v1141 = vrot.slane %v1093, 1
    %v1142 = vsel %vm1139, %v1140, %v1141
    %v1143 = vrot.slane %v1120, 1
    %v1144 = vrot.slane %v1094, 1
    %v1145 = vsel %vm1139, %v1143, %v1144
    %v1146 = vrot.slane %v1121, 1
    %v1147 = vsel %vm1139, %v1141, %v1146
    %v1148 = vrot.slane %v1122, 1
    %v1149 = vsel %vm1139, %v1144, %v1148
    %v1150 = vrot.slane %v1123, 1
    %v1151 = vrot.slane %v1097, 1
    %v1152 = vsel %vm1139, %v1150, %v1151
    %v1153 = vrot.slane %v1124, 1
    %v1154 = vrot.slane %v1098, 1
    %v1155 = vsel %vm1139, %v1153, %v1154
    %v1156 = vrot.slane %v1125, 1
    %v1157 = vsel %vm1139, %v1151, %v1156
    %v1158 = vrot.slane %v1126, 1
    %v1159 = vsel %vm1139, %v1154, %v1158
    %s1164 = scalar_lea.vmem %s6, 160
    %v1165 = vld [vmem:[%s1164] sm:$0xff]
    %v1166 = vld [vmem:[%s1164 + $0x8] sm:$0xff]
    %v1167 = vld [vmem:[%s1164 + $0x10] sm:$0xff]
    %v1168 = vld [vmem:[%s1164 + $0x18] sm:$0xff]
    %v1169 = vld [vmem:[%s1164 + $0x20] sm:$0xff]
    %v1170 = vld [vmem:[%s1164 + $0x28] sm:$0xff]
    %v1171 = vld [vmem:[%s1164 + $0x30] sm:$0xff]
    %v1172 = vld [vmem:[%s1164 + $0x38] sm:$0xff]
    %v1173 = vld [vmem:[%s1164 + $0x40] sm:$0xff]
    %v1174 = vld [vmem:[%s1164 + $0x48] sm:$0xff]
    %v1175 = vld [vmem:[%s1164 + $0x50] sm:$0xff]
    %v1176 = vld [vmem:[%s1164 + $0x58] sm:$0xff]
    %v1177 = vld [vmem:[%s1164 + $0x60] sm:$0xff]
    %v1178 = vld [vmem:[%s1164 + $0x68] sm:$0xff]
    %v1179 = vld [vmem:[%s1164 + $0x70] sm:$0xff]
    %v1180 = vld [vmem:[%s1164 + $0x78] sm:$0xff]
    %v1181 = vld [vmem:[%s1164 + $0x80] sm:$0xff]
    %v1182 = vld [vmem:[%s1164 + $0x88] sm:$0xff]
    %v1183 = vld [vmem:[%s1164 + $0x90] sm:$0xff]
    %v1184 = vld [vmem:[%s1164 + $0x98] sm:$0xff]
    %v1185 = vsel %vm1031, %v1145, 0
    %v1187 = vsel %vm1031, %v1149, 0
    %v1189 = vsel %vm1031, %v1155, 0
    %v1191 = vsel %vm1031, %v1159, 0
    %1193 = vmatprep.subr.mxu0 0.0
    %1194 = vmatpush1.msra.mxu0 %v1180
    %1195 = vmatprep.subr.mxu0 0.0
    %1196 = vmatpush1.msra.mxu0 %v1179
    %1197 = vmatprep.subr.mxu0 0.0
    %1198 = vmatpush1.msra.mxu0 %v1178
    %1199 = vmatprep.subr.mxu0 0.0
    %1200 = vmatpush1.msra.mxu0 %v1177
    %1201 = vmatprep.subr.mxu0 0.0
    %1202 = vmatpush1.msra.mxu0 %v1176
    %1203 = vmatprep.subr.mxu0 0.0
    %1204 = vmatpush1.msra.mxu0 %v1175
    %1205 = vmatprep.subr.mxu0 0.0
    %1206 = vmatpush1.msra.mxu0 %v1174
    %1207 = vmatprep.subr.mxu0 0.0
    %1208 = vmatpush1.msra.mxu0 %v1173
    %1209 = vmatprep.subr.mxu0 0.0
    %1210 = vmatpush1.msra.mxu0 %v1172
    %1211 = vmatprep.subr.mxu0 0.0
    %1212 = vmatpush1.msra.mxu0 %v1171
    %1213 = vmatprep.subr.mxu0 0.0
    %1214 = vmatpush1.msra.mxu0 %v1170
    %1215 = vmatprep.subr.mxu0 0.0
    %1216 = vmatpush1.msra.mxu0 %v1169
    %1217 = vmatprep.subr.mxu0 0.0
    %1218 = vmatpush1.msra.mxu0 %v1168
    %1219 = vmatprep.subr.mxu0 0.0
    %1220 = vmatpush1.msra.mxu0 %v1167
    %1221 = vmatprep.subr.mxu0 0.0
    %1222 = vmatpush1.msra.mxu0 %v1166
    %1223 = vmatprep.subr.mxu0 0.0
    %1224 = vmatpush1.msra.mxu0 %v1165
    %1225 = vmatprep.subr.mxu0 0.0
    %1226 = vmatpush2.msra.mxu0 0.0
    %1227 = vmatprep.subr.mxu0 0.0
    %1228 = vmatpush2.msra.mxu0 0.0
    %1229 = vmatprep.subr.mxu0 0.0
    %1230 = vmatpush2.msra.mxu0 0.0
    %1231 = vmatprep.subr.mxu0 0.0
    %1232 = vmatpush2.msra.mxu0 0.0
    %1233 = vmatprep.subr.mxu0 0.0
    %1234 = vmatpush2.msra.mxu0 0.0
    %1235 = vmatprep.subr.mxu0 0.0
    %1236 = vmatpush2.msra.mxu0 0.0
    %1237 = vmatprep.subr.mxu0 0.0
    %1238 = vmatpush2.msra.mxu0 0.0
    %1239 = vmatprep.subr.mxu0 0.0
    %1240 = vmatpush2.msra.mxu0 0.0
    %1241 = vmatprep.subr.mxu0 0.0
    %1242 = vmatpush2.msra.mxu0 0.0
    %1243 = vmatprep.subr.mxu0 0.0
    %1244 = vmatpush2.msra.mxu0 0.0
    %1245 = vmatprep.subr.mxu0 0.0
    %1246 = vmatpush2.msra.mxu0 0.0
    %1247 = vmatprep.subr.mxu0 0.0
    %1248 = vmatpush2.msra.mxu0 0.0
    %1249 = vmatprep.subr.mxu0 0.0
    %1250 = vmatpush2.msra.mxu0 %v1184
    %1251 = vmatprep.subr.mxu0 0.0
    %1252 = vmatpush2.msra.mxu0 %v1183
    %1253 = vmatprep.subr.mxu0 0.0
    %1254 = vmatpush2.msra.mxu0 %v1182
    %1255 = vmatprep.subr.mxu0 0.0
    %1256 = vmatpush2.msra.mxu0 %v1181
    %1257 = vmatprep.mubr.f32.mxu0 %v1185
    %1258 = vmatmul.mubr.f32.gmra.mxu0 %v1142
    %v1259 = vpop.f32.mrf.mxu0
    %v1260 = vadd.f32 0.0, %v1259
    %v1261 = vpop.f32.mrf.mxu0
    %1262 = vmatprep.mubr.f32.mxu0 %v1187
    %1263 = vmatmul.mubr.f32.gmra.mxu0 %v1147
    %v1264 = vpop.f32.mrf.mxu0
    %v1265 = vadd.f32 0.0, %v1264
    %v1266 = vpop.f32.mrf.mxu0
    %1267 = vmatprep.mubr.f32.mxu0 %v1189
    %1268 = vmatmul.mubr.f32.gmra.mxu0 %v1152
    %v1269 = vpop.f32.mrf.mxu0
    %v1270 = vadd.f32 0.0, %v1269
    %v1271 = vpop.f32.mrf.mxu0
    %1272 = vmatprep.mubr.f32.mxu0 %v1191
    %1273 = vmatmul.mubr.f32.gmra.mxu0 %v1157
    %v1274 = vpop.f32.mrf.mxu0
    %v1275 = vadd.f32 0.0, %v1274
    %v1276 = vpop.f32.mrf.mxu0
    %1277 = vdwg.mxu0
    %v1279 = vsel %vm1031, %v1092, 0
    %v1281 = vsel %vm1031, %v1094, 0
    %v1284 = vsel %vm1031, %v1096, 0
    %v1286 = vsel %vm1031, %v1098, 0
    %1288 = vmatprep.subr.mxu0 0.0
    %1289 = vmatpush1.msra.mxu0 %v1114
    %1290 = vmatprep.subr.mxu0 0.0
    %1291 = vmatpush1.msra.mxu0 %v1113
    %1292 = vmatprep.subr.mxu0 0.0
    %1293 = vmatpush1.msra.mxu0 %v1112
    %1294 = vmatprep.subr.mxu0 0.0
    %1295 = vmatpush1.msra.mxu0 %v1111
    %1296 = vmatprep.subr.mxu0 0.0
    %1297 = vmatpush1.msra.mxu0 %v1110
    %1298 = vmatprep.subr.mxu0 0.0
    %1299 = vmatpush1.msra.mxu0 %v1109
    %1300 = vmatprep.subr.mxu0 0.0
    %1301 = vmatpush1.msra.mxu0 %v1108
    %1302 = vmatprep.subr.mxu0 0.0
    %1303 = vmatpush1.msra.mxu0 %v1107
    %1304 = vmatprep.subr.mxu0 0.0
    %1305 = vmatpush1.msra.mxu0 %v1106
    %1306 = vmatprep.subr.mxu0 0.0
    %1307 = vmatpush1.msra.mxu0 %v1105
    %1308 = vmatprep.subr.mxu0 0.0
    %1309 = vmatpush1.msra.mxu0 %v1104
    %1310 = vmatprep.subr.mxu0 0.0
    %1311 = vmatpush1.msra.mxu0 %v1103
    %1312 = vmatprep.subr.mxu0 0.0
    %1313 = vmatpush1.msra.mxu0 %v1102
    %1314 = vmatprep.subr.mxu0 0.0
    %1315 = vmatpush1.msra.mxu0 %v1101
    %1316 = vmatprep.subr.mxu0 0.0
    %1317 = vmatpush1.msra.mxu0 %v1100
    %1318 = vmatprep.subr.mxu0 0.0
    %1319 = vmatpush1.msra.mxu0 %v1099
    %1320 = vmatprep.subr.mxu0 0.0
    %1321 = vmatpush2.msra.mxu0 0.0
    %1322 = vmatprep.subr.mxu0 0.0
    %1323 = vmatpush2.msra.mxu0 0.0
    %1324 = vmatprep.subr.mxu0 0.0
    %1325 = vmatpush2.msra.mxu0 0.0
    %1326 = vmatprep.subr.mxu0 0.0
    %1327 = vmatpush2.msra.mxu0 0.0
    %1328 = vmatprep.subr.mxu0 0.0
    %1329 = vmatpush2.msra.mxu0 0.0
    %1330 = vmatprep.subr.mxu0 0.0
    %1331 = vmatpush2.msra.mxu0 0.0
    %1332 = vmatprep.subr.mxu0 0.0
    %1333 = vmatpush2.msra.mxu0 0.0
    %1334 = vmatprep.subr.mxu0 0.0
    %1335 = vmatpush2.msra.mxu0 0.0
    %1336 = vmatprep.subr.mxu0 0.0
    %1337 = vmatpush2.msra.mxu0 0.0
    %1338 = vmatprep.subr.mxu0 0.0
    %1339 = vmatpush2.msra.mxu0 0.0
    %1340 = vmatprep.subr.mxu0 0.0
    %1341 = vmatpush2.msra.mxu0 0.0
    %1342 = vmatprep.subr.mxu0 0.0
    %1343 = vmatpush2.msra.mxu0 0.0
    %1344 = vmatprep.subr.mxu0 0.0
    %1345 = vmatpush2.msra.mxu0 %v1118
    %1346 = vmatprep.subr.mxu0 0.0
    %1347 = vmatpush2.msra.mxu0 %v1117
    %1348 = vmatprep.subr.mxu0 0.0
    %1349 = vmatpush2.msra.mxu0 %v1116
    %1350 = vmatprep.subr.mxu0 0.0
    %1351 = vmatpush2.msra.mxu0 %v1115
    %1352 = vmatprep.mubr.f32.mxu0 %v1279
    %1353 = vmatmul.mubr.f32.gmra.mxu0 %v1091
    %v1354 = vpop.f32.mrf.mxu0
    %v1355 = vadd.f32 %v1260, %v1354
    %v1356 = vpop.f32.mrf.mxu0
    %1357 = vmatprep.mubr.f32.mxu0 %v1281
    %1358 = vmatmul.mubr.f32.gmra.mxu0 %v1093
    %v1359 = vpop.f32.mrf.mxu0
    %v1360 = vadd.f32 %v1265, %v1359
    %v1361 = vpop.f32.mrf.mxu0
    %1362 = vmatprep.mubr.f32.mxu0 %v1284
    %1363 = vmatmul.mubr.f32.gmra.mxu0 %v1095
    %v1364 = vpop.f32.mrf.mxu0
    %v1365 = vadd.f32 %v1270, %v1364
    %v1366 = vpop.f32.mrf.mxu0
    %1367 = vmatprep.mubr.f32.mxu0 %v1286
    %1368 = vmatmul.mubr.f32.gmra.mxu0 %v1097
    %v1369 = vpop.f32.mrf.mxu0
    %v1370 = vadd.f32 %v1275, %v1369
    %v1371 = vpop.f32.mrf.mxu0
    %1372 = vdwg.mxu0
    %v1373 = vld [vmem:[#allocation3] sm:$0xfc]
    %v1374 = vld [vmem:[#allocation3 + $0x8] sm:$0xfc]
    %v1375 = vld [vmem:[#allocation3 + $0x20] sm:$0x3]
    %v1376 = vld [vmem:[#allocation3 + $0x28] sm:$0x3]
    %v1377 = vld [vmem:[#allocation3 + $0x30] sm:$0xfc]
    %v1378 = vld [vmem:[#allocation3 + $0x38] sm:$0xfc]
    %v1379 = vld [vmem:[#allocation3 + $0x50] sm:$0x3]
    %v1380 = vld [vmem:[#allocation3 + $0x58] sm:$0x3]
    %vm1389 = vcmask 1045504
    %v1390 = vrot.slane %v1373, 2
    %v1391 = vrot.slane %v1093, 2
    %v1392 = vsel %vm1389, %v1390, %v1391
    %v1393 = vrot.slane %v1374, 2
    %v1394 = vrot.slane %v1094, 2
    %v1395 = vsel %vm1389, %v1393, %v1394
    %v1396 = vrot.slane %v1375, 2
    %v1397 = vsel %vm1389, %v1391, %v1396
    %v1398 = vrot.slane %v1376, 2
    %v1399 = vsel %vm1389, %v1394, %v1398
    %v1400 = vrot.slane %v1377, 2
    %v1401 = vrot.slane %v1097, 2
    %v1402 = vsel %vm1389, %v1400, %v1401
    %v1403 = vrot.slane %v1378, 2
    %v1404 = vrot.slane %v1098, 2
    %v1405 = vsel %vm1389, %v1403, %v1404
    %v1406 = vrot.slane %v1379, 2
    %v1407 = vsel %vm1389, %v1401, %v1406
    %v1408 = vrot.slane %v1380, 2
    %v1409 = vsel %vm1389, %v1404, %v1408
    %s1414 = scalar_lea.vmem %s6, 320
    %v1415 = vld [vmem:[%s1414] sm:$0xff]
    %v1416 = vld [vmem:[%s1414 + $0x8] sm:$0xff]
    %v1417 = vld [vmem:[%s1414 + $0x10] sm:$0xff]
    %v1418 = vld [vmem:[%s1414 + $0x18] sm:$0xff]
    %v1419 = vld [vmem:[%s1414 + $0x20] sm:$0xff]
    %v1420 = vld [vmem:[%s1414 + $0x28] sm:$0xff]
    %v1421 = vld [vmem:[%s1414 + $0x30] sm:$0xff]
    %v1422 = vld [vmem:[%s1414 + $0x38] sm:$0xff]
    %v1423 = vld [vmem:[%s1414 + $0x40] sm:$0xff]
    %v1424 = vld [vmem:[%s1414 + $0x48] sm:$0xff]
    %v1425 = vld [vmem:[%s1414 + $0x50] sm:$0xff]
    %v1426 = vld [vmem:[%s1414 + $0x58] sm:$0xff]
    %v1427 = vld [vmem:[%s1414 + $0x60] sm:$0xff]
    %v1428 = vld [vmem:[%s1414 + $0x68] sm:$0xff]
    %v1429 = vld [vmem:[%s1414 + $0x70] sm:$0xff]
    %v1430 = vld [vmem:[%s1414 + $0x78] sm:$0xff]
    %v1431 = vld [vmem:[%s1414 + $0x80] sm:$0xff]
    %v1432 = vld [vmem:[%s1414 + $0x88] sm:$0xff]
    %v1433 = vld [vmem:[%s1414 + $0x90] sm:$0xff]
    %v1434 = vld [vmem:[%s1414 + $0x98] sm:$0xff]
    %v1435 = vsel %vm1031, %v1395, 0
    %v1437 = vsel %vm1031, %v1399, 0
    %v1439 = vsel %vm1031, %v1405, 0
    %v1441 = vsel %vm1031, %v1409, 0
    %1443 = vmatprep.subr.mxu0 0.0
    %1444 = vmatpush1.msra.mxu0 %v1430
    %1445 = vmatprep.subr.mxu0 0.0
    %1446 = vmatpush1.msra.mxu0 %v1429
    %1447 = vmatprep.subr.mxu0 0.0
    %1448 = vmatpush1.msra.mxu0 %v1428
    %1449 = vmatprep.subr.mxu0 0.0
    %1450 = vmatpush1.msra.mxu0 %v1427
    %1451 = vmatprep.subr.mxu0 0.0
    %1452 = vmatpush1.msra.mxu0 %v1426
    %1453 = vmatprep.subr.mxu0 0.0
    %1454 = vmatpush1.msra.mxu0 %v1425
    %1455 = vmatprep.subr.mxu0 0.0
    %1456 = vmatpush1.msra.mxu0 %v1424
    %1457 = vmatprep.subr.mxu0 0.0
    %1458 = vmatpush1.msra.mxu0 %v1423
    %1459 = vmatprep.subr.mxu0 0.0
    %1460 = vmatpush1.msra.mxu0 %v1422
    %1461 = vmatprep.subr.mxu0 0.0
    %1462 = vmatpush1.msra.mxu0 %v1421
    %1463 = vmatprep.subr.mxu0 0.0
    %1464 = vmatpush1.msra.mxu0 %v1420
    %1465 = vmatprep.subr.mxu0 0.0
    %1466 = vmatpush1.msra.mxu0 %v1419
    %1467 = vmatprep.subr.mxu0 0.0
    %1468 = vmatpush1.msra.mxu0 %v1418
    %1469 = vmatprep.subr.mxu0 0.0
    %1470 = vmatpush1.msra.mxu0 %v1417
    %1471 = vmatprep.subr.mxu0 0.0
    %1472 = vmatpush1.msra.mxu0 %v1416
    %1473 = vmatprep.subr.mxu0 0.0
    %1474 = vmatpush1.msra.mxu0 %v1415
    %1475 = vmatprep.subr.mxu0 0.0
    %1476 = vmatpush2.msra.mxu0 0.0
    %1477 = vmatprep.subr.mxu0 0.0
    %1478 = vmatpush2.msra.mxu0 0.0
    %1479 = vmatprep.subr.mxu0 0.0
    %1480 = vmatpush2.msra.mxu0 0.0
    %1481 = vmatprep.subr.mxu0 0.0
    %1482 = vmatpush2.msra.mxu0 0.0
    %1483 = vmatprep.subr.mxu0 0.0
    %1484 = vmatpush2.msra.mxu0 0.0
    %1485 = vmatprep.subr.mxu0 0.0
    %1486 = vmatpush2.msra.mxu0 0.0
    %1487 = vmatprep.subr.mxu0 0.0
    %1488 = vmatpush2.msra.mxu0 0.0
    %1489 = vmatprep.subr.mxu0 0.0
    %1490 = vmatpush2.msra.mxu0 0.0
    %1491 = vmatprep.subr.mxu0 0.0
    %1492 = vmatpush2.msra.mxu0 0.0
    %1493 = vmatprep.subr.mxu0 0.0
    %1494 = vmatpush2.msra.mxu0 0.0
    %1495 = vmatprep.subr.mxu0 0.0
    %1496 = vmatpush2.msra.mxu0 0.0
    %1497 = vmatprep.subr.mxu0 0.0
    %1498 = vmatpush2.msra.mxu0 0.0
    %1499 = vmatprep.subr.mxu0 0.0
    %1500 = vmatpush2.msra.mxu0 %v1434
    %1501 = vmatprep.subr.mxu0 0.0
    %1502 = vmatpush2.msra.mxu0 %v1433
    %1503 = vmatprep.subr.mxu0 0.0
    %1504 = vmatpush2.msra.mxu0 %v1432
    %1505 = vmatprep.subr.mxu0 0.0
    %1506 = vmatpush2.msra.mxu0 %v1431
    %1507 = vmatprep.mubr.f32.mxu0 %v1435
    %1508 = vmatmul.mubr.f32.gmra.mxu0 %v1392
    %v1509 = vpop.f32.mrf.mxu0
    %v1510 = vadd.f32 0.0, %v1509
    %v1511 = vpop.f32.mrf.mxu0
    %1512 = vmatprep.mubr.f32.mxu0 %v1437
    %1513 = vmatmul.mubr.f32.gmra.mxu0 %v1397
    %v1514 = vpop.f32.mrf.mxu0
    %v1515 = vadd.f32 0.0, %v1514
    %v1516 = vpop.f32.mrf.mxu0
    %1517 = vmatprep.mubr.f32.mxu0 %v1439
    %1518 = vmatmul.mubr.f32.gmra.mxu0 %v1402
    %v1519 = vpop.f32.mrf.mxu0
    %v1520 = vadd.f32 0.0, %v1519
    %v1521 = vpop.f32.mrf.mxu0
    %1522 = vmatprep.mubr.f32.mxu0 %v1441
    %1523 = vmatmul.mubr.f32.gmra.mxu0 %v1407
    %v1524 = vpop.f32.mrf.mxu0
    %v1525 = vadd.f32 0.0, %v1524
    %v1526 = vpop.f32.mrf.mxu0
    %1527 = vdwg.mxu0
    %v1528 = vadd.f32 %v1355, %v1510
    %v1529 = vadd.f32 %v1360, %v1515
    %v1530 = vadd.f32 %v1365, %v1520
    %v1531 = vadd.f32 %v1370, %v1525
    %v1532 = vld [vmem:[#allocation3] sm:$0xf8]
    %v1533 = vld [vmem:[#allocation3 + $0x8] sm:$0xf8]
    %v1534 = vld [vmem:[#allocation3 + $0x20] sm:$0x7]
    %v1535 = vld [vmem:[#allocation3 + $0x28] sm:$0x7]
    %v1536 = vld [vmem:[#allocation3 + $0x30] sm:$0xf8]
    %v1537 = vld [vmem:[#allocation3 + $0x38] sm:$0xf8]
    %v1538 = vld [vmem:[#allocation3 + $0x50] sm:$0x7]
    %v1539 = vld [vmem:[#allocation3 + $0x58] sm:$0x7]
    %vm1548 = vcmask 1044480
    %v1549 = vrot.slane %v1532, 3
    %v1550 = vrot.slane %v1093, 3
    %v1551 = vsel %vm1548, %v1549, %v1550
    %v1552 = vrot.slane %v1533, 3
    %v1553 = vrot.slane %v1094, 3
    %v1554 = vsel %vm1548, %v1552, %v1553
    %v1555 = vrot.slane %v1534, 3
    %v1556 = vsel %vm1548, %v1550, %v1555
    %v1557 = vrot.slane %v1535, 3
    %v1558 = vsel %vm1548, %v1553, %v1557
    %v1559 = vrot.slane %v1536, 3
    %v1560 = vrot.slane %v1097, 3
    %v1561 = vsel %vm1548, %v1559, %v1560
    %v1562 = vrot.slane %v1537, 3
    %v1563 = vrot.slane %v1098, 3
    %v1564 = vsel %vm1548, %v1562, %v1563
    %v1565 = vrot.slane %v1538, 3
    %v1566 = vsel %vm1548, %v1560, %v1565
    %v1567 = vrot.slane %v1539, 3
    %v1568 = vsel %vm1548, %v1563, %v1567
    %s1573 = scalar_lea.vmem %s6, 480
    %v1574 = vld [vmem:[%s1573] sm:$0xff]
    %v1575 = vld [vmem:[%s1573 + $0x8] sm:$0xff]
    %v1576 = vld [vmem:[%s1573 + $0x10] sm:$0xff]
    %v1577 = vld [vmem:[%s1573 + $0x18] sm:$0xff]
    %v1578 = vld [vmem:[%s1573 + $0x20] sm:$0xff]
    %v1579 = vld [vmem:[%s1573 + $0x28] sm:$0xff]
    %v1580 = vld [vmem:[%s1573 + $0x30] sm:$0xff]
    %v1581 = vld [vmem:[%s1573 + $0x38] sm:$0xff]
    %v1582 = vld [vmem:[%s1573 + $0x40] sm:$0xff]
    %v1583 = vld [vmem:[%s1573 + $0x48] sm:$0xff]
    %v1584 = vld [vmem:[%s1573 + $0x50] sm:$0xff]
    %v1585 = vld [vmem:[%s1573 + $0x58] sm:$0xff]
    %v1586 = vld [vmem:[%s1573 + $0x60] sm:$0xff]
    %v1587 = vld [vmem:[%s1573 + $0x68] sm:$0xff]
    %v1588 = vld [vmem:[%s1573 + $0x70] sm:$0xff]
    %v1589 = vld [vmem:[%s1573 + $0x78] sm:$0xff]
    %v1590 = vld [vmem:[%s1573 + $0x80] sm:$0xff]
    %v1591 = vld [vmem:[%s1573 + $0x88] sm:$0xff]
    %v1592 = vld [vmem:[%s1573 + $0x90] sm:$0xff]
    %v1593 = vld [vmem:[%s1573 + $0x98] sm:$0xff]
    %v1594 = vsel %vm1031, %v1554, 0
    %v1596 = vsel %vm1031, %v1558, 0
    %v1598 = vsel %vm1031, %v1564, 0
    %v1600 = vsel %vm1031, %v1568, 0
    %1602 = vmatprep.subr.mxu0 0.0
    %1603 = vmatpush1.msra.mxu0 %v1589
    %1604 = vmatprep.subr.mxu0 0.0
    %1605 = vmatpush1.msra.mxu0 %v1588
    %1606 = vmatprep.subr.mxu0 0.0
    %1607 = vmatpush1.msra.mxu0 %v1587
    %1608 = vmatprep.subr.mxu0 0.0
    %1609 = vmatpush1.msra.mxu0 %v1586
    %1610 = vmatprep.subr.mxu0 0.0
    %1611 = vmatpush1.msra.mxu0 %v1585
    %1612 = vmatprep.subr.mxu0 0.0
    %1613 = vmatpush1.msra.mxu0 %v1584
    %1614 = vmatprep.subr.mxu0 0.0
    %1615 = vmatpush1.msra.mxu0 %v1583
    %1616 = vmatprep.subr.mxu0 0.0
    %1617 = vmatpush1.msra.mxu0 %v1582
    %1618 = vmatprep.subr.mxu0 0.0
    %1619 = vmatpush1.msra.mxu0 %v1581
    %1620 = vmatprep.subr.mxu0 0.0
    %1621 = vmatpush1.msra.mxu0 %v1580
    %1622 = vmatprep.subr.mxu0 0.0
    %1623 = vmatpush1.msra.mxu0 %v1579
    %1624 = vmatprep.subr.mxu0 0.0
    %1625 = vmatpush1.msra.mxu0 %v1578
    %1626 = vmatprep.subr.mxu0 0.0
    %1627 = vmatpush1.msra.mxu0 %v1577
    %1628 = vmatprep.subr.mxu0 0.0
    %1629 = vmatpush1.msra.mxu0 %v1576
    %1630 = vmatprep.subr.mxu0 0.0
    %1631 = vmatpush1.msra.mxu0 %v1575
    %1632 = vmatprep.subr.mxu0 0.0
    %1633 = vmatpush1.msra.mxu0 %v1574
    %1634 = vmatprep.subr.mxu0 0.0
    %1635 = vmatpush2.msra.mxu0 0.0
    %1636 = vmatprep.subr.mxu0 0.0
    %1637 = vmatpush2.msra.mxu0 0.0
    %1638 = vmatprep.subr.mxu0 0.0
    %1639 = vmatpush2.msra.mxu0 0.0
    %1640 = vmatprep.subr.mxu0 0.0
    %1641 = vmatpush2.msra.mxu0 0.0
    %1642 = vmatprep.subr.mxu0 0.0
    %1643 = vmatpush2.msra.mxu0 0.0
    %1644 = vmatprep.subr.mxu0 0.0
    %1645 = vmatpush2.msra.mxu0 0.0
    %1646 = vmatprep.subr.mxu0 0.0
    %1647 = vmatpush2.msra.mxu0 0.0
    %1648 = vmatprep.subr.mxu0 0.0
    %1649 = vmatpush2.msra.mxu0 0.0
    %1650 = vmatprep.subr.mxu0 0.0
    %1651 = vmatpush2.msra.mxu0 0.0
    %1652 = vmatprep.subr.mxu0 0.0
    %1653 = vmatpush2.msra.mxu0 0.0
    %1654 = vmatprep.subr.mxu0 0.0
    %1655 = vmatpush2.msra.mxu0 0.0
    %1656 = vmatprep.subr.mxu0 0.0
    %1657 = vmatpush2.msra.mxu0 0.0
    %1658 = vmatprep.subr.mxu0 0.0
    %1659 = vmatpush2.msra.mxu0 %v1593
    %1660 = vmatprep.subr.mxu0 0.0
    %1661 = vmatpush2.msra.mxu0 %v1592
    %1662 = vmatprep.subr.mxu0 0.0
    %1663 = vmatpush2.msra.mxu0 %v1591
    %1664 = vmatprep.subr.mxu0 0.0
    %1665 = vmatpush2.msra.mxu0 %v1590
    %1666 = vmatprep.mubr.f32.mxu0 %v1594
    %1667 = vmatmul.mubr.f32.gmra.mxu0 %v1551
    %v1668 = vpop.f32.mrf.mxu0
    %v1669 = vadd.f32 0.0, %v1668
    %v1670 = vpop.f32.mrf.mxu0
    %1671 = vmatprep.mubr.f32.mxu0 %v1596
    %1672 = vmatmul.mubr.f32.gmra.mxu0 %v1556
    %v1673 = vpop.f32.mrf.mxu0
    %v1674 = vadd.f32 0.0, %v1673
    %v1675 = vpop.f32.mrf.mxu0
    %1676 = vmatprep.mubr.f32.mxu0 %v1598
    %1677 = vmatmul.mubr.f32.gmra.mxu0 %v1561
    %v1678 = vpop.f32.mrf.mxu0
    %v1679 = vadd.f32 0.0, %v1678
    %v1680 = vpop.f32.mrf.mxu0
    %1681 = vmatprep.mubr.f32.mxu0 %v1600
    %1682 = vmatmul.mubr.f32.gmra.mxu0 %v1566
    %v1683 = vpop.f32.mrf.mxu0
    %v1684 = vadd.f32 0.0, %v1683
    %v1685 = vpop.f32.mrf.mxu0
    %1686 = vdwg.mxu0
    %v1687 = vadd.f32 %v1528, %v1669
    %v1688 = vadd.f32 %v1529, %v1674
    %v1689 = vadd.f32 %v1530, %v1679
    %v1690 = vadd.f32 %v1531, %v1684
    %v1691 = vld [vmem:[#allocation3] sm:$0xf0]
    %v1692 = vld [vmem:[#allocation3 + $0x8] sm:$0xf0]
    %v1693 = vld [vmem:[#allocation3 + $0x20] sm:$0xf]
    %v1694 = vld [vmem:[#allocation3 + $0x28] sm:$0xf]
    %v1695 = vld [vmem:[#allocation3 + $0x30] sm:$0xf0]
    %v1696 = vld [vmem:[#allocation3 + $0x38] sm:$0xf0]
    %v1697 = vld [vmem:[#allocation3 + $0x50] sm:$0xf]
    %v1698 = vld [vmem:[#allocation3 + $0x58] sm:$0xf]
    %v1707 = vrot.slane %v1691, 4
    %v1708 = vrot.slane %v1093, 4
    %v1709 = vsel %vm133, %v1707, %v1708
    %v1710 = vrot.slane %v1692, 4
    %v1711 = vrot.slane %v1094, 4
    %v1712 = vsel %vm133, %v1710, %v1711
    %v1713 = vrot.slane %v1693, 4
    %v1714 = vsel %vm133, %v1708, %v1713
    %v1715 = vrot.slane %v1694, 4
    %v1716 = vsel %vm133, %v1711, %v1715
    %v1717 = vrot.slane %v1695, 4
    %v1718 = vrot.slane %v1097, 4
    %v1719 = vsel %vm133, %v1717, %v1718
    %v1720 = vrot.slane %v1696, 4
    %v1721 = vrot.slane %v1098, 4
    %v1722 = vsel %vm133, %v1720, %v1721
    %v1723 = vrot.slane %v1697, 4
    %v1724 = vsel %vm133, %v1718, %v1723
    %v1725 = vrot.slane %v1698, 4
    %v1726 = vsel %vm133, %v1721, %v1725
    %s1731 = scalar_lea.vmem %s6, 640
    %v1732 = vld [vmem:[%s1731] sm:$0xff]
    %v1733 = vld [vmem:[%s1731 + $0x8] sm:$0xff]
    %v1734 = vld [vmem:[%s1731 + $0x10] sm:$0xff]
    %v1735 = vld [vmem:[%s1731 + $0x18] sm:$0xff]
    %v1736 = vld [vmem:[%s1731 + $0x20] sm:$0xff]
    %v1737 = vld [vmem:[%s1731 + $0x28] sm:$0xff]
    %v1738 = vld [vmem:[%s1731 + $0x30] sm:$0xff]
    %v1739 = vld [vmem:[%s1731 + $0x38] sm:$0xff]
    %v1740 = vld [vmem:[%s1731 + $0x40] sm:$0xff]
    %v1741 = vld [vmem:[%s1731 + $0x48] sm:$0xff]
    %v1742 = vld [vmem:[%s1731 + $0x50] sm:$0xff]
    %v1743 = vld [vmem:[%s1731 + $0x58] sm:$0xff]
    %v1744 = vld [vmem:[%s1731 + $0x60] sm:$0xff]
    %v1745 = vld [vmem:[%s1731 + $0x68] sm:$0xff]
    %v1746 = vld [vmem:[%s1731 + $0x70] sm:$0xff]
    %v1747 = vld [vmem:[%s1731 + $0x78] sm:$0xff]
    %v1748 = vld [vmem:[%s1731 + $0x80] sm:$0xff]
    %v1749 = vld [vmem:[%s1731 + $0x88] sm:$0xff]
    %v1750 = vld [vmem:[%s1731 + $0x90] sm:$0xff]
    %v1751 = vld [vmem:[%s1731 + $0x98] sm:$0xff]
    %v1752 = vsel %vm1031, %v1712, 0
    %v1754 = vsel %vm1031, %v1716, 0
    %v1756 = vsel %vm1031, %v1722, 0
    %v1758 = vsel %vm1031, %v1726, 0
    %1760 = vmatprep.subr.mxu0 0.0
    %1761 = vmatpush1.msra.mxu0 %v1747
    %1762 = vmatprep.subr.mxu0 0.0
    %1763 = vmatpush1.msra.mxu0 %v1746
    %1764 = vmatprep.subr.mxu0 0.0
    %1765 = vmatpush1.msra.mxu0 %v1745
    %1766 = vmatprep.subr.mxu0 0.0
    %1767 = vmatpush1.msra.mxu0 %v1744
    %1768 = vmatprep.subr.mxu0 0.0
    %1769 = vmatpush1.msra.mxu0 %v1743
    %1770 = vmatprep.subr.mxu0 0.0
    %1771 = vmatpush1.msra.mxu0 %v1742
    %1772 = vmatprep.subr.mxu0 0.0
    %1773 = vmatpush1.msra.mxu0 %v1741
    %1774 = vmatprep.subr.mxu0 0.0
    %1775 = vmatpush1.msra.mxu0 %v1740
    %1776 = vmatprep.subr.mxu0 0.0
    %1777 = vmatpush1.msra.mxu0 %v1739
    %1778 = vmatprep.subr.mxu0 0.0
    %1779 = vmatpush1.msra.mxu0 %v1738
    %1780 = vmatprep.subr.mxu0 0.0
    %1781 = vmatpush1.msra.mxu0 %v1737
    %1782 = vmatprep.subr.mxu0 0.0
    %1783 = vmatpush1.msra.mxu0 %v1736
    %1784 = vmatprep.subr.mxu0 0.0
    %1785 = vmatpush1.msra.mxu0 %v1735
    %1786 = vmatprep.subr.mxu0 0.0
    %1787 = vmatpush1.msra.mxu0 %v1734
    %1788 = vmatprep.subr.mxu0 0.0
    %1789 = vmatpush1.msra.mxu0 %v1733
    %1790 = vmatprep.subr.mxu0 0.0
    %1791 = vmatpush1.msra.mxu0 %v1732
    %1792 = vmatprep.subr.mxu0 0.0
    %1793 = vmatpush2.msra.mxu0 0.0
    %1794 = vmatprep.subr.mxu0 0.0
    %1795 = vmatpush2.msra.mxu0 0.0
    %1796 = vmatprep.subr.mxu0 0.0
    %1797 = vmatpush2.msra.mxu0 0.0
    %1798 = vmatprep.subr.mxu0 0.0
    %1799 = vmatpush2.msra.mxu0 0.0
    %1800 = vmatprep.subr.mxu0 0.0
    %1801 = vmatpush2.msra.mxu0 0.0
    %1802 = vmatprep.subr.mxu0 0.0
    %1803 = vmatpush2.msra.mxu0 0.0
    %1804 = vmatprep.subr.mxu0 0.0
    %1805 = vmatpush2.msra.mxu0 0.0
    %1806 = vmatprep.subr.mxu0 0.0
    %1807 = vmatpush2.msra.mxu0 0.0
    %1808 = vmatprep.subr.mxu0 0.0
    %1809 = vmatpush2.msra.mxu0 0.0
    %1810 = vmatprep.subr.mxu0 0.0
    %1811 = vmatpush2.msra.mxu0 0.0
    %1812 = vmatprep.subr.mxu0 0.0
    %1813 = vmatpush2.msra.mxu0 0.0
    %1814 = vmatprep.subr.mxu0 0.0
    %1815 = vmatpush2.msra.mxu0 0.0
    %1816 = vmatprep.subr.mxu0 0.0
    %1817 = vmatpush2.msra.mxu0 %v1751
    %1818 = vmatprep.subr.mxu0 0.0
    %1819 = vmatpush2.msra.mxu0 %v1750
    %1820 = vmatprep.subr.mxu0 0.0
    %1821 = vmatpush2.msra.mxu0 %v1749
    %1822 = vmatprep.subr.mxu0 0.0
    %1823 = vmatpush2.msra.mxu0 %v1748
    %1824 = vmatprep.mubr.f32.mxu0 %v1752
    %1825 = vmatmul.mubr.f32.gmra.mxu0 %v1709
    %v1826 = vpop.f32.mrf.mxu0
    %v1827 = vadd.f32 0.0, %v1826
    %v1828 = vpop.f32.mrf.mxu0
    %1829 = vmatprep.mubr.f32.mxu0 %v1754
    %1830 = vmatmul.mubr.f32.gmra.mxu0 %v1714
    %v1831 = vpop.f32.mrf.mxu0
    %v1832 = vadd.f32 0.0, %v1831
    %v1833 = vpop.f32.mrf.mxu0
    %1834 = vmatprep.mubr.f32.mxu0 %v1756
    %1835 = vmatmul.mubr.f32.gmra.mxu0 %v1719
    %v1836 = vpop.f32.mrf.mxu0
    %v1837 = vadd.f32 0.0, %v1836
    %v1838 = vpop.f32.mrf.mxu0
    %1839 = vmatprep.mubr.f32.mxu0 %v1758
    %1840 = vmatmul.mubr.f32.gmra.mxu0 %v1724
    %v1841 = vpop.f32.mrf.mxu0
    %v1842 = vadd.f32 0.0, %v1841
    %v1843 = vpop.f32.mrf.mxu0
    %1844 = vdwg.mxu0
    %v1845 = vadd.f32 %v1687, %v1827
    %v1846 = vadd.f32 %v1688, %v1832
    %v1847 = vadd.f32 %v1689, %v1837
    %v1848 = vadd.f32 %v1690, %v1842
    %v1849 = vadd.f32 %v1845, %v1846
    %v1850 = vadd.f32 %v1849, %v1847
    %v1851 = vadd.f32 %v1850, %v1848
    %v1852 = vrot.slane %v1851, 4
    %v1853 = vadd.f32 %v1851, %v1852
    %v1854 = vrot.slane %v1853, 2
    %v1855 = vadd.f32 %v1853, %v1854
    %v1856 = vrot.slane %v1855, 1
    %v1857 = vadd.f32 %v1855, %v1856
    %v1858 = vmul.f32 %v1845, %v1845
    %v1859 = vmul.f32 %v1846, %v1846
    %v1860 = vmul.f32 %v1847, %v1847
    %v1861 = vmul.f32 %v1848, %v1848
    %v1862 = vadd.f32 %v1858, %v1859
    %v1863 = vadd.f32 %v1862, %v1860
    %v1864 = vadd.f32 %v1863, %v1861
    %v1865 = vrot.slane %v1864, 4
    %v1866 = vadd.f32 %v1864, %v1865
    %v1867 = vrot.slane %v1866, 2
    %v1868 = vadd.f32 %v1866, %v1867
    %v1869 = vrot.slane %v1868, 1
    %v1870 = vadd.f32 %v1868, %v1869
    %v1871 = vld [vmem:[%s7] sm:$0xff]
    %v1872 = vld [vmem:[%s7 + $0x8] sm:$0xff]
    %v1873 = vld [vmem:[%s7 + $0x10] sm:$0xff]
    %v1874 = vld [vmem:[%s7 + $0x18] sm:$0xff]
    %v1875 = vld [vmem:[%s7 + $0x20] sm:$0xff]
    %v1876 = vld [vmem:[%s7 + $0x28] sm:$0xff]
    %v1877 = vld [vmem:[%s7 + $0x30] sm:$0xff]
    %v1878 = vld [vmem:[%s7 + $0x38] sm:$0xff]
    %v1879 = vld [vmem:[%s7 + $0x40] sm:$0xff]
    %v1880 = vld [vmem:[%s7 + $0x48] sm:$0xff]
    %v1881 = vld [vmem:[%s7 + $0x50] sm:$0xff]
    %v1882 = vld [vmem:[%s7 + $0x58] sm:$0xff]
    %v1883 = vld [vmem:[%s7 + $0x60] sm:$0xff]
    %v1884 = vld [vmem:[%s7 + $0x68] sm:$0xff]
    %v1885 = vld [vmem:[%s7 + $0x70] sm:$0xff]
    %v1886 = vld [vmem:[%s7 + $0x78] sm:$0xff]
    %1887 = vmatprep.subr.mxu0 0.0
    %1888 = vmatpush1.msra.mxu0 %v1886
    %1889 = vmatprep.subr.mxu0 0.0
    %1890 = vmatpush1.msra.mxu0 %v1885
    %1891 = vmatprep.subr.mxu0 0.0
    %1892 = vmatpush1.msra.mxu0 %v1884
    %1893 = vmatprep.subr.mxu0 0.0
    %1894 = vmatpush1.msra.mxu0 %v1883
    %1895 = vmatprep.subr.mxu0 0.0
    %1896 = vmatpush1.msra.mxu0 %v1882
    %1897 = vmatprep.subr.mxu0 0.0
    %1898 = vmatpush1.msra.mxu0 %v1881
    %1899 = vmatprep.subr.mxu0 0.0
    %1900 = vmatpush1.msra.mxu0 %v1880
    %1901 = vmatprep.subr.mxu0 0.0
    %1902 = vmatpush1.msra.mxu0 %v1879
    %1903 = vmatprep.subr.mxu0 0.0
    %1904 = vmatpush1.msra.mxu0 %v1878
    %1905 = vmatprep.subr.mxu0 0.0
    %1906 = vmatpush1.msra.mxu0 %v1877
    %1907 = vmatprep.subr.mxu0 0.0
    %1908 = vmatpush1.msra.mxu0 %v1876
    %1909 = vmatprep.subr.mxu0 0.0
    %1910 = vmatpush1.msra.mxu0 %v1875
    %1911 = vmatprep.subr.mxu0 0.0
    %1912 = vmatpush1.msra.mxu0 %v1874
    %1913 = vmatprep.subr.mxu0 0.0
    %1914 = vmatpush1.msra.mxu0 %v1873
    %1915 = vmatprep.subr.mxu0 0.0
    %1916 = vmatpush1.msra.mxu0 %v1872
    %1917 = vmatprep.subr.mxu0 0.0
    %1918 = vmatpush1.msra.mxu0 %v1871
    %1919 = vmatprep.subr.mxu0 0.0
    %1920 = vmatpush2.msra.mxu0 0.0
    %1921 = vmatprep.subr.mxu0 0.0
    %1922 = vmatpush2.msra.mxu0 0.0
    %1923 = vmatprep.subr.mxu0 0.0
    %1924 = vmatpush2.msra.mxu0 0.0
    %1925 = vmatprep.subr.mxu0 0.0
    %1926 = vmatpush2.msra.mxu0 0.0
    %1927 = vmatprep.subr.mxu0 0.0
    %1928 = vmatpush2.msra.mxu0 0.0
    %1929 = vmatprep.subr.mxu0 0.0
    %1930 = vmatpush2.msra.mxu0 0.0
    %1931 = vmatprep.subr.mxu0 0.0
    %1932 = vmatpush2.msra.mxu0 0.0
    %1933 = vmatprep.subr.mxu0 0.0
    %1934 = vmatpush2.msra.mxu0 0.0
    %1935 = vmatprep.subr.mxu0 0.0
    %1936 = vmatpush2.msra.mxu0 0.0
    %1937 = vmatprep.subr.mxu0 0.0
    %1938 = vmatpush2.msra.mxu0 0.0
    %1939 = vmatprep.subr.mxu0 0.0
    %1940 = vmatpush2.msra.mxu0 0.0
    %1941 = vmatprep.subr.mxu0 0.0
    %1942 = vmatpush2.msra.mxu0 0.0
    %1943 = vmatprep.subr.mxu0 0.0
    %1944 = vmatpush2.msra.mxu0 0.0
    %1945 = vmatprep.subr.mxu0 0.0
    %1946 = vmatpush2.msra.mxu0 0.0
    %1947 = vmatprep.subr.mxu0 0.0
    %1948 = vmatpush2.msra.mxu0 0.0
    %1949 = vmatprep.subr.mxu0 0.0
    %1950 = vmatpush2.msra.mxu0 0.0
    %1951 = vmatprep.mubr.f32.mxu0 0.0
    %1952 = vmatmul.mubr.f32.gmra.mxu0 %v1857
    %v1953 = vpop.f32.mrf.mxu0
    %v1954 = vadd.f32 0.0, %v1953
    %v1955 = vpop.f32.mrf.mxu0
    %1956 = vdwg.mxu0
    %v1957 = vmul.f32 %v1954, 0.001953125
    %1958 = vmatprep.subr.mxu0 0.0
    %1959 = vmatpush1.msra.mxu0 %v1886
    %1960 = vmatprep.subr.mxu0 0.0
    %1961 = vmatpush1.msra.mxu0 %v1885
    %1962 = vmatprep.subr.mxu0 0.0
    %1963 = vmatpush1.msra.mxu0 %v1884
    %1964 = vmatprep.subr.mxu0 0.0
    %1965 = vmatpush1.msra.mxu0 %v1883
    %1966 = vmatprep.subr.mxu0 0.0
    %1967 = vmatpush1.msra.mxu0 %v1882
    %1968 = vmatprep.subr.mxu0 0.0
    %1969 = vmatpush1.msra.mxu0 %v1881
    %1970 = vmatprep.subr.mxu0 0.0
    %1971 = vmatpush1.msra.mxu0 %v1880
    %1972 = vmatprep.subr.mxu0 0.0
    %1973 = vmatpush1.msra.mxu0 %v1879
    %1974 = vmatprep.subr.mxu0 0.0
    %1975 = vmatpush1.msra.mxu0 %v1878
    %1976 = vmatprep.subr.mxu0 0.0
    %1977 = vmatpush1.msra.mxu0 %v1877
    %1978 = vmatprep.subr.mxu0 0.0
    %1979 = vmatpush1.msra.mxu0 %v1876
    %1980 = vmatprep.subr.mxu0 0.0
    %1981 = vmatpush1.msra.mxu0 %v1875
    %1982 = vmatprep.subr.mxu0 0.0
    %1983 = vmatpush1.msra.mxu0 %v1874
    %1984 = vmatprep.subr.mxu0 0.0
    %1985 = vmatpush1.msra.mxu0 %v1873
    %1986 = vmatprep.subr.mxu0 0.0
    %1987 = vmatpush1.msra.mxu0 %v1872
    %1988 = vmatprep.subr.mxu0 0.0
    %1989 = vmatpush1.msra.mxu0 %v1871
    %1990 = vmatprep.subr.mxu0 0.0
    %1991 = vmatpush2.msra.mxu0 0.0
    %1992 = vmatprep.subr.mxu0 0.0
    %1993 = vmatpush2.msra.mxu0 0.0
    %1994 = vmatprep.subr.mxu0 0.0
    %1995 = vmatpush2.msra.mxu0 0.0
    %1996 = vmatprep.subr.mxu0 0.0
    %1997 = vmatpush2.msra.mxu0 0.0
    %1998 = vmatprep.subr.mxu0 0.0
    %1999 = vmatpush2.msra.mxu0 0.0
    %2000 = vmatprep.subr.mxu0 0.0
    %2001 = vmatpush2.msra.mxu0 0.0
    %2002 = vmatprep.subr.mxu0 0.0
    %2003 = vmatpush2.msra.mxu0 0.0
    %2004 = vmatprep.subr.mxu0 0.0
    %2005 = vmatpush2.msra.mxu0 0.0
    %2006 = vmatprep.subr.mxu0 0.0
    %2007 = vmatpush2.msra.mxu0 0.0
    %2008 = vmatprep.subr.mxu0 0.0
    %2009 = vmatpush2.msra.mxu0 0.0
    %2010 = vmatprep.subr.mxu0 0.0
    %2011 = vmatpush2.msra.mxu0 0.0
    %2012 = vmatprep.subr.mxu0 0.0
    %2013 = vmatpush2.msra.mxu0 0.0
    %2014 = vmatprep.subr.mxu0 0.0
    %2015 = vmatpush2.msra.mxu0 0.0
    %2016 = vmatprep.subr.mxu0 0.0
    %2017 = vmatpush2.msra.mxu0 0.0
    %2018 = vmatprep.subr.mxu0 0.0
    %2019 = vmatpush2.msra.mxu0 0.0
    %2020 = vmatprep.subr.mxu0 0.0
    %2021 = vmatpush2.msra.mxu0 0.0
    %2022 = vmatprep.mubr.f32.mxu0 0.0
    %2023 = vmatmul.mubr.f32.gmra.mxu0 %v1870
    %v2024 = vpop.f32.mrf.mxu0
    %v2025 = vadd.f32 0.0, %v2024
    %v2026 = vpop.f32.mrf.mxu0
    %2027 = vdwg.mxu0
    %v2028 = vmul.f32 %v2025, 0.001953125
    %v2029 = vmul.f32 %v1957, %v1957
    %v2030 = vsub.f32 %v2028, %v2029
    %v2031 = vld [vmem:[%s9] sm:$0x1]
    %v2032 = vadd.f32 %v2030, 1e-05
    %v2033 = vrsqrt.pop %v2032
    %v2034 = vmul.f32 %v2031, %v2033
    %v2035 = vld [vmem:[%s10] sm:$0x1]
    %v2036 = vmul.f32 %v1957, %v2034
    %v2037 = vsub.f32 %v2035, %v2036
    %v2038 = vld [vmem:[%s8] sm:$0xff]
    %v2040 = vsel %vm863, %v2034, 0
    %2042 = vmatprep.subr.mxu0 0.0
    %2043 = vmatpush1.msra.mxu0 0.0
    %2044 = vmatprep.subr.mxu0 0.0
    %2045 = vmatpush1.msra.mxu0 0.0
    %2046 = vmatprep.subr.mxu0 0.0
    %2047 = vmatpush1.msra.mxu0 0.0
    %2048 = vmatprep.subr.mxu0 0.0
    %2049 = vmatpush1.msra.mxu0 0.0
    %2050 = vmatprep.subr.mxu0 0.0
    %2051 = vmatpush1.msra.mxu0 0.0
    %2052 = vmatprep.subr.mxu0 0.0
    %2053 = vmatpush1.msra.mxu0 0.0
    %2054 = vmatprep.subr.mxu0 0.0
    %2055 = vmatpush1.msra.mxu0 0.0
    %2056 = vmatprep.subr.mxu0 0.0
    %2057 = vmatpush1.msra.mxu0 0.0
    %2058 = vmatprep.subr.mxu0 0.0
    %2059 = vmatpush1.msra.mxu0 0.0
    %2060 = vmatprep.subr.mxu0 0.0
    %2061 = vmatpush1.msra.mxu0 0.0
    %2062 = vmatprep.subr.mxu0 0.0
    %2063 = vmatpush1.msra.mxu0 0.0
    %2064 = vmatprep.subr.mxu0 0.0
    %2065 = vmatpush1.msra.mxu0 0.0
    %2066 = vmatprep.subr.mxu0 0.0
    %2067 = vmatpush1.msra.mxu0 0.0
    %2068 = vmatprep.subr.mxu0 0.0
    %2069 = vmatpush1.msra.mxu0 0.0
    %2070 = vmatprep.subr.mxu0 0.0
    %2071 = vmatpush1.msra.mxu0 0.0
    %2072 = vmatprep.subr.mxu0 0.0
    %2073 = vmatpush1.msra.mxu0 %v2038
    %2074 = vmatprep.subr.mxu0 0.0
    %2075 = vmatpush2.msra.mxu0 0.0
    %2076 = vmatprep.subr.mxu0 0.0
    %2077 = vmatpush2.msra.mxu0 0.0
    %2078 = vmatprep.subr.mxu0 0.0
    %2079 = vmatpush2.msra.mxu0 0.0
    %2080 = vmatprep.subr.mxu0 0.0
    %2081 = vmatpush2.msra.mxu0 0.0
    %2082 = vmatprep.subr.mxu0 0.0
    %2083 = vmatpush2.msra.mxu0 0.0
    %2084 = vmatprep.subr.mxu0 0.0
    %2085 = vmatpush2.msra.mxu0 0.0
    %2086 = vmatprep.subr.mxu0 0.0
    %2087 = vmatpush2.msra.mxu0 0.0
    %2088 = vmatprep.subr.mxu0 0.0
    %2089 = vmatpush2.msra.mxu0 0.0
    %2090 = vmatprep.subr.mxu0 0.0
    %2091 = vmatpush2.msra.mxu0 0.0
    %2092 = vmatprep.subr.mxu0 0.0
    %2093 = vmatpush2.msra.mxu0 0.0
    %2094 = vmatprep.subr.mxu0 0.0
    %2095 = vmatpush2.msra.mxu0 0.0
    %2096 = vmatprep.subr.mxu0 0.0
    %2097 = vmatpush2.msra.mxu0 0.0
    %2098 = vmatprep.subr.mxu0 0.0
    %2099 = vmatpush2.msra.mxu0 0.0
    %2100 = vmatprep.subr.mxu0 0.0
    %2101 = vmatpush2.msra.mxu0 0.0
    %2102 = vmatprep.subr.mxu0 0.0
    %2103 = vmatpush2.msra.mxu0 0.0
    %2104 = vmatprep.subr.mxu0 0.0
    %2105 = vmatpush2.msra.mxu0 0.0
    %2106 = vmatprep.mubr.f32.mxu0 0.0
    %2107 = vmatmul.mubr.f32.gmra.mxu0 %v2040
    %v2108 = vpop.f32.mrf.mxu0
    %v2109 = vadd.f32 0.0, %v2108
    %v2110 = vpop.f32.mrf.mxu0
    %2111 = vdwg.mxu0
    %v2113 = vsel %vm863, %v2037, 0
    %2115 = vmatprep.subr.mxu0 0.0
    %2116 = vmatpush1.msra.mxu0 0.0
    %2117 = vmatprep.subr.mxu0 0.0
    %2118 = vmatpush1.msra.mxu0 0.0
    %2119 = vmatprep.subr.mxu0 0.0
    %2120 = vmatpush1.msra.mxu0 0.0
    %2121 = vmatprep.subr.mxu0 0.0
    %2122 = vmatpush1.msra.mxu0 0.0
    %2123 = vmatprep.subr.mxu0 0.0
    %2124 = vmatpush1.msra.mxu0 0.0
    %2125 = vmatprep.subr.mxu0 0.0
    %2126 = vmatpush1.msra.mxu0 0.0
    %2127 = vmatprep.subr.mxu0 0.0
    %2128 = vmatpush1.msra.mxu0 0.0
    %2129 = vmatprep.subr.mxu0 0.0
    %2130 = vmatpush1.msra.mxu0 0.0
    %2131 = vmatprep.subr.mxu0 0.0
    %2132 = vmatpush1.msra.mxu0 0.0
    %2133 = vmatprep.subr.mxu0 0.0
    %2134 = vmatpush1.msra.mxu0 0.0
    %2135 = vmatprep.subr.mxu0 0.0
    %2136 = vmatpush1.msra.mxu0 0.0
    %2137 = vmatprep.subr.mxu0 0.0
    %2138 = vmatpush1.msra.mxu0 0.0
    %2139 = vmatprep.subr.mxu0 0.0
    %2140 = vmatpush1.msra.mxu0 0.0
    %2141 = vmatprep.subr.mxu0 0.0
    %2142 = vmatpush1.msra.mxu0 0.0
    %2143 = vmatprep.subr.mxu0 0.0
    %2144 = vmatpush1.msra.mxu0 0.0
    %2145 = vmatprep.subr.mxu0 0.0
    %2146 = vmatpush1.msra.mxu0 %v2038
    %2147 = vmatprep.subr.mxu0 0.0
    %2148 = vmatpush2.msra.mxu0 0.0
    %2149 = vmatprep.subr.mxu0 0.0
    %2150 = vmatpush2.msra.mxu0 0.0
    %2151 = vmatprep.subr.mxu0 0.0
    %2152 = vmatpush2.msra.mxu0 0.0
    %2153 = vmatprep.subr.mxu0 0.0
    %2154 = vmatpush2.msra.mxu0 0.0
    %2155 = vmatprep.subr.mxu0 0.0
    %2156 = vmatpush2.msra.mxu0 0.0
    %2157 = vmatprep.subr.mxu0 0.0
    %2158 = vmatpush2.msra.mxu0 0.0
    %2159 = vmatprep.subr.mxu0 0.0
    %2160 = vmatpush2.msra.mxu0 0.0
    %2161 = vmatprep.subr.mxu0 0.0
    %2162 = vmatpush2.msra.mxu0 0.0
    %2163 = vmatprep.subr.mxu0 0.0
    %2164 = vmatpush2.msra.mxu0 0.0
    %2165 = vmatprep.subr.mxu0 0.0
    %2166 = vmatpush2.msra.mxu0 0.0
    %2167 = vmatprep.subr.mxu0 0.0
    %2168 = vmatpush2.msra.mxu0 0.0
    %2169 = vmatprep.subr.mxu0 0.0
    %2170 = vmatpush2.msra.mxu0 0.0
    %2171 = vmatprep.subr.mxu0 0.0
    %2172 = vmatpush2.msra.mxu0 0.0
    %2173 = vmatprep.subr.mxu0 0.0
    %2174 = vmatpush2.msra.mxu0 0.0
    %2175 = vmatprep.subr.mxu0 0.0
    %2176 = vmatpush2.msra.mxu0 0.0
    %2177 = vmatprep.subr.mxu0 0.0
    %2178 = vmatpush2.msra.mxu0 0.0
    %2179 = vmatprep.mubr.f32.mxu0 0.0
    %2180 = vmatmul.mubr.f32.gmra.mxu0 %v2113
    %v2181 = vpop.f32.mrf.mxu0
    %v2182 = vadd.f32 0.0, %v2181
    %v2183 = vpop.f32.mrf.mxu0
    %2184 = vdwg.mxu0
    %v2185 = vlaneseq
    %v2186 = vshrl.u32 %v2185, 7
    %v2187 = vsub.s32 0, %v2186
    %v2188 = vrot.slane %v2109, %v2187
    %v2189 = vmul.f32 %v1845, %v2188
    %v2190 = vmul.f32 %v1846, %v2188
    %v2191 = vmul.f32 %v1847, %v2188
    %v2192 = vmul.f32 %v1848, %v2188
    %v2193 = vlaneseq
    %v2194 = vshrl.u32 %v2193, 7
    %v2195 = vsub.s32 0, %v2194
    %v2196 = vrot.slane %v2182, %v2195
    %v2197 = vadd.f32 %v2189, %v2196
    %v2198 = vadd.f32 %v2190, %v2196
    %v2199 = vadd.f32 %v2191, %v2196
    %v2200 = vadd.f32 %v2192, %v2196
    %v2201 = vmax.f32 %v2197, 0.0
    %v2202 = vmax.f32 %v2198, 0.0
    %v2203 = vmax.f32 %v2199, 0.0
    %v2204 = vmax.f32 %v2200, 0.0
    %2205 = vst [vmem:[#allocation4] sm:$0xff] 0.0
    %2206 = vst.msk [vmem:[#allocation4 + $0x8] sm:$0xff] %vm1031, 0.0
    %2207 = vst [vmem:[#allocation4 + $0x10] sm:$0xff] 0.0
    %2208 = vst.msk [vmem:[#allocation4 + $0x18] sm:$0xff] %vm1031, 0.0
    %2209 = vst [vmem:[#allocation4 + $0x20] sm:$0xf] 0.0
    %2210 = vst.msk [vmem:[#allocation4 + $0x28] sm:$0xf] %vm1036, 0.0
    %2211 = vst [vmem:[#allocation4 + $0x30] sm:$0xff] 0.0
    %2212 = vst.msk [vmem:[#allocation4 + $0x38] sm:$0xff] %vm1031, 0.0
    %2213 = vst [vmem:[#allocation4 + $0x40] sm:$0xff] 0.0
    %2214 = vst.msk [vmem:[#allocation4 + $0x48] sm:$0xff] %vm1031, 0.0
    %2215 = vst [vmem:[#allocation4 + $0x50] sm:$0xf] 0.0
    %2216 = vst.msk [vmem:[#allocation4 + $0x58] sm:$0xf] %vm1036, 0.0
    %v2221 = vrot.slane %v2201, 6
    %v2222 = vrot.slane %v2202, 6
    %v2223 = vsel %vm1048, %v2221, %v2222
    %v2224 = vrot.slane %v2203, 6
    %v2225 = vrot.slane %v2204, 6
    %v2226 = vsel %vm1048, %v2224, %v2225
    %2227 = vrot.lane.b32.xlu0 %v2221, 16
    %v2228 = vpop.permute.xlu0 %2227
    %2229 = vrot.lane.b32.xlu0 %v2223, 16
    %v2230 = vpop.permute.xlu0 %2229
    %2231 = vrot.lane.b32.xlu0 %v2222, 16
    %v2232 = vpop.permute.xlu0 %2231
    %2233 = vrot.lane.b32.xlu0 %v2224, 16
    %v2234 = vpop.permute.xlu0 %2233
    %2235 = vrot.lane.b32.xlu0 %v2226, 16
    %v2236 = vpop.permute.xlu0 %2235
    %2237 = vrot.lane.b32.xlu0 %v2225, 16
    %v2238 = vpop.permute.xlu0 %2237
    %2245 = vst.msk [vmem:[#allocation4] sm:$0xfc] %vm1073, %v2228
    %2246 = vst.msk [vmem:[#allocation4 + $0x8] sm:$0xfc] %vm1075, %v2228
    %2247 = vst.msk [vmem:[#allocation4 + $0x10] sm:$0xff] %vm1077, %v2230
    %2248 = vst.msk [vmem:[#allocation4 + $0x18] sm:$0xff] %vm1079, %v2230
    %2249 = vst.msk [vmem:[#allocation4 + $0x20] sm:$0x3] %vm1081, %v2232
    %2250 = vst.msk [vmem:[#allocation4 + $0x28] sm:$0x3] %vm1083, %v2232
    %2251 = vst.msk [vmem:[#allocation4 + $0x30] sm:$0xfc] %vm1073, %v2234
    %2252 = vst.msk [vmem:[#allocation4 + $0x38] sm:$0xfc] %vm1075, %v2234
    %2253 = vst.msk [vmem:[#allocation4 + $0x40] sm:$0xff] %vm1077, %v2236
    %2254 = vst.msk [vmem:[#allocation4 + $0x48] sm:$0xff] %vm1079, %v2236
    %2255 = vst.msk [vmem:[#allocation4 + $0x50] sm:$0x3] %vm1081, %v2238
    %2256 = vst.msk [vmem:[#allocation4 + $0x58] sm:$0x3] %vm1083, %v2238
    %v2257 = vld [vmem:[#allocation4] sm:$0xff]
    %v2258 = vld [vmem:[#allocation4 + $0x8] sm:$0xff]
    %v2259 = vld [vmem:[#allocation4 + $0x10] sm:$0xff]
    %v2260 = vld [vmem:[#allocation4 + $0x18] sm:$0xff]
    %v2261 = vld [vmem:[#allocation4 + $0x30] sm:$0xff]
    %v2262 = vld [vmem:[#allocation4 + $0x38] sm:$0xff]
    %v2263 = vld [vmem:[#allocation4 + $0x40] sm:$0xff]
    %v2264 = vld [vmem:[#allocation4 + $0x48] sm:$0xff]
    %v2265 = vld [vmem:[%s11] sm:$0xff]
    %v2266 = vld [vmem:[%s11 + $0x8] sm:$0xff]
    %v2267 = vld [vmem:[%s11 + $0x10] sm:$0xff]
    %v2268 = vld [vmem:[%s11 + $0x18] sm:$0xff]
    %v2269 = vld [vmem:[%s11 + $0x20] sm:$0xff]
    %v2270 = vld [vmem:[%s11 + $0x28] sm:$0xff]
    %v2271 = vld [vmem:[%s11 + $0x30] sm:$0xff]
    %v2272 = vld [vmem:[%s11 + $0x38] sm:$0xff]
    %v2273 = vld [vmem:[%s11 + $0x40] sm:$0xff]
    %v2274 = vld [vmem:[%s11 + $0x48] sm:$0xff]
    %v2275 = vld [vmem:[%s11 + $0x50] sm:$0xff]
    %v2276 = vld [vmem:[%s11 + $0x58] sm:$0xff]
    %v2277 = vld [vmem:[%s11 + $0x60] sm:$0xff]
    %v2278 = vld [vmem:[%s11 + $0x68] sm:$0xff]
    %v2279 = vld [vmem:[%s11 + $0x70] sm:$0xff]
    %v2280 = vld [vmem:[%s11 + $0x78] sm:$0xff]
    %v2281 = vld [vmem:[%s11 + $0x80] sm:$0xff]
    %v2282 = vld [vmem:[%s11 + $0x88] sm:$0xff]
    %v2283 = vld [vmem:[%s11 + $0x90] sm:$0xff]
    %v2284 = vld [vmem:[%s11 + $0x98] sm:$0xff]
    %v2285 = vld [vmem:[%s11 + $0xa0] sm:$0xff]
    %v2286 = vld [vmem:[%s11 + $0xa8] sm:$0xff]
    %v2287 = vld [vmem:[%s11 + $0xb0] sm:$0xff]
    %v2288 = vld [vmem:[%s11 + $0xb8] sm:$0xff]
    %v2289 = vld [vmem:[%s11 + $0xc0] sm:$0xff]
    %v2290 = vld [vmem:[%s11 + $0xc8] sm:$0xff]
    %v2291 = vld [vmem:[%s11 + $0xd0] sm:$0xff]
    %v2292 = vld [vmem:[%s11 + $0xd8] sm:$0xff]
    %v2293 = vld [vmem:[%s11 + $0xe0] sm:$0xff]
    %v2294 = vld [vmem:[%s11 + $0xe8] sm:$0xff]
    %v2295 = vld [vmem:[%s11 + $0xf0] sm:$0xff]
    %v2296 = vld [vmem:[%s11 + $0xf8] sm:$0xff]
    %v2297 = vld [vmem:[%s11 + $0x100] sm:$0xff]
    %v2298 = vld [vmem:[%s11 + $0x108] sm:$0xff]
    %v2299 = vld [vmem:[%s11 + $0x110] sm:$0xff]
    %v2300 = vld [vmem:[%s11 + $0x118] sm:$0xff]
    %v2301 = vld [vmem:[%s11 + $0x120] sm:$0xff]
    %v2302 = vld [vmem:[%s11 + $0x128] sm:$0xff]
    %v2303 = vld [vmem:[%s11 + $0x130] sm:$0xff]
    %v2304 = vld [vmem:[%s11 + $0x138] sm:$0xff]
    %v2305 = vld [vmem:[#allocation4] sm:$0xfe]
    %v2306 = vld [vmem:[#allocation4 + $0x8] sm:$0xfe]
    %v2307 = vld [vmem:[#allocation4 + $0x20] sm:$0x1]
    %v2308 = vld [vmem:[#allocation4 + $0x28] sm:$0x1]
    %v2309 = vld [vmem:[#allocation4 + $0x30] sm:$0xfe]
    %v2310 = vld [vmem:[#allocation4 + $0x38] sm:$0xfe]
    %v2311 = vld [vmem:[#allocation4 + $0x50] sm:$0x1]
    %v2312 = vld [vmem:[#allocation4 + $0x58] sm:$0x1]
    %v2325 = vrot.slane %v2305, 1
    %v2326 = vrot.slane %v2259, 1
    %v2327 = vsel %vm1139, %v2325, %v2326
    %v2328 = vrot.slane %v2306, 1
    %v2329 = vrot.slane %v2260, 1
    %v2330 = vsel %vm1139, %v2328, %v2329
    %v2331 = vrot.slane %v2307, 1
    %v2332 = vsel %vm1139, %v2326, %v2331
    %v2333 = vrot.slane %v2308, 1
    %v2334 = vsel %vm1139, %v2329, %v2333
    %v2335 = vrot.slane %v2309, 1
    %v2336 = vrot.slane %v2263, 1
    %v2337 = vsel %vm1139, %v2335, %v2336
    %v2338 = vrot.slane %v2310, 1
    %v2339 = vrot.slane %v2264, 1
    %v2340 = vsel %vm1139, %v2338, %v2339
    %v2341 = vrot.slane %v2311, 1
    %v2342 = vsel %vm1139, %v2336, %v2341
    %v2343 = vrot.slane %v2312, 1
    %v2344 = vsel %vm1139, %v2339, %v2343
    %s2349 = scalar_lea.vmem %s11, 320
    %v2350 = vld [vmem:[%s2349] sm:$0xff]
    %v2351 = vld [vmem:[%s2349 + $0x8] sm:$0xff]
    %v2352 = vld [vmem:[%s2349 + $0x10] sm:$0xff]
    %v2353 = vld [vmem:[%s2349 + $0x18] sm:$0xff]
    %v2354 = vld [vmem:[%s2349 + $0x20] sm:$0xff]
    %v2355 = vld [vmem:[%s2349 + $0x28] sm:$0xff]
    %v2356 = vld [vmem:[%s2349 + $0x30] sm:$0xff]
    %v2357 = vld [vmem:[%s2349 + $0x38] sm:$0xff]
    %v2358 = vld [vmem:[%s2349 + $0x40] sm:$0xff]
    %v2359 = vld [vmem:[%s2349 + $0x48] sm:$0xff]
    %v2360 = vld [vmem:[%s2349 + $0x50] sm:$0xff]
    %v2361 = vld [vmem:[%s2349 + $0x58] sm:$0xff]
    %v2362 = vld [vmem:[%s2349 + $0x60] sm:$0xff]
    %v2363 = vld [vmem:[%s2349 + $0x68] sm:$0xff]
    %v2364 = vld [vmem:[%s2349 + $0x70] sm:$0xff]
    %v2365 = vld [vmem:[%s2349 + $0x78] sm:$0xff]
    %v2366 = vld [vmem:[%s2349 + $0x80] sm:$0xff]
    %v2367 = vld [vmem:[%s2349 + $0x88] sm:$0xff]
    %v2368 = vld [vmem:[%s2349 + $0x90] sm:$0xff]
    %v2369 = vld [vmem:[%s2349 + $0x98] sm:$0xff]
    %v2370 = vld [vmem:[%s2349 + $0xa0] sm:$0xff]
    %v2371 = vld [vmem:[%s2349 + $0xa8] sm:$0xff]
    %v2372 = vld [vmem:[%s2349 + $0xb0] sm:$0xff]
    %v2373 = vld [vmem:[%s2349 + $0xb8] sm:$0xff]
    %v2374 = vld [vmem:[%s2349 + $0xc0] sm:$0xff]
    %v2375 = vld [vmem:[%s2349 + $0xc8] sm:$0xff]
    %v2376 = vld [vmem:[%s2349 + $0xd0] sm:$0xff]
    %v2377 = vld [vmem:[%s2349 + $0xd8] sm:$0xff]
    %v2378 = vld [vmem:[%s2349 + $0xe0] sm:$0xff]
    %v2379 = vld [vmem:[%s2349 + $0xe8] sm:$0xff]
    %v2380 = vld [vmem:[%s2349 + $0xf0] sm:$0xff]
    %v2381 = vld [vmem:[%s2349 + $0xf8] sm:$0xff]
    %v2382 = vld [vmem:[%s2349 + $0x100] sm:$0xff]
    %v2383 = vld [vmem:[%s2349 + $0x108] sm:$0xff]
    %v2384 = vld [vmem:[%s2349 + $0x110] sm:$0xff]
    %v2385 = vld [vmem:[%s2349 + $0x118] sm:$0xff]
    %v2386 = vld [vmem:[%s2349 + $0x120] sm:$0xff]
    %v2387 = vld [vmem:[%s2349 + $0x128] sm:$0xff]
    %v2388 = vld [vmem:[%s2349 + $0x130] sm:$0xff]
    %v2389 = vld [vmem:[%s2349 + $0x138] sm:$0xff]
    %v2390 = vsel %vm1031, %v2330, 0
    %v2392 = vsel %vm1031, %v2334, 0
    %v2394 = vsel %vm1031, %v2340, 0
    %v2396 = vsel %vm1031, %v2344, 0
    %2398 = vmatprep.subr.mxu0 %v2381
    %2399 = vmatpush1.msra.mxu0 %v2380
    %2400 = vmatprep.subr.mxu0 %v2379
    %2401 = vmatpush1.msra.mxu0 %v2378
    %2402 = vmatprep.subr.mxu0 %v2377
    %2403 = vmatpush1.msra.mxu0 %v2376
    %2404 = vmatprep.subr.mxu0 %v2375
    %2405 = vmatpush1.msra.mxu0 %v2374
    %2406 = vmatprep.subr.mxu0 %v2373
    %2407 = vmatpush1.msra.mxu0 %v2372
    %2408 = vmatprep.subr.mxu0 %v2371
    %2409 = vmatpush1.msra.mxu0 %v2370
    %2410 = vmatprep.subr.mxu0 %v2369
    %2411 = vmatpush1.msra.mxu0 %v2368
    %2412 = vmatprep.subr.mxu0 %v2367
    %2413 = vmatpush1.msra.mxu0 %v2366
    %2414 = vmatprep.subr.mxu0 %v2365
    %2415 = vmatpush1.msra.mxu0 %v2364
    %2416 = vmatprep.subr.mxu0 %v2363
    %2417 = vmatpush1.msra.mxu0 %v2362
    %2418 = vmatprep.subr.mxu0 %v2361
    %2419 = vmatpush1.msra.mxu0 %v2360
    %2420 = vmatprep.subr.mxu0 %v2359
    %2421 = vmatpush1.msra.mxu0 %v2358
    %2422 = vmatprep.subr.mxu0 %v2357
    %2423 = vmatpush1.msra.mxu0 %v2356
    %2424 = vmatprep.subr.mxu0 %v2355
    %2425 = vmatpush1.msra.mxu0 %v2354
    %2426 = vmatprep.subr.mxu0 %v2353
    %2427 = vmatpush1.msra.mxu0 %v2352
    %2428 = vmatprep.subr.mxu0 %v2351
    %2429 = vmatpush1.msra.mxu0 %v2350
    %2430 = vmatprep.subr.mxu0 0.0
    %2431 = vmatpush2.msra.mxu0 0.0
    %2432 = vmatprep.subr.mxu0 0.0
    %2433 = vmatpush2.msra.mxu0 0.0
    %2434 = vmatprep.subr.mxu0 0.0
    %2435 = vmatpush2.msra.mxu0 0.0
    %2436 = vmatprep.subr.mxu0 0.0
    %2437 = vmatpush2.msra.mxu0 0.0
    %2438 = vmatprep.subr.mxu0 0.0
    %2439 = vmatpush2.msra.mxu0 0.0
    %2440 = vmatprep.subr.mxu0 0.0
    %2441 = vmatpush2.msra.mxu0 0.0
    %2442 = vmatprep.subr.mxu0 0.0
    %2443 = vmatpush2.msra.mxu0 0.0
    %2444 = vmatprep.subr.mxu0 0.0
    %2445 = vmatpush2.msra.mxu0 0.0
    %2446 = vmatprep.subr.mxu0 0.0
    %2447 = vmatpush2.msra.mxu0 0.0
    %2448 = vmatprep.subr.mxu0 0.0
    %2449 = vmatpush2.msra.mxu0 0.0
    %2450 = vmatprep.subr.mxu0 0.0
    %2451 = vmatpush2.msra.mxu0 0.0
    %2452 = vmatprep.subr.mxu0 0.0
    %2453 = vmatpush2.msra.mxu0 0.0
    %2454 = vmatprep.subr.mxu0 %v2389
    %2455 = vmatpush2.msra.mxu0 %v2388
    %2456 = vmatprep.subr.mxu0 %v2387
    %2457 = vmatpush2.msra.mxu0 %v2386
    %2458 = vmatprep.subr.mxu0 %v2385
    %2459 = vmatpush2.msra.mxu0 %v2384
    %2460 = vmatprep.subr.mxu0 %v2383
    %2461 = vmatpush2.msra.mxu0 %v2382
    %2462 = vmatprep.mubr.f32.mxu0 %v2390
    %2463 = vmatmul.mubr.f32.gmra.mxu0 %v2327
    %v2464 = vpop.f32.mrf.mxu0
    %v2465 = vadd.f32 0.0, %v2464
    %v2466 = vpop.f32.mrf.mxu0
    %v2467 = vadd.f32 0.0, %v2466
    %2468 = vmatprep.mubr.f32.mxu0 %v2392
    %2469 = vmatmul.mubr.f32.gmra.mxu0 %v2332
    %v2470 = vpop.f32.mrf.mxu0
    %v2471 = vadd.f32 0.0, %v2470
    %v2472 = vpop.f32.mrf.mxu0
    %v2473 = vadd.f32 0.0, %v2472
    %2474 = vmatprep.mubr.f32.mxu0 %v2394
    %2475 = vmatmul.mubr.f32.gmra.mxu0 %v2337
    %v2476 = vpop.f32.mrf.mxu0
    %v2477 = vadd.f32 0.0, %v2476
    %v2478 = vpop.f32.mrf.mxu0
    %v2479 = vadd.f32 0.0, %v2478
    %2480 = vmatprep.mubr.f32.mxu0 %v2396
    %2481 = vmatmul.mubr.f32.gmra.mxu0 %v2342
    %v2482 = vpop.f32.mrf.mxu0
    %v2483 = vadd.f32 0.0, %v2482
    %v2484 = vpop.f32.mrf.mxu0
    %v2485 = vadd.f32 0.0, %v2484
    %2486 = vdwg.mxu0
    %v2488 = vsel %vm1031, %v2258, 0
    %v2490 = vsel %vm1031, %v2260, 0
    %v2493 = vsel %vm1031, %v2262, 0
    %v2495 = vsel %vm1031, %v2264, 0
    %2497 = vmatprep.subr.mxu0 %v2296
    %2498 = vmatpush1.msra.mxu0 %v2295
    %2499 = vmatprep.subr.mxu0 %v2294
    %2500 = vmatpush1.msra.mxu0 %v2293
    %2501 = vmatprep.subr.mxu0 %v2292
    %2502 = vmatpush1.msra.mxu0 %v2291
    %2503 = vmatprep.subr.mxu0 %v2290
    %2504 = vmatpush1.msra.mxu0 %v2289
    %2505 = vmatprep.subr.mxu0 %v2288
    %2506 = vmatpush1.msra.mxu0 %v2287
    %2507 = vmatprep.subr.mxu0 %v2286
    %2508 = vmatpush1.msra.mxu0 %v2285
    %2509 = vmatprep.subr.mxu0 %v2284
    %2510 = vmatpush1.msra.mxu0 %v2283
    %2511 = vmatprep.subr.mxu0 %v2282
    %2512 = vmatpush1.msra.mxu0 %v2281
    %2513 = vmatprep.subr.mxu0 %v2280
    %2514 = vmatpush1.msra.mxu0 %v2279
    %2515 = vmatprep.subr.mxu0 %v2278
    %2516 = vmatpush1.msra.mxu0 %v2277
    %2517 = vmatprep.subr.mxu0 %v2276
    %2518 = vmatpush1.msra.mxu0 %v2275
    %2519 = vmatprep.subr.mxu0 %v2274
    %2520 = vmatpush1.msra.mxu0 %v2273
    %2521 = vmatprep.subr.mxu0 %v2272
    %2522 = vmatpush1.msra.mxu0 %v2271
    %2523 = vmatprep.subr.mxu0 %v2270
    %2524 = vmatpush1.msra.mxu0 %v2269
    %2525 = vmatprep.subr.mxu0 %v2268
    %2526 = vmatpush1.msra.mxu0 %v2267
    %2527 = vmatprep.subr.mxu0 %v2266
    %2528 = vmatpush1.msra.mxu0 %v2265
    %2529 = vmatprep.subr.mxu0 0.0
    %2530 = vmatpush2.msra.mxu0 0.0
    %2531 = vmatprep.subr.mxu0 0.0
    %2532 = vmatpush2.msra.mxu0 0.0
    %2533 = vmatprep.subr.mxu0 0.0
    %2534 = vmatpush2.msra.mxu0 0.0
    %2535 = vmatprep.subr.mxu0 0.0
    %2536 = vmatpush2.msra.mxu0 0.0
    %2537 = vmatprep.subr.mxu0 0.0
    %2538 = vmatpush2.msra.mxu0 0.0
    %2539 = vmatprep.subr.mxu0 0.0
    %2540 = vmatpush2.msra.mxu0 0.0
    %2541 = vmatprep.subr.mxu0 0.0
    %2542 = vmatpush2.msra.mxu0 0.0
    %2543 = vmatprep.subr.mxu0 0.0
    %2544 = vmatpush2.msra.mxu0 0.0
    %2545 = vmatprep.subr.mxu0 0.0
    %2546 = vmatpush2.msra.mxu0 0.0
    %2547 = vmatprep.subr.mxu0 0.0
    %2548 = vmatpush2.msra.mxu0 0.0
    %2549 = vmatprep.subr.mxu0 0.0
    %2550 = vmatpush2.msra.mxu0 0.0
    %2551 = vmatprep.subr.mxu0 0.0
    %2552 = vmatpush2.msra.mxu0 0.0
    %2553 = vmatprep.subr.mxu0 %v2304
    %2554 = vmatpush2.msra.mxu0 %v2303
    %2555 = vmatprep.subr.mxu0 %v2302
    %2556 = vmatpush2.msra.mxu0 %v2301
    %2557 = vmatprep.subr.mxu0 %v2300
    %2558 = vmatpush2.msra.mxu0 %v2299
    %2559 = vmatprep.subr.mxu0 %v2298
    %2560 = vmatpush2.msra.mxu0 %v2297
    %2561 = vmatprep.mubr.f32.mxu0 %v2488
    %2562 = vmatmul.mubr.f32.gmra.mxu0 %v2257
    %v2563 = vpop.f32.mrf.mxu0
    %v2564 = vadd.f32 %v2465, %v2563
    %v2565 = vpop.f32.mrf.mxu0
    %v2566 = vadd.f32 %v2467, %v2565
    %2567 = vmatprep.mubr.f32.mxu0 %v2490
    %2568 = vmatmul.mubr.f32.gmra.mxu0 %v2259
    %v2569 = vpop.f32.mrf.mxu0
    %v2570 = vadd.f32 %v2471, %v2569
    %v2571 = vpop.f32.mrf.mxu0
    %v2572 = vadd.f32 %v2473, %v2571
    %2573 = vmatprep.mubr.f32.mxu0 %v2493
    %2574 = vmatmul.mubr.f32.gmra.mxu0 %v2261
    %v2575 = vpop.f32.mrf.mxu0
    %v2576 = vadd.f32 %v2477, %v2575
    %v2577 = vpop.f32.mrf.mxu0
    %v2578 = vadd.f32 %v2479, %v2577
    %2579 = vmatprep.mubr.f32.mxu0 %v2495
    %2580 = vmatmul.mubr.f32.gmra.mxu0 %v2263
    %v2581 = vpop.f32.mrf.mxu0
    %v2582 = vadd.f32 %v2483, %v2581
    %v2583 = vpop.f32.mrf.mxu0
    %v2584 = vadd.f32 %v2485, %v2583
    %2585 = vdwg.mxu0
    %v2586 = vld [vmem:[#allocation4] sm:$0xfc]
    %v2587 = vld [vmem:[#allocation4 + $0x8] sm:$0xfc]
    %v2588 = vld [vmem:[#allocation4 + $0x20] sm:$0x3]
    %v2589 = vld [vmem:[#allocation4 + $0x28] sm:$0x3]
    %v2590 = vld [vmem:[#allocation4 + $0x30] sm:$0xfc]
    %v2591 = vld [vmem:[#allocation4 + $0x38] sm:$0xfc]
    %v2592 = vld [vmem:[#allocation4 + $0x50] sm:$0x3]
    %v2593 = vld [vmem:[#allocation4 + $0x58] sm:$0x3]
    %v2602 = vrot.slane %v2586, 2
    %v2603 = vrot.slane %v2259, 2
    %v2604 = vsel %vm1389, %v2602, %v2603
    %v2605 = vrot.slane %v2587, 2
    %v2606 = vrot.slane %v2260, 2
    %v2607 = vsel %vm1389, %v2605, %v2606
    %v2608 = vrot.slane %v2588, 2
    %v2609 = vsel %vm1389, %v2603, %v2608
    %v2610 = vrot.slane %v2589, 2
    %v2611 = vsel %vm1389, %v2606, %v2610
    %v2612 = vrot.slane %v2590, 2
    %v2613 = vrot.slane %v2263, 2
    %v2614 = vsel %vm1389, %v2612, %v2613
    %v2615 = vrot.slane %v2591, 2
    %v2616 = vrot.slane %v2264, 2
    %v2617 = vsel %vm1389, %v2615, %v2616
    %v2618 = vrot.slane %v2592, 2
    %v2619 = vsel %vm1389, %v2613, %v2618
    %v2620 = vrot.slane %v2593, 2
    %v2621 = vsel %vm1389, %v2616, %v2620
    %s2626 = scalar_lea.vmem %s11, 640
    %v2627 = vld [vmem:[%s2626] sm:$0xff]
    %v2628 = vld [vmem:[%s2626 + $0x8] sm:$0xff]
    %v2629 = vld [vmem:[%s2626 + $0x10] sm:$0xff]
    %v2630 = vld [vmem:[%s2626 + $0x18] sm:$0xff]
    %v2631 = vld [vmem:[%s2626 + $0x20] sm:$0xff]
    %v2632 = vld [vmem:[%s2626 + $0x28] sm:$0xff]
    %v2633 = vld [vmem:[%s2626 + $0x30] sm:$0xff]
    %v2634 = vld [vmem:[%s2626 + $0x38] sm:$0xff]
    %v2635 = vld [vmem:[%s2626 + $0x40] sm:$0xff]
    %v2636 = vld [vmem:[%s2626 + $0x48] sm:$0xff]
    %v2637 = vld [vmem:[%s2626 + $0x50] sm:$0xff]
    %v2638 = vld [vmem:[%s2626 + $0x58] sm:$0xff]
    %v2639 = vld [vmem:[%s2626 + $0x60] sm:$0xff]
    %v2640 = vld [vmem:[%s2626 + $0x68] sm:$0xff]
    %v2641 = vld [vmem:[%s2626 + $0x70] sm:$0xff]
    %v2642 = vld [vmem:[%s2626 + $0x78] sm:$0xff]
    %v2643 = vld [vmem:[%s2626 + $0x80] sm:$0xff]
    %v2644 = vld [vmem:[%s2626 + $0x88] sm:$0xff]
    %v2645 = vld [vmem:[%s2626 + $0x90] sm:$0xff]
    %v2646 = vld [vmem:[%s2626 + $0x98] sm:$0xff]
    %v2647 = vld [vmem:[%s2626 + $0xa0] sm:$0xff]
    %v2648 = vld [vmem:[%s2626 + $0xa8] sm:$0xff]
    %v2649 = vld [vmem:[%s2626 + $0xb0] sm:$0xff]
    %v2650 = vld [vmem:[%s2626 + $0xb8] sm:$0xff]
    %v2651 = vld [vmem:[%s2626 + $0xc0] sm:$0xff]
    %v2652 = vld [vmem:[%s2626 + $0xc8] sm:$0xff]
    %v2653 = vld [vmem:[%s2626 + $0xd0] sm:$0xff]
    %v2654 = vld [vmem:[%s2626 + $0xd8] sm:$0xff]
    %v2655 = vld [vmem:[%s2626 + $0xe0] sm:$0xff]
    %v2656 = vld [vmem:[%s2626 + $0xe8] sm:$0xff]
    %v2657 = vld [vmem:[%s2626 + $0xf0] sm:$0xff]
    %v2658 = vld [vmem:[%s2626 + $0xf8] sm:$0xff]
    %v2659 = vld [vmem:[%s2626 + $0x100] sm:$0xff]
    %v2660 = vld [vmem:[%s2626 + $0x108] sm:$0xff]
    %v2661 = vld [vmem:[%s2626 + $0x110] sm:$0xff]
    %v2662 = vld [vmem:[%s2626 + $0x118] sm:$0xff]
    %v2663 = vld [vmem:[%s2626 + $0x120] sm:$0xff]
    %v2664 = vld [vmem:[%s2626 + $0x128] sm:$0xff]
    %v2665 = vld [vmem:[%s2626 + $0x130] sm:$0xff]
    %v2666 = vld [vmem:[%s2626 + $0x138] sm:$0xff]
    %v2667 = vsel %vm1031, %v2607, 0
    %v2669 = vsel %vm1031, %v2611, 0
    %v2671 = vsel %vm1031, %v2617, 0
    %v2673 = vsel %vm1031, %v2621, 0
    %2675 = vmatprep.subr.mxu0 %v2658
    %2676 = vmatpush1.msra.mxu0 %v2657
    %2677 = vmatprep.subr.mxu0 %v2656
    %2678 = vmatpush1.msra.mxu0 %v2655
    %2679 = vmatprep.subr.mxu0 %v2654
    %2680 = vmatpush1.msra.mxu0 %v2653
    %2681 = vmatprep.subr.mxu0 %v2652
    %2682 = vmatpush1.msra.mxu0 %v2651
    %2683 = vmatprep.subr.mxu0 %v2650
    %2684 = vmatpush1.msra.mxu0 %v2649
    %2685 = vmatprep.subr.mxu0 %v2648
    %2686 = vmatpush1.msra.mxu0 %v2647
    %2687 = vmatprep.subr.mxu0 %v2646
    %2688 = vmatpush1.msra.mxu0 %v2645
    %2689 = vmatprep.subr.mxu0 %v2644
    %2690 = vmatpush1.msra.mxu0 %v2643
    %2691 = vmatprep.subr.mxu0 %v2642
    %2692 = vmatpush1.msra.mxu0 %v2641
    %2693 = vmatprep.subr.mxu0 %v2640
    %2694 = vmatpush1.msra.mxu0 %v2639
    %2695 = vmatprep.subr.mxu0 %v2638
    %2696 = vmatpush1.msra.mxu0 %v2637
    %2697 = vmatprep.subr.mxu0 %v2636
    %2698 = vmatpush1.msra.mxu0 %v2635
    %2699 = vmatprep.subr.mxu0 %v2634
    %2700 = vmatpush1.msra.mxu0 %v2633
    %2701 = vmatprep.subr.mxu0 %v2632
    %2702 = vmatpush1.msra.mxu0 %v2631
    %2703 = vmatprep.subr.mxu0 %v2630
    %2704 = vmatpush1.msra.mxu0 %v2629
    %2705 = vmatprep.subr.mxu0 %v2628
    %2706 = vmatpush1.msra.mxu0 %v2627
    %2707 = vmatprep.subr.mxu0 0.0
    %2708 = vmatpush2.msra.mxu0 0.0
    %2709 = vmatprep.subr.mxu0 0.0
    %2710 = vmatpush2.msra.mxu0 0.0
    %2711 = vmatprep.subr.mxu0 0.0
    %2712 = vmatpush2.msra.mxu0 0.0
    %2713 = vmatprep.subr.mxu0 0.0
    %2714 = vmatpush2.msra.mxu0 0.0
    %2715 = vmatprep.subr.mxu0 0.0
    %2716 = vmatpush2.msra.mxu0 0.0
    %2717 = vmatprep.subr.mxu0 0.0
    %2718 = vmatpush2.msra.mxu0 0.0
    %2719 = vmatprep.subr.mxu0 0.0
    %2720 = vmatpush2.msra.mxu0 0.0
    %2721 = vmatprep.subr.mxu0 0.0
    %2722 = vmatpush2.msra.mxu0 0.0
    %2723 = vmatprep.subr.mxu0 0.0
    %2724 = vmatpush2.msra.mxu0 0.0
    %2725 = vmatprep.subr.mxu0 0.0
    %2726 = vmatpush2.msra.mxu0 0.0
    %2727 = vmatprep.subr.mxu0 0.0
    %2728 = vmatpush2.msra.mxu0 0.0
    %2729 = vmatprep.subr.mxu0 0.0
    %2730 = vmatpush2.msra.mxu0 0.0
    %2731 = vmatprep.subr.mxu0 %v2666
    %2732 = vmatpush2.msra.mxu0 %v2665
    %2733 = vmatprep.subr.mxu0 %v2664
    %2734 = vmatpush2.msra.mxu0 %v2663
    %2735 = vmatprep.subr.mxu0 %v2662
    %2736 = vmatpush2.msra.mxu0 %v2661
    %2737 = vmatprep.subr.mxu0 %v2660
    %2738 = vmatpush2.msra.mxu0 %v2659
    %2739 = vmatprep.mubr.f32.mxu0 %v2667
    %2740 = vmatmul.mubr.f32.gmra.mxu0 %v2604
    %v2741 = vpop.f32.mrf.mxu0
    %v2742 = vadd.f32 0.0, %v2741
    %v2743 = vpop.f32.mrf.mxu0
    %v2744 = vadd.f32 0.0, %v2743
    %2745 = vmatprep.mubr.f32.mxu0 %v2669
    %2746 = vmatmul.mubr.f32.gmra.mxu0 %v2609
    %v2747 = vpop.f32.mrf.mxu0
    %v2748 = vadd.f32 0.0, %v2747
    %v2749 = vpop.f32.mrf.mxu0
    %v2750 = vadd.f32 0.0, %v2749
    %2751 = vmatprep.mubr.f32.mxu0 %v2671
    %2752 = vmatmul.mubr.f32.gmra.mxu0 %v2614
    %v2753 = vpop.f32.mrf.mxu0
    %v2754 = vadd.f32 0.0, %v2753
    %v2755 = vpop.f32.mrf.mxu0
    %v2756 = vadd.f32 0.0, %v2755
    %2757 = vmatprep.mubr.f32.mxu0 %v2673
    %2758 = vmatmul.mubr.f32.gmra.mxu0 %v2619
    %v2759 = vpop.f32.mrf.mxu0
    %v2760 = vadd.f32 0.0, %v2759
    %v2761 = vpop.f32.mrf.mxu0
    %v2762 = vadd.f32 0.0, %v2761
    %2763 = vdwg.mxu0
    %v2764 = vadd.f32 %v2564, %v2742
    %v2765 = vadd.f32 %v2566, %v2744
    %v2766 = vadd.f32 %v2570, %v2748
    %v2767 = vadd.f32 %v2572, %v2750
    %v2768 = vadd.f32 %v2576, %v2754
    %v2769 = vadd.f32 %v2578, %v2756
    %v2770 = vadd.f32 %v2582, %v2760
    %v2771 = vadd.f32 %v2584, %v2762
    %v2772 = vld [vmem:[#allocation4] sm:$0xf8]
    %v2773 = vld [vmem:[#allocation4 + $0x8] sm:$0xf8]
    %v2774 = vld [vmem:[#allocation4 + $0x20] sm:$0x7]
    %v2775 = vld [vmem:[#allocation4 + $0x28] sm:$0x7]
    %v2776 = vld [vmem:[#allocation4 + $0x30] sm:$0xf8]
    %v2777 = vld [vmem:[#allocation4 + $0x38] sm:$0xf8]
    %v2778 = vld [vmem:[#allocation4 + $0x50] sm:$0x7]
    %v2779 = vld [vmem:[#allocation4 + $0x58] sm:$0x7]
    %v2788 = vrot.slane %v2772, 3
    %v2789 = vrot.slane %v2259, 3
    %v2790 = vsel %vm1548, %v2788, %v2789
    %v2791 = vrot.slane %v2773, 3
    %v2792 = vrot.slane %v2260, 3
    %v2793 = vsel %vm1548, %v2791, %v2792
    %v2794 = vrot.slane %v2774, 3
    %v2795 = vsel %vm1548, %v2789, %v2794
    %v2796 = vrot.slane %v2775, 3
    %v2797 = vsel %vm1548, %v2792, %v2796
    %v2798 = vrot.slane %v2776, 3
    %v2799 = vrot.slane %v2263, 3
    %v2800 = vsel %vm1548, %v2798, %v2799
    %v2801 = vrot.slane %v2777, 3
    %v2802 = vrot.slane %v2264, 3
    %v2803 = vsel %vm1548, %v2801, %v2802
    %v2804 = vrot.slane %v2778, 3
    %v2805 = vsel %vm1548, %v2799, %v2804
    %v2806 = vrot.slane %v2779, 3
    %v2807 = vsel %vm1548, %v2802, %v2806
    %s2812 = scalar_lea.vmem %s11, 960
    %v2813 = vld [vmem:[%s2812] sm:$0xff]
    %v2814 = vld [vmem:[%s2812 + $0x8] sm:$0xff]
    %v2815 = vld [vmem:[%s2812 + $0x10] sm:$0xff]
    %v2816 = vld [vmem:[%s2812 + $0x18] sm:$0xff]
    %v2817 = vld [vmem:[%s2812 + $0x20] sm:$0xff]
    %v2818 = vld [vmem:[%s2812 + $0x28] sm:$0xff]
    %v2819 = vld [vmem:[%s2812 + $0x30] sm:$0xff]
    %v2820 = vld [vmem:[%s2812 + $0x38] sm:$0xff]
    %v2821 = vld [vmem:[%s2812 + $0x40] sm:$0xff]
    %v2822 = vld [vmem:[%s2812 + $0x48] sm:$0xff]
    %v2823 = vld [vmem:[%s2812 + $0x50] sm:$0xff]
    %v2824 = vld [vmem:[%s2812 + $0x58] sm:$0xff]
    %v2825 = vld [vmem:[%s2812 + $0x60] sm:$0xff]
    %v2826 = vld [vmem:[%s2812 + $0x68] sm:$0xff]
    %v2827 = vld [vmem:[%s2812 + $0x70] sm:$0xff]
    %v2828 = vld [vmem:[%s2812 + $0x78] sm:$0xff]
    %v2829 = vld [vmem:[%s2812 + $0x80] sm:$0xff]
    %v2830 = vld [vmem:[%s2812 + $0x88] sm:$0xff]
    %v2831 = vld [vmem:[%s2812 + $0x90] sm:$0xff]
    %v2832 = vld [vmem:[%s2812 + $0x98] sm:$0xff]
    %v2833 = vld [vmem:[%s2812 + $0xa0] sm:$0xff]
    %v2834 = vld [vmem:[%s2812 + $0xa8] sm:$0xff]
    %v2835 = vld [vmem:[%s2812 + $0xb0] sm:$0xff]
    %v2836 = vld [vmem:[%s2812 + $0xb8] sm:$0xff]
    %v2837 = vld [vmem:[%s2812 + $0xc0] sm:$0xff]
    %v2838 = vld [vmem:[%s2812 + $0xc8] sm:$0xff]
    %v2839 = vld [vmem:[%s2812 + $0xd0] sm:$0xff]
    %v2840 = vld [vmem:[%s2812 + $0xd8] sm:$0xff]
    %v2841 = vld [vmem:[%s2812 + $0xe0] sm:$0xff]
    %v2842 = vld [vmem:[%s2812 + $0xe8] sm:$0xff]
    %v2843 = vld [vmem:[%s2812 + $0xf0] sm:$0xff]
    %v2844 = vld [vmem:[%s2812 + $0xf8] sm:$0xff]
    %v2845 = vld [vmem:[%s2812 + $0x100] sm:$0xff]
    %v2846 = vld [vmem:[%s2812 + $0x108] sm:$0xff]
    %v2847 = vld [vmem:[%s2812 + $0x110] sm:$0xff]
    %v2848 = vld [vmem:[%s2812 + $0x118] sm:$0xff]
    %v2849 = vld [vmem:[%s2812 + $0x120] sm:$0xff]
    %v2850 = vld [vmem:[%s2812 + $0x128] sm:$0xff]
    %v2851 = vld [vmem:[%s2812 + $0x130] sm:$0xff]
    %v2852 = vld [vmem:[%s2812 + $0x138] sm:$0xff]
    %v2853 = vsel %vm1031, %v2793, 0
    %v2855 = vsel %vm1031, %v2797, 0
    %v2857 = vsel %vm1031, %v2803, 0
    %v2859 = vsel %vm1031, %v2807, 0
    %2861 = vmatprep.subr.mxu0 %v2844
    %2862 = vmatpush1.msra.mxu0 %v2843
    %2863 = vmatprep.subr.mxu0 %v2842
    %2864 = vmatpush1.msra.mxu0 %v2841
    %2865 = vmatprep.subr.mxu0 %v2840
    %2866 = vmatpush1.msra.mxu0 %v2839
    %2867 = vmatprep.subr.mxu0 %v2838
    %2868 = vmatpush1.msra.mxu0 %v2837
    %2869 = vmatprep.subr.mxu0 %v2836
    %2870 = vmatpush1.msra.mxu0 %v2835
    %2871 = vmatprep.subr.mxu0 %v2834
    %2872 = vmatpush1.msra.mxu0 %v2833
    %2873 = vmatprep.subr.mxu0 %v2832
    %2874 = vmatpush1.msra.mxu0 %v2831
    %2875 = vmatprep.subr.mxu0 %v2830
    %2876 = vmatpush1.msra.mxu0 %v2829
    %2877 = vmatprep.subr.mxu0 %v2828
    %2878 = vmatpush1.msra.mxu0 %v2827
    %2879 = vmatprep.subr.mxu0 %v2826
    %2880 = vmatpush1.msra.mxu0 %v2825
    %2881 = vmatprep.subr.mxu0 %v2824
    %2882 = vmatpush1.msra.mxu0 %v2823
    %2883 = vmatprep.subr.mxu0 %v2822
    %2884 = vmatpush1.msra.mxu0 %v2821
    %2885 = vmatprep.subr.mxu0 %v2820
    %2886 = vmatpush1.msra.mxu0 %v2819
    %2887 = vmatprep.subr.mxu0 %v2818
    %2888 = vmatpush1.msra.mxu0 %v2817
    %2889 = vmatprep.subr.mxu0 %v2816
    %2890 = vmatpush1.msra.mxu0 %v2815
    %2891 = vmatprep.subr.mxu0 %v2814
    %2892 = vmatpush1.msra.mxu0 %v2813
    %2893 = vmatprep.subr.mxu0 0.0
    %2894 = vmatpush2.msra.mxu0 0.0
    %2895 = vmatprep.subr.mxu0 0.0
    %2896 = vmatpush2.msra.mxu0 0.0
    %2897 = vmatprep.subr.mxu0 0.0
    %2898 = vmatpush2.msra.mxu0 0.0
    %2899 = vmatprep.subr.mxu0 0.0
    %2900 = vmatpush2.msra.mxu0 0.0
    %2901 = vmatprep.subr.mxu0 0.0
    %2902 = vmatpush2.msra.mxu0 0.0
    %2903 = vmatprep.subr.mxu0 0.0
    %2904 = vmatpush2.msra.mxu0 0.0
    %2905 = vmatprep.subr.mxu0 0.0
    %2906 = vmatpush2.msra.mxu0 0.0
    %2907 = vmatprep.subr.mxu0 0.0
    %2908 = vmatpush2.msra.mxu0 0.0
    %2909 = vmatprep.subr.mxu0 0.0
    %2910 = vmatpush2.msra.mxu0 0.0
    %2911 = vmatprep.subr.mxu0 0.0
    %2912 = vmatpush2.msra.mxu0 0.0
    %2913 = vmatprep.subr.mxu0 0.0
    %2914 = vmatpush2.msra.mxu0 0.0
    %2915 = vmatprep.subr.mxu0 0.0
    %2916 = vmatpush2.msra.mxu0 0.0
    %2917 = vmatprep.subr.mxu0 %v2852
    %2918 = vmatpush2.msra.mxu0 %v2851
    %2919 = vmatprep.subr.mxu0 %v2850
    %2920 = vmatpush2.msra.mxu0 %v2849
    %2921 = vmatprep.subr.mxu0 %v2848
    %2922 = vmatpush2.msra.mxu0 %v2847
    %2923 = vmatprep.subr.mxu0 %v2846
    %2924 = vmatpush2.msra.mxu0 %v2845
    %2925 = vmatprep.mubr.f32.mxu0 %v2853
    %2926 = vmatmul.mubr.f32.gmra.mxu0 %v2790
    %v2927 = vpop.f32.mrf.mxu0
    %v2928 = vadd.f32 0.0, %v2927
    %v2929 = vpop.f32.mrf.mxu0
    %v2930 = vadd.f32 0.0, %v2929
    %2931 = vmatprep.mubr.f32.mxu0 %v2855
    %2932 = vmatmul.mubr.f32.gmra.mxu0 %v2795
    %v2933 = vpop.f32.mrf.mxu0
    %v2934 = vadd.f32 0.0, %v2933
    %v2935 = vpop.f32.mrf.mxu0
    %v2936 = vadd.f32 0.0, %v2935
    %2937 = vmatprep.mubr.f32.mxu0 %v2857
    %2938 = vmatmul.mubr.f32.gmra.mxu0 %v2800
    %v2939 = vpop.f32.mrf.mxu0
    %v2940 = vadd.f32 0.0, %v2939
    %v2941 = vpop.f32.mrf.mxu0
    %v2942 = vadd.f32 0.0, %v2941
    %2943 = vmatprep.mubr.f32.mxu0 %v2859
    %2944 = vmatmul.mubr.f32.gmra.mxu0 %v2805
    %v2945 = vpop.f32.mrf.mxu0
    %v2946 = vadd.f32 0.0, %v2945
    %v2947 = vpop.f32.mrf.mxu0
    %v2948 = vadd.f32 0.0, %v2947
    %2949 = vdwg.mxu0
    %v2950 = vadd.f32 %v2764, %v2928
    %v2951 = vadd.f32 %v2765, %v2930
    %v2952 = vadd.f32 %v2766, %v2934
    %v2953 = vadd.f32 %v2767, %v2936
    %v2954 = vadd.f32 %v2768, %v2940
    %v2955 = vadd.f32 %v2769, %v2942
    %v2956 = vadd.f32 %v2770, %v2946
    %v2957 = vadd.f32 %v2771, %v2948
    %v2958 = vld [vmem:[#allocation4] sm:$0xf0]
    %v2959 = vld [vmem:[#allocation4 + $0x8] sm:$0xf0]
    %v2960 = vld [vmem:[#allocation4 + $0x20] sm:$0xf]
    %v2961 = vld [vmem:[#allocation4 + $0x28] sm:$0xf]
    %v2962 = vld [vmem:[#allocation4 + $0x30] sm:$0xf0]
    %v2963 = vld [vmem:[#allocation4 + $0x38] sm:$0xf0]
    %v2964 = vld [vmem:[#allocation4 + $0x50] sm:$0xf]
    %v2965 = vld [vmem:[#allocation4 + $0x58] sm:$0xf]
    %v2974 = vrot.slane %v2958, 4
    %v2975 = vrot.slane %v2259, 4
    %v2976 = vsel %vm133, %v2974, %v2975
    %v2977 = vrot.slane %v2959, 4
    %v2978 = vrot.slane %v2260, 4
    %v2979 = vsel %vm133, %v2977, %v2978
    %v2980 = vrot.slane %v2960, 4
    %v2981 = vsel %vm133, %v2975, %v2980
    %v2982 = vrot.slane %v2961, 4
    %v2983 = vsel %vm133, %v2978, %v2982
    %v2984 = vrot.slane %v2962, 4
    %v2985 = vrot.slane %v2263, 4
    %v2986 = vsel %vm133, %v2984, %v2985
    %v2987 = vrot.slane %v2963, 4
    %v2988 = vrot.slane %v2264, 4
    %v2989 = vsel %vm133, %v2987, %v2988
    %v2990 = vrot.slane %v2964, 4
    %v2991 = vsel %vm133, %v2985, %v2990
    %v2992 = vrot.slane %v2965, 4
    %v2993 = vsel %vm133, %v2988, %v2992
    %s2998 = scalar_lea.vmem %s11, 1280
    %v2999 = vld [vmem:[%s2998] sm:$0xff]
    %v3000 = vld [vmem:[%s2998 + $0x8] sm:$0xff]
    %v3001 = vld [vmem:[%s2998 + $0x10] sm:$0xff]
    %v3002 = vld [vmem:[%s2998 + $0x18] sm:$0xff]
    %v3003 = vld [vmem:[%s2998 + $0x20] sm:$0xff]
    %v3004 = vld [vmem:[%s2998 + $0x28] sm:$0xff]
    %v3005 = vld [vmem:[%s2998 + $0x30] sm:$0xff]
    %v3006 = vld [vmem:[%s2998 + $0x38] sm:$0xff]
    %v3007 = vld [vmem:[%s2998 + $0x40] sm:$0xff]
    %v3008 = vld [vmem:[%s2998 + $0x48] sm:$0xff]
    %v3009 = vld [vmem:[%s2998 + $0x50] sm:$0xff]
    %v3010 = vld [vmem:[%s2998 + $0x58] sm:$0xff]
    %v3011 = vld [vmem:[%s2998 + $0x60] sm:$0xff]
    %v3012 = vld [vmem:[%s2998 + $0x68] sm:$0xff]
    %v3013 = vld [vmem:[%s2998 + $0x70] sm:$0xff]
    %v3014 = vld [vmem:[%s2998 + $0x78] sm:$0xff]
    %v3015 = vld [vmem:[%s2998 + $0x80] sm:$0xff]
    %v3016 = vld [vmem:[%s2998 + $0x88] sm:$0xff]
    %v3017 = vld [vmem:[%s2998 + $0x90] sm:$0xff]
    %v3018 = vld [vmem:[%s2998 + $0x98] sm:$0xff]
    %v3019 = vld [vmem:[%s2998 + $0xa0] sm:$0xff]
    %v3020 = vld [vmem:[%s2998 + $0xa8] sm:$0xff]
    %v3021 = vld [vmem:[%s2998 + $0xb0] sm:$0xff]
    %v3022 = vld [vmem:[%s2998 + $0xb8] sm:$0xff]
    %v3023 = vld [vmem:[%s2998 + $0xc0] sm:$0xff]
    %v3024 = vld [vmem:[%s2998 + $0xc8] sm:$0xff]
    %v3025 = vld [vmem:[%s2998 + $0xd0] sm:$0xff]
    %v3026 = vld [vmem:[%s2998 + $0xd8] sm:$0xff]
    %v3027 = vld [vmem:[%s2998 + $0xe0] sm:$0xff]
    %v3028 = vld [vmem:[%s2998 + $0xe8] sm:$0xff]
    %v3029 = vld [vmem:[%s2998 + $0xf0] sm:$0xff]
    %v3030 = vld [vmem:[%s2998 + $0xf8] sm:$0xff]
    %v3031 = vld [vmem:[%s2998 + $0x100] sm:$0xff]
    %v3032 = vld [vmem:[%s2998 + $0x108] sm:$0xff]
    %v3033 = vld [vmem:[%s2998 + $0x110] sm:$0xff]
    %v3034 = vld [vmem:[%s2998 + $0x118] sm:$0xff]
    %v3035 = vld [vmem:[%s2998 + $0x120] sm:$0xff]
    %v3036 = vld [vmem:[%s2998 + $0x128] sm:$0xff]
    %v3037 = vld [vmem:[%s2998 + $0x130] sm:$0xff]
    %v3038 = vld [vmem:[%s2998 + $0x138] sm:$0xff]
    %v3039 = vsel %vm1031, %v2979, 0
    %v3041 = vsel %vm1031, %v2983, 0
    %v3043 = vsel %vm1031, %v2989, 0
    %v3045 = vsel %vm1031, %v2993, 0
    %3047 = vmatprep.subr.mxu0 %v3030
    %3048 = vmatpush1.msra.mxu0 %v3029
    %3049 = vmatprep.subr.mxu0 %v3028
    %3050 = vmatpush1.msra.mxu0 %v3027
    %3051 = vmatprep.subr.mxu0 %v3026
    %3052 = vmatpush1.msra.mxu0 %v3025
    %3053 = vmatprep.subr.mxu0 %v3024
    %3054 = vmatpush1.msra.mxu0 %v3023
    %3055 = vmatprep.subr.mxu0 %v3022
    %3056 = vmatpush1.msra.mxu0 %v3021
    %3057 = vmatprep.subr.mxu0 %v3020
    %3058 = vmatpush1.msra.mxu0 %v3019
    %3059 = vmatprep.subr.mxu0 %v3018
    %3060 = vmatpush1.msra.mxu0 %v3017
    %3061 = vmatprep.subr.mxu0 %v3016
    %3062 = vmatpush1.msra.mxu0 %v3015
    %3063 = vmatprep.subr.mxu0 %v3014
    %3064 = vmatpush1.msra.mxu0 %v3013
    %3065 = vmatprep.subr.mxu0 %v3012
    %3066 = vmatpush1.msra.mxu0 %v3011
    %3067 = vmatprep.subr.mxu0 %v3010
    %3068 = vmatpush1.msra.mxu0 %v3009
    %3069 = vmatprep.subr.mxu0 %v3008
    %3070 = vmatpush1.msra.mxu0 %v3007
    %3071 = vmatprep.subr.mxu0 %v3006
    %3072 = vmatpush1.msra.mxu0 %v3005
    %3073 = vmatprep.subr.mxu0 %v3004
    %3074 = vmatpush1.msra.mxu0 %v3003
    %3075 = vmatprep.subr.mxu0 %v3002
    %3076 = vmatpush1.msra.mxu0 %v3001
    %3077 = vmatprep.subr.mxu0 %v3000
    %3078 = vmatpush1.msra.mxu0 %v2999
    %3079 = vmatprep.subr.mxu0 0.0
    %3080 = vmatpush2.msra.mxu0 0.0
    %3081 = vmatprep.subr.mxu0 0.0
    %3082 = vmatpush2.msra.mxu0 0.0
    %3083 = vmatprep.subr.mxu0 0.0
    %3084 = vmatpush2.msra.mxu0 0.0
    %3085 = vmatprep.subr.mxu0 0.0
    %3086 = vmatpush2.msra.mxu0 0.0
    %3087 = vmatprep.subr.mxu0 0.0
    %3088 = vmatpush2.msra.mxu0 0.0
    %3089 = vmatprep.subr.mxu0 0.0
    %3090 = vmatpush2.msra.mxu0 0.0
    %3091 = vmatprep.subr.mxu0 0.0
    %3092 = vmatpush2.msra.mxu0 0.0
    %3093 = vmatprep.subr.mxu0 0.0
    %3094 = vmatpush2.msra.mxu0 0.0
    %3095 = vmatprep.subr.mxu0 0.0
    %3096 = vmatpush2.msra.mxu0 0.0
    %3097 = vmatprep.subr.mxu0 0.0
    %3098 = vmatpush2.msra.mxu0 0.0
    %3099 = vmatprep.subr.mxu0 0.0
    %3100 = vmatpush2.msra.mxu0 0.0
    %3101 = vmatprep.subr.mxu0 0.0
    %3102 = vmatpush2.msra.mxu0 0.0
    %3103 = vmatprep.subr.mxu0 %v3038
    %3104 = vmatpush2.msra.mxu0 %v3037
    %3105 = vmatprep.subr.mxu0 %v3036
    %3106 = vmatpush2.msra.mxu0 %v3035
    %3107 = vmatprep.subr.mxu0 %v3034
    %3108 = vmatpush2.msra.mxu0 %v3033
    %3109 = vmatprep.subr.mxu0 %v3032
    %3110 = vmatpush2.msra.mxu0 %v3031
    %3111 = vmatprep.mubr.f32.mxu0 %v3039
    %3112 = vmatmul.mubr.f32.gmra.mxu0 %v2976
    %v3113 = vpop.f32.mrf.mxu0
    %v3114 = vadd.f32 0.0, %v3113
    %v3115 = vpop.f32.mrf.mxu0
    %v3116 = vadd.f32 0.0, %v3115
    %3117 = vmatprep.mubr.f32.mxu0 %v3041
    %3118 = vmatmul.mubr.f32.gmra.mxu0 %v2981
    %v3119 = vpop.f32.mrf.mxu0
    %v3120 = vadd.f32 0.0, %v3119
    %v3121 = vpop.f32.mrf.mxu0
    %v3122 = vadd.f32 0.0, %v3121
    %3123 = vmatprep.mubr.f32.mxu0 %v3043
    %3124 = vmatmul.mubr.f32.gmra.mxu0 %v2986
    %v3125 = vpop.f32.mrf.mxu0
    %v3126 = vadd.f32 0.0, %v3125
    %v3127 = vpop.f32.mrf.mxu0
    %v3128 = vadd.f32 0.0, %v3127
    %3129 = vmatprep.mubr.f32.mxu0 %v3045
    %3130 = vmatmul.mubr.f32.gmra.mxu0 %v2991
    %v3131 = vpop.f32.mrf.mxu0
    %v3132 = vadd.f32 0.0, %v3131
    %v3133 = vpop.f32.mrf.mxu0
    %v3134 = vadd.f32 0.0, %v3133
    %3135 = vdwg.mxu0
    %v3136 = vadd.f32 %v2950, %v3114
    %v3137 = vadd.f32 %v2951, %v3116
    %v3138 = vadd.f32 %v2952, %v3120
    %v3139 = vadd.f32 %v2953, %v3122
    %v3140 = vadd.f32 %v2954, %v3126
    %v3141 = vadd.f32 %v2955, %v3128
    %v3142 = vadd.f32 %v2956, %v3132
    %v3143 = vadd.f32 %v2957, %v3134
    %v3144 = vadd.f32 %v3136, %v3138
    %v3145 = vadd.f32 %v3144, %v3140
    %v3146 = vadd.f32 %v3145, %v3142
    %v3147 = vrot.slane %v3146, 4
    %v3148 = vadd.f32 %v3146, %v3147
    %v3149 = vrot.slane %v3148, 2
    %v3150 = vadd.f32 %v3148, %v3149
    %v3151 = vrot.slane %v3150, 1
    %v3152 = vadd.f32 %v3150, %v3151
    %v3153 = vadd.f32 %v3137, %v3139
    %v3154 = vadd.f32 %v3153, %v3141
    %v3155 = vadd.f32 %v3154, %v3143
    %v3156 = vrot.slane %v3155, 4
    %v3157 = vadd.f32 %v3155, %v3156
    %v3158 = vrot.slane %v3157, 2
    %v3159 = vadd.f32 %v3157, %v3158
    %v3160 = vrot.slane %v3159, 1
    %v3161 = vadd.f32 %v3159, %v3160
    %v3162 = vmul.f32 %v3136, %v3136
    %v3163 = vmul.f32 %v3137, %v3137
    %v3164 = vmul.f32 %v3138, %v3138
    %v3165 = vmul.f32 %v3139, %v3139
    %v3166 = vmul.f32 %v3140, %v3140
    %v3167 = vmul.f32 %v3141, %v3141
    %v3168 = vmul.f32 %v3142, %v3142
    %v3169 = vmul.f32 %v3143, %v3143
    %v3170 = vadd.f32 %v3162, %v3164
    %v3171 = vadd.f32 %v3170, %v3166
    %v3172 = vadd.f32 %v3171, %v3168
    %v3173 = vrot.slane %v3172, 4
    %v3174 = vadd.f32 %v3172, %v3173
    %v3175 = vrot.slane %v3174, 2
    %v3176 = vadd.f32 %v3174, %v3175
    %v3177 = vrot.slane %v3176, 1
    %v3178 = vadd.f32 %v3176, %v3177
    %v3179 = vadd.f32 %v3163, %v3165
    %v3180 = vadd.f32 %v3179, %v3167
    %v3181 = vadd.f32 %v3180, %v3169
    %v3182 = vrot.slane %v3181, 4
    %v3183 = vadd.f32 %v3181, %v3182
    %v3184 = vrot.slane %v3183, 2
    %v3185 = vadd.f32 %v3183, %v3184
    %v3186 = vrot.slane %v3185, 1
    %v3187 = vadd.f32 %v3185, %v3186
    %v3188 = vld [vmem:[%s12] sm:$0xff]
    %v3189 = vld [vmem:[%s12 + $0x8] sm:$0xff]
    %v3190 = vld [vmem:[%s12 + $0x10] sm:$0xff]
    %v3191 = vld [vmem:[%s12 + $0x18] sm:$0xff]
    %v3192 = vld [vmem:[%s12 + $0x20] sm:$0xff]
    %v3193 = vld [vmem:[%s12 + $0x28] sm:$0xff]
    %v3194 = vld [vmem:[%s12 + $0x30] sm:$0xff]
    %v3195 = vld [vmem:[%s12 + $0x38] sm:$0xff]
    %v3196 = vld [vmem:[%s12 + $0x40] sm:$0xff]
    %v3197 = vld [vmem:[%s12 + $0x48] sm:$0xff]
    %v3198 = vld [vmem:[%s12 + $0x50] sm:$0xff]
    %v3199 = vld [vmem:[%s12 + $0x58] sm:$0xff]
    %v3200 = vld [vmem:[%s12 + $0x60] sm:$0xff]
    %v3201 = vld [vmem:[%s12 + $0x68] sm:$0xff]
    %v3202 = vld [vmem:[%s12 + $0x70] sm:$0xff]
    %v3203 = vld [vmem:[%s12 + $0x78] sm:$0xff]
    %v3204 = vld [vmem:[%s12 + $0x80] sm:$0xff]
    %v3205 = vld [vmem:[%s12 + $0x88] sm:$0xff]
    %v3206 = vld [vmem:[%s12 + $0x90] sm:$0xff]
    %v3207 = vld [vmem:[%s12 + $0x98] sm:$0xff]
    %v3208 = vld [vmem:[%s12 + $0xa0] sm:$0xff]
    %v3209 = vld [vmem:[%s12 + $0xa8] sm:$0xff]
    %v3210 = vld [vmem:[%s12 + $0xb0] sm:$0xff]
    %v3211 = vld [vmem:[%s12 + $0xb8] sm:$0xff]
    %v3212 = vld [vmem:[%s12 + $0xc0] sm:$0xff]
    %v3213 = vld [vmem:[%s12 + $0xc8] sm:$0xff]
    %v3214 = vld [vmem:[%s12 + $0xd0] sm:$0xff]
    %v3215 = vld [vmem:[%s12 + $0xd8] sm:$0xff]
    %v3216 = vld [vmem:[%s12 + $0xe0] sm:$0xff]
    %v3217 = vld [vmem:[%s12 + $0xe8] sm:$0xff]
    %v3218 = vld [vmem:[%s12 + $0xf0] sm:$0xff]
    %v3219 = vld [vmem:[%s12 + $0xf8] sm:$0xff]
    %3220 = vmatprep.subr.mxu0 0.0
    %3221 = vmatpush1.msra.mxu0 %v3203
    %3222 = vmatprep.subr.mxu0 0.0
    %3223 = vmatpush1.msra.mxu0 %v3202
    %3224 = vmatprep.subr.mxu0 0.0
    %3225 = vmatpush1.msra.mxu0 %v3201
    %3226 = vmatprep.subr.mxu0 0.0
    %3227 = vmatpush1.msra.mxu0 %v3200
    %3228 = vmatprep.subr.mxu0 0.0
    %3229 = vmatpush1.msra.mxu0 %v3199
    %3230 = vmatprep.subr.mxu0 0.0
    %3231 = vmatpush1.msra.mxu0 %v3198
    %3232 = vmatprep.subr.mxu0 0.0
    %3233 = vmatpush1.msra.mxu0 %v3197
    %3234 = vmatprep.subr.mxu0 0.0
    %3235 = vmatpush1.msra.mxu0 %v3196
    %3236 = vmatprep.subr.mxu0 0.0
    %3237 = vmatpush1.msra.mxu0 %v3195
    %3238 = vmatprep.subr.mxu0 0.0
    %3239 = vmatpush1.msra.mxu0 %v3194
    %3240 = vmatprep.subr.mxu0 0.0
    %3241 = vmatpush1.msra.mxu0 %v3193
    %3242 = vmatprep.subr.mxu0 0.0
    %3243 = vmatpush1.msra.mxu0 %v3192
    %3244 = vmatprep.subr.mxu0 0.0
    %3245 = vmatpush1.msra.mxu0 %v3191
    %3246 = vmatprep.subr.mxu0 0.0
    %3247 = vmatpush1.msra.mxu0 %v3190
    %3248 = vmatprep.subr.mxu0 0.0
    %3249 = vmatpush1.msra.mxu0 %v3189
    %3250 = vmatprep.subr.mxu0 0.0
    %3251 = vmatpush1.msra.mxu0 %v3188
    %3252 = vmatprep.subr.mxu0 0.0
    %3253 = vmatpush2.msra.mxu0 %v3219
    %3254 = vmatprep.subr.mxu0 0.0
    %3255 = vmatpush2.msra.mxu0 %v3218
    %3256 = vmatprep.subr.mxu0 0.0
    %3257 = vmatpush2.msra.mxu0 %v3217
    %3258 = vmatprep.subr.mxu0 0.0
    %3259 = vmatpush2.msra.mxu0 %v3216
    %3260 = vmatprep.subr.mxu0 0.0
    %3261 = vmatpush2.msra.mxu0 %v3215
    %3262 = vmatprep.subr.mxu0 0.0
    %3263 = vmatpush2.msra.mxu0 %v3214
    %3264 = vmatprep.subr.mxu0 0.0
    %3265 = vmatpush2.msra.mxu0 %v3213
    %3266 = vmatprep.subr.mxu0 0.0
    %3267 = vmatpush2.msra.mxu0 %v3212
    %3268 = vmatprep.subr.mxu0 0.0
    %3269 = vmatpush2.msra.mxu0 %v3211
    %3270 = vmatprep.subr.mxu0 0.0
    %3271 = vmatpush2.msra.mxu0 %v3210
    %3272 = vmatprep.subr.mxu0 0.0
    %3273 = vmatpush2.msra.mxu0 %v3209
    %3274 = vmatprep.subr.mxu0 0.0
    %3275 = vmatpush2.msra.mxu0 %v3208
    %3276 = vmatprep.subr.mxu0 0.0
    %3277 = vmatpush2.msra.mxu0 %v3207
    %3278 = vmatprep.subr.mxu0 0.0
    %3279 = vmatpush2.msra.mxu0 %v3206
    %3280 = vmatprep.subr.mxu0 0.0
    %3281 = vmatpush2.msra.mxu0 %v3205
    %3282 = vmatprep.subr.mxu0 0.0
    %3283 = vmatpush2.msra.mxu0 %v3204
    %3284 = vmatprep.mubr.f32.mxu0 %v3161
    %3285 = vmatmul.mubr.f32.gmra.mxu0 %v3152
    %v3286 = vpop.f32.mrf.mxu0
    %v3287 = vadd.f32 0.0, %v3286
    %v3288 = vpop.f32.mrf.mxu0
    %3289 = vdwg.mxu0
    %v3290 = vmul.f32 %v3287, 0.001953125
    %3291 = vmatprep.subr.mxu0 0.0
    %3292 = vmatpush1.msra.mxu0 %v3203
    %3293 = vmatprep.subr.mxu0 0.0
    %3294 = vmatpush1.msra.mxu0 %v3202
    %3295 = vmatprep.subr.mxu0 0.0
    %3296 = vmatpush1.msra.mxu0 %v3201
    %3297 = vmatprep.subr.mxu0 0.0
    %3298 = vmatpush1.msra.mxu0 %v3200
    %3299 = vmatprep.subr.mxu0 0.0
    %3300 = vmatpush1.msra.mxu0 %v3199
    %3301 = vmatprep.subr.mxu0 0.0
    %3302 = vmatpush1.msra.mxu0 %v3198
    %3303 = vmatprep.subr.mxu0 0.0
    %3304 = vmatpush1.msra.mxu0 %v3197
    %3305 = vmatprep.subr.mxu0 0.0
    %3306 = vmatpush1.msra.mxu0 %v3196
    %3307 = vmatprep.subr.mxu0 0.0
    %3308 = vmatpush1.msra.mxu0 %v3195
    %3309 = vmatprep.subr.mxu0 0.0
    %3310 = vmatpush1.msra.mxu0 %v3194
    %3311 = vmatprep.subr.mxu0 0.0
    %3312 = vmatpush1.msra.mxu0 %v3193
    %3313 = vmatprep.subr.mxu0 0.0
    %3314 = vmatpush1.msra.mxu0 %v3192
    %3315 = vmatprep.subr.mxu0 0.0
    %3316 = vmatpush1.msra.mxu0 %v3191
    %3317 = vmatprep.subr.mxu0 0.0
    %3318 = vmatpush1.msra.mxu0 %v3190
    %3319 = vmatprep.subr.mxu0 0.0
    %3320 = vmatpush1.msra.mxu0 %v3189
    %3321 = vmatprep.subr.mxu0 0.0
    %3322 = vmatpush1.msra.mxu0 %v3188
    %3323 = vmatprep.subr.mxu0 0.0
    %3324 = vmatpush2.msra.mxu0 %v3219
    %3325 = vmatprep.subr.mxu0 0.0
    %3326 = vmatpush2.msra.mxu0 %v3218
    %3327 = vmatprep.subr.mxu0 0.0
    %3328 = vmatpush2.msra.mxu0 %v3217
    %3329 = vmatprep.subr.mxu0 0.0
    %3330 = vmatpush2.msra.mxu0 %v3216
    %3331 = vmatprep.subr.mxu0 0.0
    %3332 = vmatpush2.msra.mxu0 %v3215
    %3333 = vmatprep.subr.mxu0 0.0
    %3334 = vmatpush2.msra.mxu0 %v3214
    %3335 = vmatprep.subr.mxu0 0.0
    %3336 = vmatpush2.msra.mxu0 %v3213
    %3337 = vmatprep.subr.mxu0 0.0
    %3338 = vmatpush2.msra.mxu0 %v3212
    %3339 = vmatprep.subr.mxu0 0.0
    %3340 = vmatpush2.msra.mxu0 %v3211
    %3341 = vmatprep.subr.mxu0 0.0
    %3342 = vmatpush2.msra.mxu0 %v3210
    %3343 = vmatprep.subr.mxu0 0.0
    %3344 = vmatpush2.msra.mxu0 %v3209
    %3345 = vmatprep.subr.mxu0 0.0
    %3346 = vmatpush2.msra.mxu0 %v3208
    %3347 = vmatprep.subr.mxu0 0.0
    %3348 = vmatpush2.msra.mxu0 %v3207
    %3349 = vmatprep.subr.mxu0 0.0
    %3350 = vmatpush2.msra.mxu0 %v3206
    %3351 = vmatprep.subr.mxu0 0.0
    %3352 = vmatpush2.msra.mxu0 %v3205
    %3353 = vmatprep.subr.mxu0 0.0
    %3354 = vmatpush2.msra.mxu0 %v3204
    %3355 = vmatprep.mubr.f32.mxu0 %v3187
    %3356 = vmatmul.mubr.f32.gmra.mxu0 %v3178
    %v3357 = vpop.f32.mrf.mxu0
    %v3358 = vadd.f32 0.0, %v3357
    %v3359 = vpop.f32.mrf.mxu0
    %3360 = vdwg.mxu0
    %v3361 = vmul.f32 %v3358, 0.001953125
    %v3362 = vmul.f32 %v3290, %v3290
    %v3363 = vsub.f32 %v3361, %v3362
    %v3364 = vld [vmem:[%s14] sm:$0x1]
    %v3365 = vadd.f32 %v3363, 1e-05
    %v3366 = vrsqrt.pop %v3365
    %v3367 = vmul.f32 %v3364, %v3366
    %v3368 = vld [vmem:[%s15] sm:$0x1]
    %v3369 = vmul.f32 %v3290, %v3367
    %v3370 = vsub.f32 %v3368, %v3369
    %v3371 = vld [vmem:[%s13] sm:$0xff]
    %v3372 = vld [vmem:[%s13 + $0x8] sm:$0xff]
    %v3373 = vld [vmem:[%s13 + $0x10] sm:$0xff]
    %v3374 = vld [vmem:[%s13 + $0x18] sm:$0xff]
    %v3376 = vsel %vm1079, %v3367, 0
    %3378 = vmatprep.subr.mxu0 0.0
    %3379 = vmatpush1.msra.mxu0 0.0
    %3380 = vmatprep.subr.mxu0 0.0
    %3381 = vmatpush1.msra.mxu0 0.0
    %3382 = vmatprep.subr.mxu0 0.0
    %3383 = vmatpush1.msra.mxu0 0.0
    %3384 = vmatprep.subr.mxu0 0.0
    %3385 = vmatpush1.msra.mxu0 0.0
    %3386 = vmatprep.subr.mxu0 0.0
    %3387 = vmatpush1.msra.mxu0 0.0
    %3388 = vmatprep.subr.mxu0 0.0
    %3389 = vmatpush1.msra.mxu0 0.0
    %3390 = vmatprep.subr.mxu0 0.0
    %3391 = vmatpush1.msra.mxu0 0.0
    %3392 = vmatprep.subr.mxu0 0.0
    %3393 = vmatpush1.msra.mxu0 0.0
    %3394 = vmatprep.subr.mxu0 0.0
    %3395 = vmatpush1.msra.mxu0 0.0
    %3396 = vmatprep.subr.mxu0 0.0
    %3397 = vmatpush1.msra.mxu0 0.0
    %3398 = vmatprep.subr.mxu0 0.0
    %3399 = vmatpush1.msra.mxu0 0.0
    %3400 = vmatprep.subr.mxu0 0.0
    %3401 = vmatpush1.msra.mxu0 0.0
    %3402 = vmatprep.subr.mxu0 0.0
    %3403 = vmatpush1.msra.mxu0 0.0
    %3404 = vmatprep.subr.mxu0 0.0
    %3405 = vmatpush1.msra.mxu0 0.0
    %3406 = vmatprep.subr.mxu0 %v3374
    %3407 = vmatpush1.msra.mxu0 %v3373
    %3408 = vmatprep.subr.mxu0 %v3372
    %3409 = vmatpush1.msra.mxu0 %v3371
    %3410 = vmatprep.subr.mxu0 0.0
    %3411 = vmatpush2.msra.mxu0 0.0
    %3412 = vmatprep.subr.mxu0 0.0
    %3413 = vmatpush2.msra.mxu0 0.0
    %3414 = vmatprep.subr.mxu0 0.0
    %3415 = vmatpush2.msra.mxu0 0.0
    %3416 = vmatprep.subr.mxu0 0.0
    %3417 = vmatpush2.msra.mxu0 0.0
    %3418 = vmatprep.subr.mxu0 0.0
    %3419 = vmatpush2.msra.mxu0 0.0
    %3420 = vmatprep.subr.mxu0 0.0
    %3421 = vmatpush2.msra.mxu0 0.0
    %3422 = vmatprep.subr.mxu0 0.0
    %3423 = vmatpush2.msra.mxu0 0.0
    %3424 = vmatprep.subr.mxu0 0.0
    %3425 = vmatpush2.msra.mxu0 0.0
    %3426 = vmatprep.subr.mxu0 0.0
    %3427 = vmatpush2.msra.mxu0 0.0
    %3428 = vmatprep.subr.mxu0 0.0
    %3429 = vmatpush2.msra.mxu0 0.0
    %3430 = vmatprep.subr.mxu0 0.0
    %3431 = vmatpush2.msra.mxu0 0.0
    %3432 = vmatprep.subr.mxu0 0.0
    %3433 = vmatpush2.msra.mxu0 0.0
    %3434 = vmatprep.subr.mxu0 0.0
    %3435 = vmatpush2.msra.mxu0 0.0
    %3436 = vmatprep.subr.mxu0 0.0
    %3437 = vmatpush2.msra.mxu0 0.0
    %3438 = vmatprep.subr.mxu0 0.0
    %3439 = vmatpush2.msra.mxu0 0.0
    %3440 = vmatprep.subr.mxu0 0.0
    %3441 = vmatpush2.msra.mxu0 0.0
    %3442 = vmatprep.mubr.f32.mxu0 0.0
    %3443 = vmatmul.mubr.f32.gmra.mxu0 %v3376
    %v3444 = vpop.f32.mrf.mxu0
    %v3445 = vadd.f32 0.0, %v3444
    %v3446 = vpop.f32.mrf.mxu0
    %v3447 = vadd.f32 0.0, %v3446
    %3448 = vdwg.mxu0
    %v3450 = vsel %vm1079, %v3370, 0
    %3452 = vmatprep.subr.mxu0 0.0
    %3453 = vmatpush1.msra.mxu0 0.0
    %3454 = vmatprep.subr.mxu0 0.0
    %3455 = vmatpush1.msra.mxu0 0.0
    %3456 = vmatprep.subr.mxu0 0.0
    %3457 = vmatpush1.msra.mxu0 0.0
    %3458 = vmatprep.subr.mxu0 0.0
    %3459 = vmatpush1.msra.mxu0 0.0
    %3460 = vmatprep.subr.mxu0 0.0
    %3461 = vmatpush1.msra.mxu0 0.0
    %3462 = vmatprep.subr.mxu0 0.0
    %3463 = vmatpush1.msra.mxu0 0.0
    %3464 = vmatprep.subr.mxu0 0.0
    %3465 = vmatpush1.msra.mxu0 0.0
    %3466 = vmatprep.subr.mxu0 0.0
    %3467 = vmatpush1.msra.mxu0 0.0
    %3468 = vmatprep.subr.mxu0 0.0
    %3469 = vmatpush1.msra.mxu0 0.0
    %3470 = vmatprep.subr.mxu0 0.0
    %3471 = vmatpush1.msra.mxu0 0.0
    %3472 = vmatprep.subr.mxu0 0.0
    %3473 = vmatpush1.msra.mxu0 0.0
    %3474 = vmatprep.subr.mxu0 0.0
    %3475 = vmatpush1.msra.mxu0 0.0
    %3476 = vmatprep.subr.mxu0 0.0
    %3477 = vmatpush1.msra.mxu0 0.0
    %3478 = vmatprep.subr.mxu0 0.0
    %3479 = vmatpush1.msra.mxu0 0.0
    %3480 = vmatprep.subr.mxu0 %v3374
    %3481 = vmatpush1.msra.mxu0 %v3373
    %3482 = vmatprep.subr.mxu0 %v3372
    %3483 = vmatpush1.msra.mxu0 %v3371
    %3484 = vmatprep.subr.mxu0 0.0
    %3485 = vmatpush2.msra.mxu0 0.0
    %3486 = vmatprep.subr.mxu0 0.0
    %3487 = vmatpush2.msra.mxu0 0.0
    %3488 = vmatprep.subr.mxu0 0.0
    %3489 = vmatpush2.msra.mxu0 0.0
    %3490 = vmatprep.subr.mxu0 0.0
    %3491 = vmatpush2.msra.mxu0 0.0
    %3492 = vmatprep.subr.mxu0 0.0
    %3493 = vmatpush2.msra.mxu0 0.0
    %3494 = vmatprep.subr.mxu0 0.0
    %3495 = vmatpush2.msra.mxu0 0.0
    %3496 = vmatprep.subr.mxu0 0.0
    %3497 = vmatpush2.msra.mxu0 0.0
    %3498 = vmatprep.subr.mxu0 0.0
    %3499 = vmatpush2.msra.mxu0 0.0
    %3500 = vmatprep.subr.mxu0 0.0
    %3501 = vmatpush2.msra.mxu0 0.0
    %3502 = vmatprep.subr.mxu0 0.0
    %3503 = vmatpush2.msra.mxu0 0.0
    %3504 = vmatprep.subr.mxu0 0.0
    %3505 = vmatpush2.msra.mxu0 0.0
    %3506 = vmatprep.subr.mxu0 0.0
    %3507 = vmatpush2.msra.mxu0 0.0
    %3508 = vmatprep.subr.mxu0 0.0
    %3509 = vmatpush2.msra.mxu0 0.0
    %3510 = vmatprep.subr.mxu0 0.0
    %3511 = vmatpush2.msra.mxu0 0.0
    %3512 = vmatprep.subr.mxu0 0.0
    %3513 = vmatpush2.msra.mxu0 0.0
    %3514 = vmatprep.subr.mxu0 0.0
    %3515 = vmatpush2.msra.mxu0 0.0
    %3516 = vmatprep.mubr.f32.mxu0 0.0
    %3517 = vmatmul.mubr.f32.gmra.mxu0 %v3450
    %v3518 = vpop.f32.mrf.mxu0
    %v3519 = vadd.f32 0.0, %v3518
    %v3520 = vpop.f32.mrf.mxu0
    %v3521 = vadd.f32 0.0, %v3520
    %3522 = vdwg.mxu0
    %v3523 = vlaneseq
    %v3524 = vshrl.u32 %v3523, 7
    %v3525 = vsub.s32 0, %v3524
    %v3526 = vrot.slane %v3445, %v3525
    %v3527 = vlaneseq
    %v3528 = vshrl.u32 %v3527, 7
    %v3529 = vsub.s32 0, %v3528
    %v3530 = vrot.slane %v3447, %v3529
    %v3531 = vmul.f32 %v3136, %v3526
    %v3532 = vmul.f32 %v3137, %v3530
    %v3533 = vmul.f32 %v3138, %v3526
    %v3534 = vmul.f32 %v3139, %v3530
    %v3535 = vmul.f32 %v3140, %v3526
    %v3536 = vmul.f32 %v3141, %v3530
    %v3537 = vmul.f32 %v3142, %v3526
    %v3538 = vmul.f32 %v3143, %v3530
    %v3539 = vlaneseq
    %v3540 = vshrl.u32 %v3539, 7
    %v3541 = vsub.s32 0, %v3540
    %v3542 = vrot.slane %v3519, %v3541
    %v3543 = vlaneseq
    %v3544 = vshrl.u32 %v3543, 7
    %v3545 = vsub.s32 0, %v3544
    %v3546 = vrot.slane %v3521, %v3545
    %v3547 = vadd.f32 %v3531, %v3542
    %v3548 = vadd.f32 %v3532, %v3546
    %v3549 = vadd.f32 %v3533, %v3542
    %v3550 = vadd.f32 %v3534, %v3546
    %v3551 = vadd.f32 %v3535, %v3542
    %v3552 = vadd.f32 %v3536, %v3546
    %v3553 = vadd.f32 %v3537, %v3542
    %v3554 = vadd.f32 %v3538, %v3546
    %v3555 = vmax.f32 %v3547, 0.0
    %v3556 = vmax.f32 %v3548, 0.0
    %v3557 = vmax.f32 %v3549, 0.0
    %v3558 = vmax.f32 %v3550, 0.0
    %v3559 = vmax.f32 %v3551, 0.0
    %v3560 = vmax.f32 %v3552, 0.0
    %v3561 = vmax.f32 %v3553, 0.0
    %v3562 = vmax.f32 %v3554, 0.0
    %3563 = vmatprep.subr.mxu0 0.0
    %3564 = vmatpush1.msra.mxu0 %v3203
    %3565 = vmatprep.subr.mxu0 0.0
    %3566 = vmatpush1.msra.mxu0 %v3202
    %3567 = vmatprep.subr.mxu0 0.0
    %3568 = vmatpush1.msra.mxu0 %v3201
    %3569 = vmatprep.subr.mxu0 0.0
    %3570 = vmatpush1.msra.mxu0 %v3200
    %3571 = vmatprep.subr.mxu0 0.0
    %3572 = vmatpush1.msra.mxu0 %v3199
    %3573 = vmatprep.subr.mxu0 0.0
    %3574 = vmatpush1.msra.mxu0 %v3198
    %3575 = vmatprep.subr.mxu0 0.0
    %3576 = vmatpush1.msra.mxu0 %v3197
    %3577 = vmatprep.subr.mxu0 0.0
    %3578 = vmatpush1.msra.mxu0 %v3196
    %3579 = vmatprep.subr.mxu0 0.0
    %3580 = vmatpush1.msra.mxu0 %v3195
    %3581 = vmatprep.subr.mxu0 0.0
    %3582 = vmatpush1.msra.mxu0 %v3194
    %3583 = vmatprep.subr.mxu0 0.0
    %3584 = vmatpush1.msra.mxu0 %v3193
    %3585 = vmatprep.subr.mxu0 0.0
    %3586 = vmatpush1.msra.mxu0 %v3192
    %3587 = vmatprep.subr.mxu0 0.0
    %3588 = vmatpush1.msra.mxu0 %v3191
    %3589 = vmatprep.subr.mxu0 0.0
    %3590 = vmatpush1.msra.mxu0 %v3190
    %3591 = vmatprep.subr.mxu0 0.0
    %3592 = vmatpush1.msra.mxu0 %v3189
    %3593 = vmatprep.subr.mxu0 0.0
    %3594 = vmatpush1.msra.mxu0 %v3188
    %3595 = vmatprep.subr.mxu0 0.0
    %3596 = vmatpush2.msra.mxu0 %v3219
    %3597 = vmatprep.subr.mxu0 0.0
    %3598 = vmatpush2.msra.mxu0 %v3218
    %3599 = vmatprep.subr.mxu0 0.0
    %3600 = vmatpush2.msra.mxu0 %v3217
    %3601 = vmatprep.subr.mxu0 0.0
    %3602 = vmatpush2.msra.mxu0 %v3216
    %3603 = vmatprep.subr.mxu0 0.0
    %3604 = vmatpush2.msra.mxu0 %v3215
    %3605 = vmatprep.subr.mxu0 0.0
    %3606 = vmatpush2.msra.mxu0 %v3214
    %3607 = vmatprep.subr.mxu0 0.0
    %3608 = vmatpush2.msra.mxu0 %v3213
    %3609 = vmatprep.subr.mxu0 0.0
    %3610 = vmatpush2.msra.mxu0 %v3212
    %3611 = vmatprep.subr.mxu0 0.0
    %3612 = vmatpush2.msra.mxu0 %v3211
    %3613 = vmatprep.subr.mxu0 0.0
    %3614 = vmatpush2.msra.mxu0 %v3210
    %3615 = vmatprep.subr.mxu0 0.0
    %3616 = vmatpush2.msra.mxu0 %v3209
    %3617 = vmatprep.subr.mxu0 0.0
    %3618 = vmatpush2.msra.mxu0 %v3208
    %3619 = vmatprep.subr.mxu0 0.0
    %3620 = vmatpush2.msra.mxu0 %v3207
    %3621 = vmatprep.subr.mxu0 0.0
    %3622 = vmatpush2.msra.mxu0 %v3206
    %3623 = vmatprep.subr.mxu0 0.0
    %3624 = vmatpush2.msra.mxu0 %v3205
    %3625 = vmatprep.subr.mxu0 0.0
    %3626 = vmatpush2.msra.mxu0 %v3204
    %3627 = vmatprep.mubr.f32.mxu0 %v3556
    %3628 = vmatmul.mubr.f32.gmra.mxu0 %v3555
    %v3629 = vpop.f32.mrf.mxu0
    %v3630 = vadd.f32 0.0, %v3629
    %v3631 = vpop.f32.mrf.mxu0
    %3632 = vmatprep.mubr.f32.mxu0 %v3558
    %3633 = vmatmul.mubr.f32.gmra.mxu0 %v3557
    %v3634 = vpop.f32.mrf.mxu0
    %v3635 = vadd.f32 0.0, %v3634
    %v3636 = vpop.f32.mrf.mxu0
    %3637 = vmatprep.mubr.f32.mxu0 %v3560
    %3638 = vmatmul.mubr.f32.gmra.mxu0 %v3559
    %v3639 = vpop.f32.mrf.mxu0
    %v3640 = vadd.f32 0.0, %v3639
    %v3641 = vpop.f32.mrf.mxu0
    %3642 = vmatprep.mubr.f32.mxu0 %v3562
    %3643 = vmatmul.mubr.f32.gmra.mxu0 %v3561
    %v3644 = vpop.f32.mrf.mxu0
    %v3645 = vadd.f32 0.0, %v3644
    %v3646 = vpop.f32.mrf.mxu0
    %3647 = vdwg.mxu0
    %v3648 = vld [vmem:[%s16] sm:$0x3]
    %v3650 = vsel %vm1031, %v3648, 0
    %3652 = vmatprep.subr.mxu0 0.0
    %3653 = vmatpush1.msra.mxu0 0.0
    %3654 = vmatprep.subr.mxu0 0.0
    %3655 = vmatpush1.msra.mxu0 0.0
    %3656 = vmatprep.subr.mxu0 0.0
    %3657 = vmatpush1.msra.mxu0 0.0
    %3658 = vmatprep.subr.mxu0 0.0
    %3659 = vmatpush1.msra.mxu0 0.0
    %3660 = vmatprep.subr.mxu0 0.0
    %3661 = vmatpush1.msra.mxu0 0.0
    %3662 = vmatprep.subr.mxu0 0.0
    %3663 = vmatpush1.msra.mxu0 0.0
    %3664 = vmatprep.subr.mxu0 0.0
    %3665 = vmatpush1.msra.mxu0 0.0
    %3666 = vmatprep.subr.mxu0 0.0
    %3667 = vmatpush1.msra.mxu0 0.0
    %3668 = vmatprep.subr.mxu0 0.0
    %3669 = vmatpush1.msra.mxu0 0.0
    %3670 = vmatprep.subr.mxu0 0.0
    %3671 = vmatpush1.msra.mxu0 0.0
    %3672 = vmatprep.subr.mxu0 0.0
    %3673 = vmatpush1.msra.mxu0 0.0
    %3674 = vmatprep.subr.mxu0 0.0
    %3675 = vmatpush1.msra.mxu0 0.0
    %3676 = vmatprep.subr.mxu0 0.0
    %3677 = vmatpush1.msra.mxu0 %v3645
    %3678 = vmatprep.subr.mxu0 0.0
    %3679 = vmatpush1.msra.mxu0 %v3640
    %3680 = vmatprep.subr.mxu0 0.0
    %3681 = vmatpush1.msra.mxu0 %v3635
    %3682 = vmatprep.subr.mxu0 0.0
    %3683 = vmatpush1.msra.mxu0 %v3630
    %3684 = vmatprep.subr.mxu0 0.0
    %3685 = vmatpush2.msra.mxu0 0.0
    %3686 = vmatprep.subr.mxu0 0.0
    %3687 = vmatpush2.msra.mxu0 0.0
    %3688 = vmatprep.subr.mxu0 0.0
    %3689 = vmatpush2.msra.mxu0 0.0
    %3690 = vmatprep.subr.mxu0 0.0
    %3691 = vmatpush2.msra.mxu0 0.0
    %3692 = vmatprep.subr.mxu0 0.0
    %3693 = vmatpush2.msra.mxu0 0.0
    %3694 = vmatprep.subr.mxu0 0.0
    %3695 = vmatpush2.msra.mxu0 0.0
    %3696 = vmatprep.subr.mxu0 0.0
    %3697 = vmatpush2.msra.mxu0 0.0
    %3698 = vmatprep.subr.mxu0 0.0
    %3699 = vmatpush2.msra.mxu0 0.0
    %3700 = vmatprep.subr.mxu0 0.0
    %3701 = vmatpush2.msra.mxu0 0.0
    %3702 = vmatprep.subr.mxu0 0.0
    %3703 = vmatpush2.msra.mxu0 0.0
    %3704 = vmatprep.subr.mxu0 0.0
    %3705 = vmatpush2.msra.mxu0 0.0
    %3706 = vmatprep.subr.mxu0 0.0
    %3707 = vmatpush2.msra.mxu0 0.0
    %3708 = vmatprep.subr.mxu0 0.0
    %3709 = vmatpush2.msra.mxu0 0.0
    %3710 = vmatprep.subr.mxu0 0.0
    %3711 = vmatpush2.msra.mxu0 0.0
    %3712 = vmatprep.subr.mxu0 0.0
    %3713 = vmatpush2.msra.mxu0 0.0
    %3714 = vmatprep.subr.mxu0 0.0
    %3715 = vmatpush2.msra.mxu0 0.0
    %3716 = vmatprep.mubr.f32.mxu0 0.0
    %3717 = vmatmul.mubr.f32.gmra.mxu0 %v3650
    %v3718 = vpop.f32.mrf.mxu0
    %v3719 = vadd.f32 0.0, %v3718
    %v3720 = vpop.f32.mrf.mxu0
    %3721 = vdwg.mxu0
    %v3722 = vld [vmem:[%s17] sm:$0xff]
    %v3723 = vld [vmem:[%s17 + $0x8] sm:$0xff]
    %v3724 = vld [vmem:[%s18] sm:$0x1]
    %v3726 = vlaneseq
    %v3727 = vshrl.u32 %v3726, 7
    %v3728 = vsub.s32 0, %v3727
    %v3729 = vrot.slane %v3724, %v3728
    %v3732 = vsel %vm1079, %v3719, 0
    %3734 = vmatprep.subr.mxu0 0.0
    %3735 = vmatpush1.msra.mxu0 0.0
    %3736 = vmatprep.subr.mxu0 0.0
    %3737 = vmatpush1.msra.mxu0 0.0
    %3738 = vmatprep.subr.mxu0 0.0
    %3739 = vmatpush1.msra.mxu0 0.0
    %3740 = vmatprep.subr.mxu0 0.0
    %3741 = vmatpush1.msra.mxu0 0.0
    %3742 = vmatprep.subr.mxu0 0.0
    %3743 = vmatpush1.msra.mxu0 0.0
    %3744 = vmatprep.subr.mxu0 0.0
    %3745 = vmatpush1.msra.mxu0 0.0
    %3746 = vmatprep.subr.mxu0 0.0
    %3747 = vmatpush1.msra.mxu0 0.0
    %3748 = vmatprep.subr.mxu0 0.0
    %3749 = vmatpush1.msra.mxu0 0.0
    %3750 = vmatprep.subr.mxu0 0.0
    %3751 = vmatpush1.msra.mxu0 0.0
    %3752 = vmatprep.subr.mxu0 0.0
    %3753 = vmatpush1.msra.mxu0 0.0
    %3754 = vmatprep.subr.mxu0 0.0
    %3755 = vmatpush1.msra.mxu0 0.0
    %3756 = vmatprep.subr.mxu0 0.0
    %3757 = vmatpush1.msra.mxu0 0.0
    %3758 = vmatprep.subr.mxu0 0.0
    %3759 = vmatpush1.msra.mxu0 0.0
    %3760 = vmatprep.subr.mxu0 0.0
    %3761 = vmatpush1.msra.mxu0 0.0
    %3762 = vmatprep.subr.mxu0 0.0
    %3763 = vmatpush1.msra.mxu0 %v3723
    %3764 = vmatprep.subr.mxu0 0.0
    %3765 = vmatpush1.msra.mxu0 %v3722
    %3766 = vmatprep.subr.mxu0 0.0
    %3767 = vmatpush2.msra.mxu0 0.0
    %3768 = vmatprep.subr.mxu0 0.0
    %3769 = vmatpush2.msra.mxu0 0.0
    %3770 = vmatprep.subr.mxu0 0.0
    %3771 = vmatpush2.msra.mxu0 0.0
    %3772 = vmatprep.subr.mxu0 0.0
    %3773 = vmatpush2.msra.mxu0 0.0
    %3774 = vmatprep.subr.mxu0 0.0
    %3775 = vmatpush2.msra.mxu0 0.0
    %3776 = vmatprep.subr.mxu0 0.0
    %3777 = vmatpush2.msra.mxu0 0.0
    %3778 = vmatprep.subr.mxu0 0.0
    %3779 = vmatpush2.msra.mxu0 0.0
    %3780 = vmatprep.subr.mxu0 0.0
    %3781 = vmatpush2.msra.mxu0 0.0
    %3782 = vmatprep.subr.mxu0 0.0
    %3783 = vmatpush2.msra.mxu0 0.0
    %3784 = vmatprep.subr.mxu0 0.0
    %3785 = vmatpush2.msra.mxu0 0.0
    %3786 = vmatprep.subr.mxu0 0.0
    %3787 = vmatpush2.msra.mxu0 0.0
    %3788 = vmatprep.subr.mxu0 0.0
    %3789 = vmatpush2.msra.mxu0 0.0
    %3790 = vmatprep.subr.mxu0 0.0
    %3791 = vmatpush2.msra.mxu0 0.0
    %3792 = vmatprep.subr.mxu0 0.0
    %3793 = vmatpush2.msra.mxu0 0.0
    %3794 = vmatprep.subr.mxu0 0.0
    %3795 = vmatpush2.msra.mxu0 0.0
    %3796 = vmatprep.subr.mxu0 0.0
    %3797 = vmatpush2.msra.mxu0 0.0
    %3798 = vmatprep.mubr.f32.mxu0 0.0
    %3799 = vmatmul.mubr.f32.gmra.mxu0 %v3732
    %v3800 = vpop.f32.mrf.mxu0
    %v3801 = vadd.f32 %v3729, %v3800
    %v3802 = vpop.f32.mrf.mxu0
    %3803 = vdwg.mxu0
    %vm3804 = vcmask 74752
    %3805 = vst.msk [vmem:[#allocation5] sm:$0x3] %vm3804, %v3801
    // Predicated region
    $region78: #{child_network_forward.1} parent=1 // pred_check
      _
    $region79: #{child_network_forward.1} parent=1 // pred_check_branch
      %3807 = sbr.rel (0) target = $region81
    $region80: #{child_network_forward.1} parent=1 // pred_region
      %s3809 = ssub.s32 32, 32
      %3810 = vsyncadd [#allocation6], %s3809
      %s3812 = sshll.u32 [#allocation5], 4
      %s3813 = int_to_ptr.vmem [resolvable:$true] %s3812
      %3815 = dma.vmem_to_hbm [thread:$0]  %s3813, 32, %s19, [#allocation6]
    $region81: #{child_network_forward.1} parent=1 // pred_fallthru
      _
    // Predicated region
    $region82: #{child_network_forward.1} parent=1 // pred_check
      _
    $region83: #{child_network_forward.1} parent=1 // pred_check_branch
      %3817 = sbr.rel (0) target = $region85
    $region84: #{child_network_forward.1} parent=1 // pred_region
      %3818 = dma.done [#allocation6], 32
    $region85: #{child_network_forward.1} parent=1 // pred_fallthru
      _
    %3819 = vsyncpa [#allocation6], 1

</llo_original>
